<compile_context>
chip_gen: v7x
topology: tpu7x:2x2x1
jax: 0.10.0
libtpu: 0.0.40
codegen_flags: <defaults>
</compile_context>

<pallas_src>
import functools
import math

import jax
import jax.numpy as jnp
from jax import lax
from jax.experimental import pallas as pl
from jax.experimental.pallas import tpu as pltpu


def _ru(x, m):
    return ((x + m - 1) // m) * m


_VMEM_LIMIT = 32 * 1024 * 1024


# ----------------------------------------------------------------------------
# Pallas kernels
# ----------------------------------------------------------------------------
def _linear_kernel(a_ref, w_ref, b_ref, o_ref, *, activation=None):
    y = jnp.dot(a_ref[...], w_ref[...],
                preferred_element_type=jnp.float32) + b_ref[...]
    if activation == "tanh":
        y = jnp.tanh(y)
    o_ref[...] = y


def pallas_linear(a, w, b, activation=None):
    """a:(M,K) @ w:(K,N) + b:(1,N)  (all pre-padded / tile-aligned)."""
    M, K = a.shape
    K2, N = w.shape
    assert K == K2 and b.shape == (1, N)
    return pl.pallas_call(
        functools.partial(_linear_kernel, activation=activation),
        out_shape=jax.ShapeDtypeStruct((M, N), jnp.float32),
    )(a, w, b)


def _enc_dir_kernel(gx_ref, m_ref, whh_ref, bhh_ref, out_ref, h_scr, *, Hp):
    """One timestep of a (masked / packed) GRU direction; h carried in VMEM."""
    @pl.when(pl.program_id(0) == 0)
    def _():
        h_scr[...] = jnp.zeros_like(h_scr)

    h = h_scr[...]                                              # (Bp, Hp)
    gx = gx_ref[0]                                              # (Bp, 3Hp)
    gh = jnp.dot(h, whh_ref[...],
                 preferred_element_type=jnp.float32) + bhh_ref[...]
    r = jax.nn.sigmoid(gx[:, :Hp] + gh[:, :Hp])
    z = jax.nn.sigmoid(gx[:, Hp:2 * Hp] + gh[:, Hp:2 * Hp])
    n = jnp.tanh(gx[:, 2 * Hp:] + r * gh[:, 2 * Hp:])
    h_new = (1.0 - z) * n + z * h
    m = m_ref[0]                                                # (Bp, 1)
    out_ref[0] = m * h_new                                      # packed output
    h_scr[...] = m * h_new + (1.0 - m) * h                      # freeze past end


def run_enc_direction(gx, mask_p, whh_t, bhh, *, reverse):
    S, Bp, threeHp = gx.shape
    Hp = threeHp // 3
    if reverse:
        tmap = lambda t: (S - 1 - t, 0, 0)
    else:
        tmap = lambda t: (t, 0, 0)
    return pl.pallas_call(
        functools.partial(_enc_dir_kernel, Hp=Hp),
        out_shape=jax.ShapeDtypeStruct((S, Bp, Hp), jnp.float32),
        grid_spec=pltpu.PrefetchScalarGridSpec(
            num_scalar_prefetch=0,
            grid=(S,),
            in_specs=[
                pl.BlockSpec((1, Bp, threeHp), tmap),
                pl.BlockSpec((1, Bp, 1), tmap),
                pl.BlockSpec((Hp, threeHp), lambda t: (0, 0)),   # resident
                pl.BlockSpec((1, threeHp), lambda t: (0, 0)),    # resident
            ],
            out_specs=pl.BlockSpec((1, Bp, Hp), tmap),
            scratch_shapes=[pltpu.VMEM((Bp, Hp), jnp.float32)],
        ),
        compiler_params=pltpu.CompilerParams(
            dimension_semantics=("arbitrary",),
            vmem_limit_bytes=_VMEM_LIMIT),
    )(gx, mask_p, whh_t, bhh)


def _decoder_kernel(gx0_ref, tgt_ref, h0_ref, ctxs_ref, ctxp_ref, cmask_ref,
                    w0hh_ref, b0hh_ref, whid2ctx_ref, mlp_ref,
                    w1ih_ref, b1ih_ref, w1hh_ref, b1hh_ref,
                    whid2out_ref, bhid2out_ref, wout_ref, bout_ref,
                    loss_ref, h_scr, *, S, Dp):
    t = pl.program_id(0)

    @pl.when(t == 0)
    def _():
        h_scr[...] = h0_ref[...]
        loss_ref[...] = jnp.zeros_like(loss_ref)

    h = h_scr[...]                                              # (Bp, Dp)

    # ---- dec0 GRU (input projection precomputed, batched over time) ----
    gx = gx0_ref[0]                                             # (Bp, 3Dp)
    gh = jnp.dot(h, w0hh_ref[...],
                 preferred_element_type=jnp.float32) + b0hh_ref[...]
    r = jax.nn.sigmoid(gx[:, :Dp] + gh[:, :Dp])
    z = jax.nn.sigmoid(gx[:, Dp:2 * Dp] + gh[:, Dp:2 * Dp])
    n = jnp.tanh(gx[:, 2 * Dp:] + r * gh[:, 2 * Dp:])
    h1 = (1.0 - z) * n + z * h

    # ---- MLP attention over source contexts (VPU reduction, unrolled S) ----
    hid_p = jnp.dot(h1, whid2ctx_ref[...],
                    preferred_element_type=jnp.float32)         # (Bp, MidP)
    mlp = mlp_ref[...]                                          # (1, MidP)
    scores = []
    for s in range(S):
        inner = jnp.tanh(ctxp_ref[s] + hid_p)                   # (Bp, MidP)
        sc = jnp.sum(inner * mlp, axis=-1, keepdims=True)       # (Bp, 1)
        sc = jnp.where(cmask_ref[s] > 0.0, sc, -1e8)
        scores.append(sc)
    m_s = scores[0]
    for s in range(1, S):
        m_s = jnp.maximum(m_s, scores[s])
    exps = [jnp.exp(sc - m_s) for sc in scores]
    denom = exps[0]
    for s in range(1, S):
        denom = denom + exps[s]
    inv = 1.0 / denom
    z_att = (exps[0] * inv) * ctxs_ref[0]                       # (Bp, Cp)
    for s in range(1, S):
        z_att = z_att + (exps[s] * inv) * ctxs_ref[s]

    # ---- dec1 (conditional) GRU on attended context ----
    gx1 = jnp.dot(z_att, w1ih_ref[...],
                  preferred_element_type=jnp.float32) + b1ih_ref[...]
    gh1 = jnp.dot(h1, w1hh_ref[...],
                  preferred_element_type=jnp.float32) + b1hh_ref[...]
    r1 = jax.nn.sigmoid(gx1[:, :Dp] + gh1[:, :Dp])
    z1 = jax.nn.sigmoid(gx1[:, Dp:2 * Dp] + gh1[:, Dp:2 * Dp])
    n1 = jnp.tanh(gx1[:, 2 * Dp:] + r1 * gh1[:, 2 * Dp:])
    h2 = (1.0 - z1) * n1 + z1 * h1

    # ---- tanh bottleneck + vocab projection + log_softmax NLL (ignore 0) ----
    logit = jnp.tanh(jnp.dot(h2, whid2out_ref[...],
                             preferred_element_type=jnp.float32)
                     + bhid2out_ref[...])                       # (Bp, Ep)
    logits = jnp.dot(logit, wout_ref[...],
                     preferred_element_type=jnp.float32) + bout_ref[...]
    # (padded vocab columns carry a -1e30 bias -> excluded from the lse)
    mx = jnp.max(logits, axis=-1, keepdims=True)
    lse = jnp.log(jnp.sum(jnp.exp(logits - mx), axis=-1, keepdims=True)) + mx
    tgt = tgt_ref[0]                                            # (Bp, 1) int32
    col = lax.broadcasted_iota(jnp.int32, logits.shape, 1)
    picked = jnp.sum(jnp.where(col == tgt, logits, 0.0),
                     axis=-1, keepdims=True)
    row_mask = (tgt > 0).astype(jnp.float32)
    loss_ref[...] = loss_ref[...] + jnp.sum(row_mask * (lse - picked),
                                            keepdims=True)
    h_scr[...] = h2


def run_decoder(gx0, tgt, h0, ctxs, ctx_p, cmask, pp):
    Tm1, Bp, threeDp = gx0.shape
    Dp = threeDp // 3
    S, _, Cp = ctxs.shape
    MidP = ctx_p.shape[2]
    Ep = pp['hid2out_T'].shape[1]
    Vp = pp['out2prob_T'].shape[1]

    step = lambda t: (t, 0, 0)
    res2 = lambda t: (0, 0)
    res3 = lambda t: (0, 0, 0)

    loss = pl.pallas_call(
        functools.partial(_decoder_kernel, S=S, Dp=Dp),
        out_shape=jax.ShapeDtypeStruct((1, 1), jnp.float32),
        grid_spec=pltpu.PrefetchScalarGridSpec(
            num_scalar_prefetch=0,
            grid=(Tm1,),
            in_specs=[
                pl.BlockSpec((1, Bp, threeDp), step),      # gx0 (per step)
                pl.BlockSpec((1, Bp, 1), step),            # tgt (per step)
                pl.BlockSpec((Bp, Dp), res2),              # h0
                pl.BlockSpec((S, Bp, Cp), res3),           # ctxs (resident)
                pl.BlockSpec((S, Bp, MidP), res3),         # ctx_p (resident)
                pl.BlockSpec((S, Bp, 1), res3),            # ctx mask (resident)
                pl.BlockSpec((Dp, threeDp), res2),         # dec0 W_hh.T
                pl.BlockSpec((1, threeDp), res2),          # dec0 b_hh
                pl.BlockSpec((Dp, MidP), res2),            # att hid2ctx.T
                pl.BlockSpec((1, MidP), res2),             # att mlp
                pl.BlockSpec((Cp, threeDp), res2),         # dec1 W_ih.T
                pl.BlockSpec((1, threeDp), res2),          # dec1 b_ih
                pl.BlockSpec((Dp, threeDp), res2),         # dec1 W_hh.T
                pl.BlockSpec((1, threeDp), res2),          # dec1 b_hh
                pl.BlockSpec((Dp, Ep), res2),              # hid2out.T
                pl.BlockSpec((1, Ep), res2),               # hid2out b
                pl.BlockSpec((Ep, Vp), res2),              # out2prob.T
                pl.BlockSpec((1, Vp), res2),               # out2prob b
            ],
            out_specs=pl.BlockSpec((1, 1), lambda t: (0, 0)),
            scratch_shapes=[pltpu.VMEM((Bp, Dp), jnp.float32)],
        ),
        compiler_params=pltpu.CompilerParams(
            dimension_semantics=("arbitrary",),
            vmem_limit_bytes=_VMEM_LIMIT),
    )(gx0, tgt, h0, ctxs, ctx_p, cmask,
      pp['dec0_Whh_T'], pp['dec0_bhh'], pp['att_hid2ctx_T'], pp['att_mlp_p'],
      pp['dec1_Wih_T'], pp['dec1_bih'], pp['dec1_Whh_T'], pp['dec1_bhh'],
      pp['hid2out_T'], pp['hid2out_b_p'], pp['out2prob_T'], pp['out2prob_b_p'])
    return loss[0, 0]


# ----------------------------------------------------------------------------
# Forward pass (glue in plain JAX; all heavy math inside the kernels above)
# ----------------------------------------------------------------------------
def _nmt_forward(pp, src, trg):
    S, B = src.shape
    T = trg.shape[0]
    Bp = _ru(B, 8)

    Ep = pp['emb_src_p'].shape[1]
    Hp3 = pp['enc_Wih_f_T'].shape[1]
    Dp3 = pp['dec0_Wih_T'].shape[1]
    Cp = pp['att_ctx2ctx_T'].shape[0]
    MidP = pp['att_ctx2ctx_T'].shape[1]

    # ---------------- encoder ----------------
    mask = (src != 0).astype(jnp.float32)                              # (S, B)
    mask_p = jnp.zeros((S, Bp, 1), jnp.float32).at[:, :B, 0].set(mask)

    emb = pp['emb_src_p'][src]                                         # (S,B,Ep)
    emb_p = jnp.zeros((S, Bp, Ep), jnp.float32).at[:, :B, :].set(emb)
    emb_flat = emb_p.reshape(S * Bp, Ep)

    # time-invariant input-gate projections, batched over all timesteps
    gx_f = pallas_linear(emb_flat, pp['enc_Wih_f_T'],
                         pp['enc_bih_f']).reshape(S, Bp, Hp3)
    gx_b = pallas_linear(emb_flat, pp['enc_Wih_b_T'],
                         pp['enc_bih_b']).reshape(S, Bp, Hp3)

    out_f = run_enc_direction(gx_f, mask_p, pp['enc_Whh_f_T'],
                              pp['enc_bhh_f'], reverse=False)
    out_b = run_enc_direction(gx_b, mask_p, pp['enc_Whh_b_T'],
                              pp['enc_bhh_b'], reverse=True)
    ctxs = jnp.concatenate([out_f, out_b], axis=-1)                    # (S,Bp,Cp)

    # ---------------- decoder precompute ----------------
    denom = jnp.maximum(jnp.sum(mask_p, axis=0), 1.0)                  # (Bp,1)
    mean_ctx = jnp.sum(ctxs, axis=0) / denom                           # (Bp,Cp)
    h0 = pallas_linear(mean_ctx, pp['ff_init_T'], pp['ff_init_b_p'],
                       activation="tanh")                              # (Bp,Dp)

    ctx_p = pallas_linear(ctxs.reshape(S * Bp, Cp), pp['att_ctx2ctx_T'],
                          pp['att_ctx2ctx_zb']).reshape(S, Bp, MidP)

    y_emb = pp['emb_trg_p'][trg[:T - 1]]                               # (T-1,B,Ep)
    y_emb_p = jnp.zeros((T - 1, Bp, Ep), jnp.float32).at[:, :B, :].set(y_emb)
    gx0 = pallas_linear(y_emb_p.reshape((T - 1) * Bp, Ep),
                        pp['dec0_Wih_T'], pp['dec0_bih']).reshape(T - 1, Bp, Dp3)

    tgt = jnp.zeros((T - 1, Bp, 1), jnp.int32).at[:, :B, 0].set(trg[1:])

    total = run_decoder(gx0, tgt, h0, ctxs, ctx_p, mask_p, pp)
    n_tokens = (T - 1) * B                                             # trg[1:].numel()
    return total / n_tokens


nmt_forward = jax.jit(_nmt_forward)


# ----------------------------------------------------------------------------
# Parameter init (shapes follow NMT.setup defaults, scaled down) + one-time
# padding/transposition into tile-aligned, gate-blocked layouts.
# ----------------------------------------------------------------------------
def init_params(key, n_src_vocab, n_trg_vocab, emb, enc, dec):
    ctx = 2 * enc
    mid = ctx  # att_bottleneck == 'ctx'
    keys = iter(jax.random.split(key, 64))

    def nrm(shape, fan_in):
        return jax.random.normal(next(keys), shape, jnp.float32) / math.sqrt(fan_in)

    p = {}
    p['emb_src'] = nrm((n_src_vocab, emb), emb).at[0].set(0.0)
    p['emb_trg'] = nrm((n_trg_vocab, emb), emb).at[0].set(0.0)
    for d in ('f', 'b'):
        p[f'enc_W_ih_{d}'] = nrm((3 * enc, emb), emb)
        p[f'enc_W_hh_{d}'] = nrm((3 * enc, enc), enc)
        p[f'enc_b_ih_{d}'] = jnp.zeros((3 * enc,), jnp.float32)
        p[f'enc_b_hh_{d}'] = jnp.zeros((3 * enc,), jnp.float32)
    p['ff_init_W'] = nrm((dec, ctx), ctx)
    p['ff_init_b'] = jnp.zeros((dec,), jnp.float32)
    p['att_ctx2ctx'] = nrm((mid, ctx), ctx)
    p['att_hid2ctx'] = nrm((mid, dec), dec)
    p['att_mlp'] = nrm((1, mid), mid)
    p['dec0_W_ih'] = nrm((3 * dec, emb), emb)
    p['dec0_W_hh'] = nrm((3 * dec, dec), dec)
    p['dec0_b_ih'] = jnp.zeros((3 * dec,), jnp.float32)
    p['dec0_b_hh'] = jnp.zeros((3 * dec,), jnp.float32)
    p['dec1_W_ih'] = nrm((3 * dec, ctx), ctx)
    p['dec1_W_hh'] = nrm((3 * dec, dec), dec)
    p['dec1_b_ih'] = jnp.zeros((3 * dec,), jnp.float32)
    p['dec1_b_hh'] = jnp.zeros((3 * dec,), jnp.float32)
    p['hid2out_W'] = nrm((emb, dec), dec)
    p['hid2out_b'] = jnp.zeros((emb,), jnp.float32)      # bias_zero=True
    p['out2prob_W'] = nrm((n_trg_vocab, emb), emb)
    p['out2prob_b'] = jnp.zeros((n_trg_vocab,), jnp.float32)
    return p


def _pad_wT(W, in_splits, out_splits):
    """W:(out,in) -> padded W.T with block-padded K (rows) and N (cols)."""
    Wt = jnp.asarray(W, jnp.float32).T
    Kp = sum(pq for _, pq in in_splits)
    Np = sum(pq for _, pq in out_splits)
    out = jnp.zeros((Kp, Np), jnp.float32)
    r0 = rp = 0
    for (ri, pi) in in_splits:
        c0 = cp = 0
        for (cj, pj) in out_splits:
            out = out.at[rp:rp + ri, cp:cp + cj].set(Wt[r0:r0 + ri, c0:c0 + cj])
            c0 += cj
            cp += pj
        r0 += ri
        rp += pi
    return out


def _pad_b(b, out_splits):
    b = jnp.asarray(b, jnp.float32).reshape(-1)
    Np = sum(pq for _, pq in out_splits)
    out = jnp.zeros((1, Np), jnp.float32)
    c0 = cp = 0
    for (cj, pj) in out_splits:
        out = out.at[0, cp:cp + cj].set(b[c0:c0 + cj])
        c0 += cj
        cp += pj
    return out


def prepare_params(p):
    E = p['emb_src'].shape[1]
    H = p['enc_W_hh_f'].shape[1]
    D = p['dec0_W_hh'].shape[1]
    mid = p['att_ctx2ctx'].shape[0]
    V = p['out2prob_W'].shape[0]
    Ep, Hp, Dp, MidP, Vp = (_ru(E, 128), _ru(H, 128), _ru(D, 128),
                            _ru(mid, 128), _ru(V, 128))
    gH = [(H, Hp)] * 3
    gD = [(D, Dp)] * 3
    ctxK = [(H, Hp), (H, Hp)]        # ctx layout = [fwd Hp | bwd Hp]

    pp = {}
    pp['emb_src_p'] = jnp.zeros((p['emb_src'].shape[0], Ep),
                                jnp.float32).at[:, :E].set(p['emb_src'])
    pp['emb_trg_p'] = jnp.zeros((p['emb_trg'].shape[0], Ep),
                                jnp.float32).at[:, :E].set(p['emb_trg'])
    for d in ('f', 'b'):
        pp[f'enc_Wih_{d}_T'] = _pad_wT(p[f'enc_W_ih_{d}'], [(E, Ep)], gH)
        pp[f'enc_Whh_{d}_T'] = _pad_wT(p[f'enc_W_hh_{d}'], [(H, Hp)], gH)
        pp[f'enc_bih_{d}'] = _pad_b(p[f'enc_b_ih_{d}'], gH)
        pp[f'enc_bhh_{d}'] = _pad_b(p[f'enc_b_hh_{d}'], gH)
    pp['ff_init_T'] = _pad_wT(p['ff_init_W'], ctxK, [(D, Dp)])
    pp['ff_init_b_p'] = _pad_b(p['ff_init_b'], [(D, Dp)])
    pp['att_ctx2ctx_T'] = _pad_wT(p['att_ctx2ctx'], ctxK, [(mid, MidP)])
    pp['att_ctx2ctx_zb'] = jnp.zeros((1, MidP), jnp.float32)
    pp['att_hid2ctx_T'] = _pad_wT(p['att_hid2ctx'], [(D, Dp)], [(mid, MidP)])
    pp['att_mlp_p'] = _pad_b(p['att_mlp'], [(mid, MidP)])
    pp['dec0_Wih_T'] = _pad_wT(p['dec0_W_ih'], [(E, Ep)], gD)
    pp['dec0_Whh_T'] = _pad_wT(p['dec0_W_hh'], [(D, Dp)], gD)
    pp['dec0_bih'] = _pad_b(p['dec0_b_ih'], gD)
    pp['dec0_bhh'] = _pad_b(p['dec0_b_hh'], gD)
    pp['dec1_Wih_T'] = _pad_wT(p['dec1_W_ih'], ctxK, gD)
    pp['dec1_Whh_T'] = _pad_wT(p['dec1_W_hh'], [(D, Dp)], gD)
    pp['dec1_bih'] = _pad_b(p['dec1_b_ih'], gD)
    pp['dec1_bhh'] = _pad_b(p['dec1_b_hh'], gD)
    pp['hid2out_T'] = _pad_wT(p['hid2out_W'], [(D, Dp)], [(E, Ep)])
    pp['hid2out_b_p'] = _pad_b(p['hid2out_b'], [(E, Ep)])
    pp['out2prob_T'] = _pad_wT(p['out2prob_W'], [(E, Ep)], [(V, Vp)])
    # padded vocab columns get a -1e30 bias so they never affect the lse
    pp['out2prob_b_p'] = jnp.full((1, Vp), -1e30,
                                  jnp.float32).at[0, :V].set(p['out2prob_b'])
    return pp


# ----------------------------------------------------------------------------
if __name__ == "__main__":
    B = 2          # batch
    S_SRC = 8      # source length
    T_TRG = 8      # target length
    EMB, ENC, DEC = 32, 32, 32
    N_SRC_VOCAB, N_TRG_VOCAB = 50, 60

    key = jax.random.PRNGKey(0)
    k_src, k_trg, k_par = jax.random.split(key, 3)

    src_seqs = jax.random.randint(k_src, (S_SRC, B), 1, N_SRC_VOCAB, dtype=jnp.int32)
    trg_seqs = jax.random.randint(k_trg, (T_TRG, B), 1, N_TRG_VOCAB, dtype=jnp.int32)
    # introduce padding (idx 0) so masks / packed-sequence / ignore_index paths run
    src_seqs = src_seqs.at[5:, 1].set(0)
    trg_seqs = trg_seqs.at[6:, 1].set(0)

    params = init_params(k_par, N_SRC_VOCAB, N_TRG_VOCAB, EMB, ENC, DEC)
    prepped = prepare_params(params)

    loss = nmt_forward(prepped, src_seqs, trg_seqs)
    loss = jax.block_until_ready(loss)
    assert jnp.isfinite(loss), f"non-finite loss: {loss}"
    print("KERNEL_OK")
</pallas_src>

<mosaic_0001>
module attributes {stable_mosaic.version = 11 : i64} {
  func.func @_enc_dir_kernel(%arg0: i32, %arg1: memref<1x8x384xf32, #tpu.memory_space<vmem>>, %arg2: memref<1x8x1xf32, #tpu.memory_space<vmem>>, %arg3: memref<128x384xf32, #tpu.memory_space<vmem>>, %arg4: memref<1x384xf32, #tpu.memory_space<vmem>>, %arg5: memref<1x8x128xf32, #tpu.memory_space<vmem>>, %arg6: memref<8x128xf32, #tpu.memory_space<vmem>>) attributes {dimension_semantics = [#tpu.dimension_semantics<arbitrary>], iteration_bounds = array<i64: 8>, scalar_prefetch = 0 : i64, scratch_operands = 1 : i64, tpu.core_type = #tpu.core_type<tc>, window_params = [{transform_indices = @transform_0, window_bounds = array<i64: 1, 8, 384>}, {transform_indices = @transform_1, window_bounds = array<i64: 1, 8, 1>}, {pipeline_mode = #tpu.pipeline_mode<synchronous>, transform_indices = @transform_2, window_bounds = array<i64: 128, 384>}, {pipeline_mode = #tpu.pipeline_mode<synchronous>, transform_indices = @transform_3, window_bounds = array<i64: 1, 384>}, {transform_indices = @transform_4, window_bounds = array<i64: 1, 8, 128>}]} {
    %c0_i32 = arith.constant 0 : i32
    %0 = arith.cmpi eq, %arg0, %c0_i32 : i32
    %1 = arith.extui %0 : i1 to i32
    %c0_i32_0 = arith.constant 0 : i32
    %2 = arith.cmpi ne, %1, %c0_i32_0 : i32
    scf.if %2 {
      %cst_21 = arith.constant 0.000000e+00 : f32
      %52 = vector.broadcast %cst_21 : f32 to vector<8x128xf32>
      %c0_22 = arith.constant 0 : index
      %c0_23 = arith.constant 0 : index
      %53 = vector.load %arg6[%c0_22, %c0_23] : memref<8x128xf32, #tpu.memory_space<vmem>>, vector<8x128xf32>
      tpu.vector_store %arg6[%c0_22, %c0_23], %52 {strides = array<i32>} : memref<8x128xf32, #tpu.memory_space<vmem>>, vector<8x128xf32>,
    } else {
    }
    %c0 = arith.constant 0 : index
    %c0_1 = arith.constant 0 : index
    %3 = vector.load %arg6[%c0, %c0_1] : memref<8x128xf32, #tpu.memory_space<vmem>>, vector<8x128xf32>
    %c0_2 = arith.constant 0 : index
    %c0_3 = arith.constant 0 : index
    %c0_4 = arith.constant 0 : index
    %4 = vector.load %arg1[%c0_2, %c0_3, %c0_4] : memref<1x8x384xf32, #tpu.memory_space<vmem>>, vector<1x8x384xf32>
    %5 = vector.shape_cast %4 : vector<1x8x384xf32> to vector<8x384xf32>
    %c0_5 = arith.constant 0 : index
    %c0_6 = arith.constant 0 : index
    %6 = vector.load %arg3[%c0_5, %c0_6] : memref<128x384xf32, #tpu.memory_space<vmem>>, vector<128x384xf32>
    %cst = arith.constant dense<0.000000e+00> : vector<8x384xf32>
    %7 = tpu.matmul %3, %6, %cst {dimension_numbers = #tpu.dot_dimension_numbers<[1], [0], [0], [1], [0, 0, 1, 1], [], []>} : vector<8x128xf32>, vector<128x384xf32>, vector<8x384xf32> -> vector<8x384xf32>
    %c0_7 = arith.constant 0 : index
    %c0_8 = arith.constant 0 : index
    %8 = vector.load %arg4[%c0_7, %c0_8] : memref<1x384xf32, #tpu.memory_space<vmem>>, vector<1x384xf32>
    %9 = vector.broadcast %8 : vector<1x384xf32> to vector<8x384xf32>
    %10 = arith.addf %7, %9 : vector<8x384xf32>
    %11 = vector.extract_strided_slice %5 {offsets = [0, 0], sizes = [8, 128], strides = [1, 1]} : vector<8x384xf32> to vector<8x128xf32>
    %12 = vector.extract_strided_slice %10 {offsets = [0, 0], sizes = [8, 128], strides = [1, 1]} : vector<8x384xf32> to vector<8x128xf32>
    %13 = arith.addf %11, %12 : vector<8x128xf32>
    %14 = arith.negf %13 : vector<8x128xf32>
    %15 = math.exp %14 : vector<8x128xf32>
    %cst_9 = arith.constant 1.000000e+00 : f32
    %16 = vector.broadcast %cst_9 : f32 to vector<8x128xf32>
    %17 = arith.addf %16, %15 : vector<8x128xf32>
    %18 = arith.divf %16, %17 : vector<8x128xf32>
    %19 = vector.extract_strided_slice %5 {offsets = [0, 128], sizes = [8, 128], strides = [1, 1]} : vector<8x384xf32> to vector<8x128xf32>
    %20 = vector.extract_strided_slice %10 {offsets = [0, 128], sizes = [8, 128], strides = [1, 1]} : vector<8x384xf32> to vector<8x128xf32>
    %21 = arith.addf %19, %20 : vector<8x128xf32>
    %22 = arith.negf %21 : vector<8x128xf32>
    %23 = math.exp %22 : vector<8x128xf32>
    %cst_10 = arith.constant 1.000000e+00 : f32
    %24 = vector.broadcast %cst_10 : f32 to vector<8x128xf32>
    %25 = arith.addf %24, %23 : vector<8x128xf32>
    %26 = arith.divf %24, %25 : vector<8x128xf32>
    %27 = vector.extract_strided_slice %5 {offsets = [0, 256], sizes = [8, 128], strides = [1, 1]} : vector<8x384xf32> to vector<8x128xf32>
    %28 = vector.extract_strided_slice %10 {offsets = [0, 256], sizes = [8, 128], strides = [1, 1]} : vector<8x384xf32> to vector<8x128xf32>
    %29 = arith.mulf %18, %28 : vector<8x128xf32>
    %30 = arith.addf %27, %29 : vector<8x128xf32>
    %31 = math.tanh %30 : vector<8x128xf32>
    %cst_11 = arith.constant 1.000000e+00 : f32
    %32 = vector.broadcast %cst_11 : f32 to vector<8x128xf32>
    %33 = arith.subf %32, %26 : vector<8x128xf32>
    %34 = arith.mulf %33, %31 : vector<8x128xf32>
    %35 = arith.mulf %26, %3 : vector<8x128xf32>
    %36 = arith.addf %34, %35 : vector<8x128xf32>
    %c0_12 = arith.constant 0 : index
    %c0_13 = arith.constant 0 : index
    %c0_14 = arith.constant 0 : index
    %37 = vector.load %arg2[%c0_12, %c0_13, %c0_14] : memref<1x8x1xf32, #tpu.memory_space<vmem>>, vector<1x8x1xf32>
    %38 = vector.shape_cast %37 : vector<1x8x1xf32> to vector<8x1xf32>
    %39 = vector.broadcast %38 : vector<8x1xf32> to vector<8x128xf32>
    %40 = arith.mulf %39, %36 : vector<8x128xf32>
    %c0_15 = arith.constant 0 : index
    %c0_16 = arith.constant 0 : index
    %c0_17 = arith.constant 0 : index
    %41 = vector.load %arg5[%c0_15, %c0_16, %c0_17] : memref<1x8x128xf32, #tpu.memory_space<vmem>>, vector<1x8x128xf32>
    %42 = vector.shape_cast %41 : vector<1x8x128xf32> to vector<8x128xf32>
    %43 = vector.shape_cast %40 : vector<8x128xf32> to vector<1x8x128xf32>
    tpu.vector_store %arg5[%c0_15, %c0_16, %c0_17], %43 {strides = array<i32>} : memref<1x8x128xf32, #tpu.memory_space<vmem>>, vector<1x8x128xf32>,
    %44 = vector.broadcast %38 : vector<8x1xf32> to vector<8x128xf32>
    %45 = arith.mulf %44, %36 : vector<8x128xf32>
    %cst_18 = arith.constant 1.000000e+00 : f32
    %46 = vector.broadcast %cst_18 : f32 to vector<8x1xf32>
    %47 = arith.subf %46, %38 : vector<8x1xf32>
    %48 = vector.broadcast %47 : vector<8x1xf32> to vector<8x128xf32>
    %49 = arith.mulf %48, %3 : vector<8x128xf32>
    %50 = arith.addf %45, %49 : vector<8x128xf32>
    %c0_19 = arith.constant 0 : index
    %c0_20 = arith.constant 0 : index
    %51 = vector.load %arg6[%c0_19, %c0_20] : memref<8x128xf32, #tpu.memory_space<vmem>>, vector<8x128xf32>
    tpu.vector_store %arg6[%c0_19, %c0_20], %50 {strides = array<i32>} : memref<8x128xf32, #tpu.memory_space<vmem>>, vector<8x128xf32>,
    return
  }
  func.func @transform_0(%arg0: i32) -> (i32, i32, i32) {
    %c7_i32 = arith.constant 7 : i32
    %0 = arith.subi %c7_i32, %arg0 : i32
    %c0_i32 = arith.constant 0 : i32
    %c0_i32_0 = arith.constant 0 : i32
    %c0_i32_1 = arith.constant 0 : i32
    return %0, %c0_i32, %c0_i32_0 : i32, i32, i32
  }
  func.func @transform_1(%arg0: i32) -> (i32, i32, i32) {
    %c7_i32 = arith.constant 7 : i32
    %0 = arith.subi %c7_i32, %arg0 : i32
    %c0_i32 = arith.constant 0 : i32
    %c0_i32_0 = arith.constant 0 : i32
    %c0_i32_1 = arith.constant 0 : i32
    return %0, %c0_i32, %c0_i32_0 : i32, i32, i32
  }
  func.func @transform_2(%arg0: i32) -> (i32, i32) {
    %c0_i32 = arith.constant 0 : i32
    %c0_i32_0 = arith.constant 0 : i32
    %c0_i32_1 = arith.constant 0 : i32
    return %c0_i32, %c0_i32_0 : i32, i32
  }
  func.func @transform_3(%arg0: i32) -> (i32, i32) {
    %c0_i32 = arith.constant 0 : i32
    %c0_i32_0 = arith.constant 0 : i32
    %c0_i32_1 = arith.constant 0 : i32
    return %c0_i32, %c0_i32_0 : i32, i32
  }
  func.func @transform_4(%arg0: i32) -> (i32, i32, i32) {
    %c7_i32 = arith.constant 7 : i32
    %0 = arith.subi %c7_i32, %arg0 : i32
    %c0_i32 = arith.constant 0 : i32
    %c0_i32_0 = arith.constant 0 : i32
    %c0_i32_1 = arith.constant 0 : i32
    return %0, %c0_i32, %c0_i32_0 : i32, i32, i32
  }
}

module attributes {stable_mosaic.version = 11 : i64} {
  func.func @_enc_dir_kernel(%arg0: i32, %arg1: memref<1x8x384xf32, #tpu.memory_space<vmem>>, %arg2: memref<1x8x1xf32, #tpu.memory_space<vmem>>, %arg3: memref<128x384xf32, #tpu.memory_space<vmem>>, %arg4: memref<1x384xf32, #tpu.memory_space<vmem>>, %arg5: memref<1x8x128xf32, #tpu.memory_space<vmem>>, %arg6: memref<8x128xf32, #tpu.memory_space<vmem>>) attributes {dimension_semantics = [#tpu.dimension_semantics<arbitrary>], iteration_bounds = array<i64: 8>, scalar_prefetch = 0 : i64, scratch_operands = 1 : i64, tpu.core_type = #tpu.core_type<tc>, window_params = [{transform_indices = @transform_0, window_bounds = array<i64: 1, 8, 384>}, {transform_indices = @transform_1, window_bounds = array<i64: 1, 8, 1>}, {pipeline_mode = #tpu.pipeline_mode<synchronous>, transform_indices = @transform_2, window_bounds = array<i64: 128, 384>}, {pipeline_mode = #tpu.pipeline_mode<synchronous>, transform_indices = @transform_3, window_bounds = array<i64: 1, 384>}, {transform_indices = @transform_4, window_bounds = array<i64: 1, 8, 128>}]} {
    %c0_i32 = arith.constant 0 : i32
    %0 = arith.cmpi eq, %arg0, %c0_i32 : i32
    %1 = arith.extui %0 : i1 to i32
    %c0_i32_0 = arith.constant 0 : i32
    %2 = arith.cmpi ne, %1, %c0_i32_0 : i32
    scf.if %2 {
      %cst_21 = arith.constant 0.000000e+00 : f32
      %52 = vector.broadcast %cst_21 : f32 to vector<8x128xf32>
      %c0_22 = arith.constant 0 : index
      %c0_23 = arith.constant 0 : index
      %53 = vector.load %arg6[%c0_22, %c0_23] : memref<8x128xf32, #tpu.memory_space<vmem>>, vector<8x128xf32>
      tpu.vector_store %arg6[%c0_22, %c0_23], %52 {strides = array<i32>} : memref<8x128xf32, #tpu.memory_space<vmem>>, vector<8x128xf32>,
    } else {
    }
    %c0 = arith.constant 0 : index
    %c0_1 = arith.constant 0 : index
    %3 = vector.load %arg6[%c0, %c0_1] : memref<8x128xf32, #tpu.memory_space<vmem>>, vector<8x128xf32>
    %c0_2 = arith.constant 0 : index
    %c0_3 = arith.constant 0 : index
    %c0_4 = arith.constant 0 : index
    %4 = vector.load %arg1[%c0_2, %c0_3, %c0_4] : memref<1x8x384xf32, #tpu.memory_space<vmem>>, vector<1x8x384xf32>
    %5 = vector.shape_cast %4 : vector<1x8x384xf32> to vector<8x384xf32>
    %c0_5 = arith.constant 0 : index
    %c0_6 = arith.constant 0 : index
    %6 = vector.load %arg3[%c0_5, %c0_6] : memref<128x384xf32, #tpu.memory_space<vmem>>, vector<128x384xf32>
    %cst = arith.constant dense<0.000000e+00> : vector<8x384xf32>
    %7 = tpu.matmul %3, %6, %cst {dimension_numbers = #tpu.dot_dimension_numbers<[1], [0], [0], [1], [0, 0, 1, 1], [], []>} : vector<8x128xf32>, vector<128x384xf32>, vector<8x384xf32> -> vector<8x384xf32>
    %c0_7 = arith.constant 0 : index
    %c0_8 = arith.constant 0 : index
    %8 = vector.load %arg4[%c0_7, %c0_8] : memref<1x384xf32, #tpu.memory_space<vmem>>, vector<1x384xf32>
    %9 = vector.broadcast %8 : vector<1x384xf32> to vector<8x384xf32>
    %10 = arith.addf %7, %9 : vector<8x384xf32>
    %11 = vector.extract_strided_slice %5 {offsets = [0, 0], sizes = [8, 128], strides = [1, 1]} : vector<8x384xf32> to vector<8x128xf32>
    %12 = vector.extract_strided_slice %10 {offsets = [0, 0], sizes = [8, 128], strides = [1, 1]} : vector<8x384xf32> to vector<8x128xf32>
    %13 = arith.addf %11, %12 : vector<8x128xf32>
    %14 = arith.negf %13 : vector<8x128xf32>
    %15 = math.exp %14 : vector<8x128xf32>
    %cst_9 = arith.constant 1.000000e+00 : f32
    %16 = vector.broadcast %cst_9 : f32 to vector<8x128xf32>
    %17 = arith.addf %16, %15 : vector<8x128xf32>
    %18 = arith.divf %16, %17 : vector<8x128xf32>
    %19 = vector.extract_strided_slice %5 {offsets = [0, 128], sizes = [8, 128], strides = [1, 1]} : vector<8x384xf32> to vector<8x128xf32>
    %20 = vector.extract_strided_slice %10 {offsets = [0, 128], sizes = [8, 128], strides = [1, 1]} : vector<8x384xf32> to vector<8x128xf32>
    %21 = arith.addf %19, %20 : vector<8x128xf32>
    %22 = arith.negf %21 : vector<8x128xf32>
    %23 = math.exp %22 : vector<8x128xf32>
    %cst_10 = arith.constant 1.000000e+00 : f32
    %24 = vector.broadcast %cst_10 : f32 to vector<8x128xf32>
    %25 = arith.addf %24, %23 : vector<8x128xf32>
    %26 = arith.divf %24, %25 : vector<8x128xf32>
    %27 = vector.extract_strided_slice %5 {offsets = [0, 256], sizes = [8, 128], strides = [1, 1]} : vector<8x384xf32> to vector<8x128xf32>
    %28 = vector.extract_strided_slice %10 {offsets = [0, 256], sizes = [8, 128], strides = [1, 1]} : vector<8x384xf32> to vector<8x128xf32>
    %29 = arith.mulf %18, %28 : vector<8x128xf32>
    %30 = arith.addf %27, %29 : vector<8x128xf32>
    %31 = math.tanh %30 : vector<8x128xf32>
    %cst_11 = arith.constant 1.000000e+00 : f32
    %32 = vector.broadcast %cst_11 : f32 to vector<8x128xf32>
    %33 = arith.subf %32, %26 : vector<8x128xf32>
    %34 = arith.mulf %33, %31 : vector<8x128xf32>
    %35 = arith.mulf %26, %3 : vector<8x128xf32>
    %36 = arith.addf %34, %35 : vector<8x128xf32>
    %c0_12 = arith.constant 0 : index
    %c0_13 = arith.constant 0 : index
    %c0_14 = arith.constant 0 : index
    %37 = vector.load %arg2[%c0_12, %c0_13, %c0_14] : memref<1x8x1xf32, #tpu.memory_space<vmem>>, vector<1x8x1xf32>
    %38 = vector.shape_cast %37 : vector<1x8x1xf32> to vector<8x1xf32>
    %39 = vector.broadcast %38 : vector<8x1xf32> to vector<8x128xf32>
    %40 = arith.mulf %39, %36 : vector<8x128xf32>
    %c0_15 = arith.constant 0 : index
    %c0_16 = arith.constant 0 : index
    %c0_17 = arith.constant 0 : index
    %41 = vector.load %arg5[%c0_15, %c0_16, %c0_17] : memref<1x8x128xf32, #tpu.memory_space<vmem>>, vector<1x8x128xf32>
    %42 = vector.shape_cast %41 : vector<1x8x128xf32> to vector<8x128xf32>
    %43 = vector.shape_cast %40 : vector<8x128xf32> to vector<1x8x128xf32>
    tpu.vector_store %arg5[%c0_15, %c0_16, %c0_17], %43 {strides = array<i32>} : memref<1x8x128xf32, #tpu.memory_space<vmem>>, vector<1x8x128xf32>,
    %44 = vector.broadcast %38 : vector<8x1xf32> to vector<8x128xf32>
    %45 = arith.mulf %44, %36 : vector<8x128xf32>
    %cst_18 = arith.constant 1.000000e+00 : f32
    %46 = vector.broadcast %cst_18 : f32 to vector<8x1xf32>
    %47 = arith.subf %46, %38 : vector<8x1xf32>
    %48 = vector.broadcast %47 : vector<8x1xf32> to vector<8x128xf32>
    %49 = arith.mulf %48, %3 : vector<8x128xf32>
    %50 = arith.addf %45, %49 : vector<8x128xf32>
    %c0_19 = arith.constant 0 : index
    %c0_20 = arith.constant 0 : index
    %51 = vector.load %arg6[%c0_19, %c0_20] : memref<8x128xf32, #tpu.memory_space<vmem>>, vector<8x128xf32>
    tpu.vector_store %arg6[%c0_19, %c0_20], %50 {strides = array<i32>} : memref<8x128xf32, #tpu.memory_space<vmem>>, vector<8x128xf32>,
    return
  }
  func.func @transform_0(%arg0: i32) -> (i32, i32, i32) {
    %c0_i32 = arith.constant 0 : i32
    %c0_i32_0 = arith.constant 0 : i32
    %c0_i32_1 = arith.constant 0 : i32
    return %arg0, %c0_i32, %c0_i32_0 : i32, i32, i32
  }
  func.func @transform_1(%arg0: i32) -> (i32, i32, i32) {
    %c0_i32 = arith.constant 0 : i32
    %c0_i32_0 = arith.constant 0 : i32
    %c0_i32_1 = arith.constant 0 : i32
    return %arg0, %c0_i32, %c0_i32_0 : i32, i32, i32
  }
  func.func @transform_2(%arg0: i32) -> (i32, i32) {
    %c0_i32 = arith.constant 0 : i32
    %c0_i32_0 = arith.constant 0 : i32
    %c0_i32_1 = arith.constant 0 : i32
    return %c0_i32, %c0_i32_0 : i32, i32
  }
  func.func @transform_3(%arg0: i32) -> (i32, i32) {
    %c0_i32 = arith.constant 0 : i32
    %c0_i32_0 = arith.constant 0 : i32
    %c0_i32_1 = arith.constant 0 : i32
    return %c0_i32, %c0_i32_0 : i32, i32
  }
  func.func @transform_4(%arg0: i32) -> (i32, i32, i32) {
    %c0_i32 = arith.constant 0 : i32
    %c0_i32_0 = arith.constant 0 : i32
    %c0_i32_1 = arith.constant 0 : i32
    return %arg0, %c0_i32, %c0_i32_0 : i32, i32, i32
  }
}

module attributes {stable_mosaic.version = 11 : i64} {
  func.func @_linear_kernel(%arg0: memref<64x128xf32, #tpu.memory_space<vmem>>, %arg1: memref<128x384xf32, #tpu.memory_space<vmem>>, %arg2: memref<1x384xf32, #tpu.memory_space<vmem>>, %arg3: memref<64x384xf32, #tpu.memory_space<vmem>>) attributes {dimension_semantics = [], scalar_prefetch = 0 : i64, scratch_operands = 0 : i64, tpu.core_type = #tpu.core_type<tc>} {
    %c0 = arith.constant 0 : index
    %c0_0 = arith.constant 0 : index
    %0 = vector.load %arg0[%c0, %c0_0] : memref<64x128xf32, #tpu.memory_space<vmem>>, vector<64x128xf32>
    %c0_1 = arith.constant 0 : index
    %c0_2 = arith.constant 0 : index
    %1 = vector.load %arg1[%c0_1, %c0_2] : memref<128x384xf32, #tpu.memory_space<vmem>>, vector<128x384xf32>
    %cst = arith.constant dense<0.000000e+00> : vector<64x384xf32>
    %2 = tpu.matmul %0, %1, %cst {dimension_numbers = #tpu.dot_dimension_numbers<[1], [0], [0], [1], [0, 0, 1, 1], [], []>} : vector<64x128xf32>, vector<128x384xf32>, vector<64x384xf32> -> vector<64x384xf32>
    %c0_3 = arith.constant 0 : index
    %c0_4 = arith.constant 0 : index
    %3 = vector.load %arg2[%c0_3, %c0_4] : memref<1x384xf32, #tpu.memory_space<vmem>>, vector<1x384xf32>
    %4 = vector.broadcast %3 : vector<1x384xf32> to vector<64x384xf32>
    %5 = arith.addf %2, %4 : vector<64x384xf32>
    %c0_5 = arith.constant 0 : index
    %c0_6 = arith.constant 0 : index
    %6 = vector.load %arg3[%c0_5, %c0_6] : memref<64x384xf32, #tpu.memory_space<vmem>>, vector<64x384xf32>
    tpu.vector_store %arg3[%c0_5, %c0_6], %5 {strides = array<i32>} : memref<64x384xf32, #tpu.memory_space<vmem>>, vector<64x384xf32>,
    return
  }
}

module attributes {stable_mosaic.version = 11 : i64} {
  func.func @_linear_kernel(%arg0: memref<8x256xf32, #tpu.memory_space<vmem>>, %arg1: memref<256x128xf32, #tpu.memory_space<vmem>>, %arg2: memref<1x128xf32, #tpu.memory_space<vmem>>, %arg3: memref<8x128xf32, #tpu.memory_space<vmem>>) attributes {dimension_semantics = [], scalar_prefetch = 0 : i64, scratch_operands = 0 : i64, tpu.core_type = #tpu.core_type<tc>} {
    %c0 = arith.constant 0 : index
    %c0_0 = arith.constant 0 : index
    %0 = vector.load %arg0[%c0, %c0_0] : memref<8x256xf32, #tpu.memory_space<vmem>>, vector<8x256xf32>
    %c0_1 = arith.constant 0 : index
    %c0_2 = arith.constant 0 : index
    %1 = vector.load %arg1[%c0_1, %c0_2] : memref<256x128xf32, #tpu.memory_space<vmem>>, vector<256x128xf32>
    %cst = arith.constant dense<0.000000e+00> : vector<8x128xf32>
    %2 = tpu.matmul %0, %1, %cst {dimension_numbers = #tpu.dot_dimension_numbers<[1], [0], [0], [1], [0, 0, 1, 1], [], []>} : vector<8x256xf32>, vector<256x128xf32>, vector<8x128xf32> -> vector<8x128xf32>
    %c0_3 = arith.constant 0 : index
    %c0_4 = arith.constant 0 : index
    %3 = vector.load %arg2[%c0_3, %c0_4] : memref<1x128xf32, #tpu.memory_space<vmem>>, vector<1x128xf32>
    %4 = vector.broadcast %3 : vector<1x128xf32> to vector<8x128xf32>
    %5 = arith.addf %2, %4 : vector<8x128xf32>
    %6 = math.tanh %5 : vector<8x128xf32>
    %c0_5 = arith.constant 0 : index
    %c0_6 = arith.constant 0 : index
    %7 = vector.load %arg3[%c0_5, %c0_6] : memref<8x128xf32, #tpu.memory_space<vmem>>, vector<8x128xf32>
    tpu.vector_store %arg3[%c0_5, %c0_6], %6 {strides = array<i32>} : memref<8x128xf32, #tpu.memory_space<vmem>>, vector<8x128xf32>,
    return
  }
}

module attributes {stable_mosaic.version = 11 : i64} {
  func.func @_linear_kernel(%arg0: memref<64x256xf32, #tpu.memory_space<vmem>>, %arg1: memref<256x128xf32, #tpu.memory_space<vmem>>, %arg2: memref<1x128xf32, #tpu.memory_space<vmem>>, %arg3: memref<64x128xf32, #tpu.memory_space<vmem>>) attributes {dimension_semantics = [], scalar_prefetch = 0 : i64, scratch_operands = 0 : i64, tpu.core_type = #tpu.core_type<tc>} {
    %c0 = arith.constant 0 : index
    %c0_0 = arith.constant 0 : index
    %0 = vector.load %arg0[%c0, %c0_0] : memref<64x256xf32, #tpu.memory_space<vmem>>, vector<64x256xf32>
    %c0_1 = arith.constant 0 : index
    %c0_2 = arith.constant 0 : index
    %1 = vector.load %arg1[%c0_1, %c0_2] : memref<256x128xf32, #tpu.memory_space<vmem>>, vector<256x128xf32>
    %cst = arith.constant dense<0.000000e+00> : vector<64x128xf32>
    %2 = tpu.matmul %0, %1, %cst {dimension_numbers = #tpu.dot_dimension_numbers<[1], [0], [0], [1], [0, 0, 1, 1], [], []>} : vector<64x256xf32>, vector<256x128xf32>, vector<64x128xf32> -> vector<64x128xf32>
    %c0_3 = arith.constant 0 : index
    %c0_4 = arith.constant 0 : index
    %3 = vector.load %arg2[%c0_3, %c0_4] : memref<1x128xf32, #tpu.memory_space<vmem>>, vector<1x128xf32>
    %4 = vector.broadcast %3 : vector<1x128xf32> to vector<64x128xf32>
    %5 = arith.addf %2, %4 : vector<64x128xf32>
    %c0_5 = arith.constant 0 : index
    %c0_6 = arith.constant 0 : index
    %6 = vector.load %arg3[%c0_5, %c0_6] : memref<64x128xf32, #tpu.memory_space<vmem>>, vector<64x128xf32>
    tpu.vector_store %arg3[%c0_5, %c0_6], %5 {strides = array<i32>} : memref<64x128xf32, #tpu.memory_space<vmem>>, vector<64x128xf32>,
    return
  }
}

module attributes {stable_mosaic.version = 11 : i64} {
  func.func @_linear_kernel(%arg0: memref<56x128xf32, #tpu.memory_space<vmem>>, %arg1: memref<128x384xf32, #tpu.memory_space<vmem>>, %arg2: memref<1x384xf32, #tpu.memory_space<vmem>>, %arg3: memref<56x384xf32, #tpu.memory_space<vmem>>) attributes {dimension_semantics = [], scalar_prefetch = 0 : i64, scratch_operands = 0 : i64, tpu.core_type = #tpu.core_type<tc>} {
    %c0 = arith.constant 0 : index
    %c0_0 = arith.constant 0 : index
    %0 = vector.load %arg0[%c0, %c0_0] : memref<56x128xf32, #tpu.memory_space<vmem>>, vector<56x128xf32>
    %c0_1 = arith.constant 0 : index
    %c0_2 = arith.constant 0 : index
    %1 = vector.load %arg1[%c0_1, %c0_2] : memref<128x384xf32, #tpu.memory_space<vmem>>, vector<128x384xf32>
    %cst = arith.constant dense<0.000000e+00> : vector<56x384xf32>
    %2 = tpu.matmul %0, %1, %cst {dimension_numbers = #tpu.dot_dimension_numbers<[1], [0], [0], [1], [0, 0, 1, 1], [], []>} : vector<56x128xf32>, vector<128x384xf32>, vector<56x384xf32> -> vector<56x384xf32>
    %c0_3 = arith.constant 0 : index
    %c0_4 = arith.constant 0 : index
    %3 = vector.load %arg2[%c0_3, %c0_4] : memref<1x384xf32, #tpu.memory_space<vmem>>, vector<1x384xf32>
    %4 = vector.broadcast %3 : vector<1x384xf32> to vector<56x384xf32>
    %5 = arith.addf %2, %4 : vector<56x384xf32>
    %c0_5 = arith.constant 0 : index
    %c0_6 = arith.constant 0 : index
    %6 = vector.load %arg3[%c0_5, %c0_6] : memref<56x384xf32, #tpu.memory_space<vmem>>, vector<56x384xf32>
    tpu.vector_store %arg3[%c0_5, %c0_6], %5 {strides = array<i32>} : memref<56x384xf32, #tpu.memory_space<vmem>>, vector<56x384xf32>,
    return
  }
}

module attributes {stable_mosaic.version = 11 : i64} {
  func.func @_decoder_kernel(%arg0: i32, %arg1: memref<1x8x384xf32, #tpu.memory_space<vmem>>, %arg2: memref<1x8x1xi32, #tpu.memory_space<vmem>>, %arg3: memref<8x128xf32, #tpu.memory_space<vmem>>, %arg4: memref<8x8x256xf32, #tpu.memory_space<vmem>>, %arg5: memref<8x8x128xf32, #tpu.memory_space<vmem>>, %arg6: memref<8x8x1xf32, #tpu.memory_space<vmem>>, %arg7: memref<128x384xf32, #tpu.memory_space<vmem>>, %arg8: memref<1x384xf32, #tpu.memory_space<vmem>>, %arg9: memref<128x128xf32, #tpu.memory_space<vmem>>, %arg10: memref<1x128xf32, #tpu.memory_space<vmem>>, %arg11: memref<256x384xf32, #tpu.memory_space<vmem>>, %arg12: memref<1x384xf32, #tpu.memory_space<vmem>>, %arg13: memref<128x384xf32, #tpu.memory_space<vmem>>, %arg14: memref<1x384xf32, #tpu.memory_space<vmem>>, %arg15: memref<128x128xf32, #tpu.memory_space<vmem>>, %arg16: memref<1x128xf32, #tpu.memory_space<vmem>>, %arg17: memref<128x128xf32, #tpu.memory_space<vmem>>, %arg18: memref<1x128xf32, #tpu.memory_space<vmem>>, %arg19: memref<1x1xf32, #tpu.memory_space<vmem>>, %arg20: memref<8x128xf32, #tpu.memory_space<vmem>>) attributes {dimension_semantics = [#tpu.dimension_semantics<arbitrary>], iteration_bounds = array<i64: 7>, scalar_prefetch = 0 : i64, scratch_operands = 1 : i64, tpu.core_type = #tpu.core_type<tc>, window_params = [{transform_indices = @transform_0, window_bounds = array<i64: 1, 8, 384>}, {transform_indices = @transform_1, window_bounds = array<i64: 1, 8, 1>}, {pipeline_mode = #tpu.pipeline_mode<synchronous>, transform_indices = @transform_2, window_bounds = array<i64: 8, 128>}, {pipeline_mode = #tpu.pipeline_mode<synchronous>, transform_indices = @transform_3, window_bounds = array<i64: 8, 8, 256>}, {pipeline_mode = #tpu.pipeline_mode<synchronous>, transform_indices = @transform_4, window_bounds = array<i64: 8, 8, 128>}, {pipeline_mode = #tpu.pipeline_mode<synchronous>, transform_indices = @transform_5, window_bounds = array<i64: 8, 8, 1>}, {pipeline_mode = #tpu.pipeline_mode<synchronous>, transform_indices = @transform_6, window_bounds = array<i64: 128, 384>}, {pipeline_mode = #tpu.pipeline_mode<synchronous>, transform_indices = @transform_7, window_bounds = array<i64: 1, 384>}, {pipeline_mode = #tpu.pipeline_mode<synchronous>, transform_indices = @transform_8, window_bounds = array<i64: 128, 128>}, {pipeline_mode = #tpu.pipeline_mode<synchronous>, transform_indices = @transform_9, window_bounds = array<i64: 1, 128>}, {pipeline_mode = #tpu.pipeline_mode<synchronous>, transform_indices = @transform_10, window_bounds = array<i64: 256, 384>}, {pipeline_mode = #tpu.pipeline_mode<synchronous>, transform_indices = @transform_11, window_bounds = array<i64: 1, 384>}, {pipeline_mode = #tpu.pipeline_mode<synchronous>, transform_indices = @transform_12, window_bounds = array<i64: 128, 384>}, {pipeline_mode = #tpu.pipeline_mode<synchronous>, transform_indices = @transform_13, window_bounds = array<i64: 1, 384>}, {pipeline_mode = #tpu.pipeline_mode<synchronous>, transform_indices = @transform_14, window_bounds = array<i64: 128, 128>}, {pipeline_mode = #tpu.pipeline_mode<synchronous>, transform_indices = @transform_15, window_bounds = array<i64: 1, 128>}, {pipeline_mode = #tpu.pipeline_mode<synchronous>, transform_indices = @transform_16, window_bounds = array<i64: 128, 128>}, {pipeline_mode = #tpu.pipeline_mode<synchronous>, transform_indices = @transform_17, window_bounds = array<i64: 1, 128>}, {pipeline_mode = #tpu.pipeline_mode<synchronous>, transform_indices = @transform_18, window_bounds = array<i64: 1, 1>}]} {
    %c0_i32 = arith.constant 0 : i32
    %0 = arith.cmpi eq, %arg0, %c0_i32 : i32
    %1 = arith.extui %0 : i1 to i32
    %c0_i32_0 = arith.constant 0 : i32
    %2 = arith.cmpi ne, %1, %c0_i32_0 : i32
    scf.if %2 {
      %c0_145 = arith.constant 0 : index
      %c0_146 = arith.constant 0 : index
      %311 = vector.load %arg3[%c0_145, %c0_146] : memref<8x128xf32, #tpu.memory_space<vmem>>, vector<8x128xf32>
      %c0_147 = arith.constant 0 : index
      %c0_148 = arith.constant 0 : index
      %312 = vector.load %arg20[%c0_147, %c0_148] : memref<8x128xf32, #tpu.memory_space<vmem>>, vector<8x128xf32>
      tpu.vector_store %arg20[%c0_147, %c0_148], %311 {strides = array<i32>} : memref<8x128xf32, #tpu.memory_space<vmem>>, vector<8x128xf32>,
      %cst_149 = arith.constant 0.000000e+00 : f32
      %313 = vector.broadcast %cst_149 : f32 to vector<1x1xf32>
      %c0_150 = arith.constant 0 : index
      %c0_151 = arith.constant 0 : index
      %314 = vector.load %arg19[%c0_150, %c0_151] : memref<1x1xf32, #tpu.memory_space<vmem>>, vector<1x1xf32>
      tpu.vector_store %arg19[%c0_150, %c0_151], %313 {strides = array<i32>} : memref<1x1xf32, #tpu.memory_space<vmem>>, vector<1x1xf32>,
    } else {
    }
    %c0 = arith.constant 0 : index
    %c0_1 = arith.constant 0 : index
    %3 = vector.load %arg20[%c0, %c0_1] : memref<8x128xf32, #tpu.memory_space<vmem>>, vector<8x128xf32>
    %c0_2 = arith.constant 0 : index
    %c0_3 = arith.constant 0 : index
    %c0_4 = arith.constant 0 : index
    %4 = vector.load %arg1[%c0_2, %c0_3, %c0_4] : memref<1x8x384xf32, #tpu.memory_space<vmem>>, vector<1x8x384xf32>
    %5 = vector.shape_cast %4 : vector<1x8x384xf32> to vector<8x384xf32>
    %c0_5 = arith.constant 0 : index
    %c0_6 = arith.constant 0 : index
    %6 = vector.load %arg7[%c0_5, %c0_6] : memref<128x384xf32, #tpu.memory_space<vmem>>, vector<128x384xf32>
    %cst = arith.constant dense<0.000000e+00> : vector<8x384xf32>
    %7 = tpu.matmul %3, %6, %cst {dimension_numbers = #tpu.dot_dimension_numbers<[1], [0], [0], [1], [0, 0, 1, 1], [], []>} : vector<8x128xf32>, vector<128x384xf32>, vector<8x384xf32> -> vector<8x384xf32>
    %c0_7 = arith.constant 0 : index
    %c0_8 = arith.constant 0 : index
    %8 = vector.load %arg8[%c0_7, %c0_8] : memref<1x384xf32, #tpu.memory_space<vmem>>, vector<1x384xf32>
    %9 = vector.broadcast %8 : vector<1x384xf32> to vector<8x384xf32>
    %10 = arith.addf %7, %9 : vector<8x384xf32>
    %11 = vector.extract_strided_slice %5 {offsets = [0, 0], sizes = [8, 128], strides = [1, 1]} : vector<8x384xf32> to vector<8x128xf32>
    %12 = vector.extract_strided_slice %10 {offsets = [0, 0], sizes = [8, 128], strides = [1, 1]} : vector<8x384xf32> to vector<8x128xf32>
    %13 = arith.addf %11, %12 : vector<8x128xf32>
    %14 = arith.negf %13 : vector<8x128xf32>
    %15 = math.exp %14 : vector<8x128xf32>
    %cst_9 = arith.constant 1.000000e+00 : f32
    %16 = vector.broadcast %cst_9 : f32 to vector<8x128xf32>
    %17 = arith.addf %16, %15 : vector<8x128xf32>
    %18 = arith.divf %16, %17 : vector<8x128xf32>
    %19 = vector.extract_strided_slice %5 {offsets = [0, 128], sizes = [8, 128], strides = [1, 1]} : vector<8x384xf32> to vector<8x128xf32>
    %20 = vector.extract_strided_slice %10 {offsets = [0, 128], sizes = [8, 128], strides = [1, 1]} : vector<8x384xf32> to vector<8x128xf32>
    %21 = arith.addf %19, %20 : vector<8x128xf32>
    %22 = arith.negf %21 : vector<8x128xf32>
    %23 = math.exp %22 : vector<8x128xf32>
    %cst_10 = arith.constant 1.000000e+00 : f32
    %24 = vector.broadcast %cst_10 : f32 to vector<8x128xf32>
    %25 = arith.addf %24, %23 : vector<8x128xf32>
    %26 = arith.divf %24, %25 : vector<8x128xf32>
    %27 = vector.extract_strided_slice %5 {offsets = [0, 256], sizes = [8, 128], strides = [1, 1]} : vector<8x384xf32> to vector<8x128xf32>
    %28 = vector.extract_strided_slice %10 {offsets = [0, 256], sizes = [8, 128], strides = [1, 1]} : vector<8x384xf32> to vector<8x128xf32>
    %29 = arith.mulf %18, %28 : vector<8x128xf32>
    %30 = arith.addf %27, %29 : vector<8x128xf32>
    %31 = math.tanh %30 : vector<8x128xf32>
    %cst_11 = arith.constant 1.000000e+00 : f32
    %32 = vector.broadcast %cst_11 : f32 to vector<8x128xf32>
    %33 = arith.subf %32, %26 : vector<8x128xf32>
    %34 = arith.mulf %33, %31 : vector<8x128xf32>
    %35 = arith.mulf %26, %3 : vector<8x128xf32>
    %36 = arith.addf %34, %35 : vector<8x128xf32>
    %c0_12 = arith.constant 0 : index
    %c0_13 = arith.constant 0 : index
    %37 = vector.load %arg9[%c0_12, %c0_13] : memref<128x128xf32, #tpu.memory_space<vmem>>, vector<128x128xf32>
    %cst_14 = arith.constant dense<0.000000e+00> : vector<8x128xf32>
    %38 = tpu.matmul %36, %37, %cst_14 {dimension_numbers = #tpu.dot_dimension_numbers<[1], [0], [0], [1], [0, 0, 1, 1], [], []>} : vector<8x128xf32>, vector<128x128xf32>, vector<8x128xf32> -> vector<8x128xf32>
    %c0_15 = arith.constant 0 : index
    %c0_16 = arith.constant 0 : index
    %39 = vector.load %arg10[%c0_15, %c0_16] : memref<1x128xf32, #tpu.memory_space<vmem>>, vector<1x128xf32>
    %c0_17 = arith.constant 0 : index
    %c0_18 = arith.constant 0 : index
    %c0_19 = arith.constant 0 : index
    %40 = vector.load %arg5[%c0_17, %c0_18, %c0_19] : memref<8x8x128xf32, #tpu.memory_space<vmem>>, vector<1x8x128xf32>
    %41 = vector.shape_cast %40 : vector<1x8x128xf32> to vector<8x128xf32>
    %42 = arith.addf %41, %38 : vector<8x128xf32>
    %43 = math.tanh %42 : vector<8x128xf32>
    %44 = vector.broadcast %39 : vector<1x128xf32> to vector<8x128xf32>
    %45 = arith.mulf %43, %44 : vector<8x128xf32>
    %cst_20 = arith.constant dense<0.000000e+00> : vector<8xf32>
    %46 = vector.multi_reduction <add>, %45, %cst_20 [1] : vector<8x128xf32> to vector<8xf32>
    %47 = vector.shape_cast %46 : vector<8xf32> to vector<8x1xf32>
    %c0_21 = arith.constant 0 : index
    %c0_22 = arith.constant 0 : index
    %c0_23 = arith.constant 0 : index
    %48 = vector.load %arg6[%c0_21, %c0_22, %c0_23] : memref<8x8x1xf32, #tpu.memory_space<vmem>>, vector<1x8x1xf32>
    %49 = vector.shape_cast %48 : vector<1x8x1xf32> to vector<8x1xf32>
    %cst_24 = arith.constant 0.000000e+00 : f32
    %50 = vector.broadcast %cst_24 : f32 to vector<8x1xf32>
    %51 = arith.cmpf ogt, %49, %50 : vector<8x1xf32>
    %cst_25 = arith.constant -1.000000e+08 : f32
    %52 = vector.broadcast %cst_25 : f32 to vector<8x1xf32>
    %53 = arith.select %51, %47, %52 : vector<8x1xi1>, vector<8x1xf32>
    %c1 = arith.constant 1 : index
    %c0_26 = arith.constant 0 : index
    %c0_27 = arith.constant 0 : index
    %54 = vector.load %arg5[%c1, %c0_26, %c0_27] : memref<8x8x128xf32, #tpu.memory_space<vmem>>, vector<1x8x128xf32>
    %55 = vector.shape_cast %54 : vector<1x8x128xf32> to vector<8x128xf32>
    %56 = arith.addf %55, %38 : vector<8x128xf32>
    %57 = math.tanh %56 : vector<8x128xf32>
    %58 = vector.broadcast %39 : vector<1x128xf32> to vector<8x128xf32>
    %59 = arith.mulf %57, %58 : vector<8x128xf32>
    %cst_28 = arith.constant dense<0.000000e+00> : vector<8xf32>
    %60 = vector.multi_reduction <add>, %59, %cst_28 [1] : vector<8x128xf32> to vector<8xf32>
    %61 = vector.shape_cast %60 : vector<8xf32> to vector<8x1xf32>
    %c1_29 = arith.constant 1 : index
    %c0_30 = arith.constant 0 : index
    %c0_31 = arith.constant 0 : index
    %62 = vector.load %arg6[%c1_29, %c0_30, %c0_31] : memref<8x8x1xf32, #tpu.memory_space<vmem>>, vector<1x8x1xf32>
    %63 = vector.shape_cast %62 : vector<1x8x1xf32> to vector<8x1xf32>
    %cst_32 = arith.constant 0.000000e+00 : f32
    %64 = vector.broadcast %cst_32 : f32 to vector<8x1xf32>
    %65 = arith.cmpf ogt, %63, %64 : vector<8x1xf32>
    %cst_33 = arith.constant -1.000000e+08 : f32
    %66 = vector.broadcast %cst_33 : f32 to vector<8x1xf32>
    %67 = arith.select %65, %61, %66 : vector<8x1xi1>, vector<8x1xf32>
    %c2 = arith.constant 2 : index
    %c0_34 = arith.constant 0 : index
    %c0_35 = arith.constant 0 : index
    %68 = vector.load %arg5[%c2, %c0_34, %c0_35] : memref<8x8x128xf32, #tpu.memory_space<vmem>>, vector<1x8x128xf32>
    %69 = vector.shape_cast %68 : vector<1x8x128xf32> to vector<8x128xf32>
    %70 = arith.addf %69, %38 : vector<8x128xf32>
    %71 = math.tanh %70 : vector<8x128xf32>
    %72 = vector.broadcast %39 : vector<1x128xf32> to vector<8x128xf32>
    %73 = arith.mulf %71, %72 : vector<8x128xf32>
    %cst_36 = arith.constant dense<0.000000e+00> : vector<8xf32>
    %74 = vector.multi_reduction <add>, %73, %cst_36 [1] : vector<8x128xf32> to vector<8xf32>
    %75 = vector.shape_cast %74 : vector<8xf32> to vector<8x1xf32>
    %c2_37 = arith.constant 2 : index
    %c0_38 = arith.constant 0 : index
    %c0_39 = arith.constant 0 : index
    %76 = vector.load %arg6[%c2_37, %c0_38, %c0_39] : memref<8x8x1xf32, #tpu.memory_space<vmem>>, vector<1x8x1xf32>
    %77 = vector.shape_cast %76 : vector<1x8x1xf32> to vector<8x1xf32>
    %cst_40 = arith.constant 0.000000e+00 : f32
    %78 = vector.broadcast %cst_40 : f32 to vector<8x1xf32>
    %79 = arith.cmpf ogt, %77, %78 : vector<8x1xf32>
    %cst_41 = arith.constant -1.000000e+08 : f32
    %80 = vector.broadcast %cst_41 : f32 to vector<8x1xf32>
    %81 = arith.select %79, %75, %80 : vector<8x1xi1>, vector<8x1xf32>
    %c3 = arith.constant 3 : index
    %c0_42 = arith.constant 0 : index
    %c0_43 = arith.constant 0 : index
    %82 = vector.load %arg5[%c3, %c0_42, %c0_43] : memref<8x8x128xf32, #tpu.memory_space<vmem>>, vector<1x8x128xf32>
    %83 = vector.shape_cast %82 : vector<1x8x128xf32> to vector<8x128xf32>
    %84 = arith.addf %83, %38 : vector<8x128xf32>
    %85 = math.tanh %84 : vector<8x128xf32>
    %86 = vector.broadcast %39 : vector<1x128xf32> to vector<8x128xf32>
    %87 = arith.mulf %85, %86 : vector<8x128xf32>
    %cst_44 = arith.constant dense<0.000000e+00> : vector<8xf32>
    %88 = vector.multi_reduction <add>, %87, %cst_44 [1] : vector<8x128xf32> to vector<8xf32>
    %89 = vector.shape_cast %88 : vector<8xf32> to vector<8x1xf32>
    %c3_45 = arith.constant 3 : index
    %c0_46 = arith.constant 0 : index
    %c0_47 = arith.constant 0 : index
    %90 = vector.load %arg6[%c3_45, %c0_46, %c0_47] : memref<8x8x1xf32, #tpu.memory_space<vmem>>, vector<1x8x1xf32>
    %91 = vector.shape_cast %90 : vector<1x8x1xf32> to vector<8x1xf32>
    %cst_48 = arith.constant 0.000000e+00 : f32
    %92 = vector.broadcast %cst_48 : f32 to vector<8x1xf32>
    %93 = arith.cmpf ogt, %91, %92 : vector<8x1xf32>
    %cst_49 = arith.constant -1.000000e+08 : f32
    %94 = vector.broadcast %cst_49 : f32 to vector<8x1xf32>
    %95 = arith.select %93, %89, %94 : vector<8x1xi1>, vector<8x1xf32>
    %c4 = arith.constant 4 : index
    %c0_50 = arith.constant 0 : index
    %c0_51 = arith.constant 0 : index
    %96 = vector.load %arg5[%c4, %c0_50, %c0_51] : memref<8x8x128xf32, #tpu.memory_space<vmem>>, vector<1x8x128xf32>
    %97 = vector.shape_cast %96 : vector<1x8x128xf32> to vector<8x128xf32>
    %98 = arith.addf %97, %38 : vector<8x128xf32>
    %99 = math.tanh %98 : vector<8x128xf32>
    %100 = vector.broadcast %39 : vector<1x128xf32> to vector<8x128xf32>
    %101 = arith.mulf %99, %100 : vector<8x128xf32>
    %cst_52 = arith.constant dense<0.000000e+00> : vector<8xf32>
    %102 = vector.multi_reduction <add>, %101, %cst_52 [1] : vector<8x128xf32> to vector<8xf32>
    %103 = vector.shape_cast %102 : vector<8xf32> to vector<8x1xf32>
    %c4_53 = arith.constant 4 : index
    %c0_54 = arith.constant 0 : index
    %c0_55 = arith.constant 0 : index
    %104 = vector.load %arg6[%c4_53, %c0_54, %c0_55] : memref<8x8x1xf32, #tpu.memory_space<vmem>>, vector<1x8x1xf32>
    %105 = vector.shape_cast %104 : vector<1x8x1xf32> to vector<8x1xf32>
    %cst_56 = arith.constant 0.000000e+00 : f32
    %106 = vector.broadcast %cst_56 : f32 to vector<8x1xf32>
    %107 = arith.cmpf ogt, %105, %106 : vector<8x1xf32>
    %cst_57 = arith.constant -1.000000e+08 : f32
    %108 = vector.broadcast %cst_57 : f32 to vector<8x1xf32>
    %109 = arith.select %107, %103, %108 : vector<8x1xi1>, vector<8x1xf32>
    %c5 = arith.constant 5 : index
    %c0_58 = arith.constant 0 : index
    %c0_59 = arith.constant 0 : index
    %110 = vector.load %arg5[%c5, %c0_58, %c0_59] : memref<8x8x128xf32, #tpu.memory_space<vmem>>, vector<1x8x128xf32>
    %111 = vector.shape_cast %110 : vector<1x8x128xf32> to vector<8x128xf32>
    %112 = arith.addf %111, %38 : vector<8x128xf32>
    %113 = math.tanh %112 : vector<8x128xf32>
    %114 = vector.broadcast %39 : vector<1x128xf32> to vector<8x128xf32>
    %115 = arith.mulf %113, %114 : vector<8x128xf32>
    %cst_60 = arith.constant dense<0.000000e+00> : vector<8xf32>
    %116 = vector.multi_reduction <add>, %115, %cst_60 [1] : vector<8x128xf32> to vector<8xf32>
    %117 = vector.shape_cast %116 : vector<8xf32> to vector<8x1xf32>
    %c5_61 = arith.constant 5 : index
    %c0_62 = arith.constant 0 : index
    %c0_63 = arith.constant 0 : index
    %118 = vector.load %arg6[%c5_61, %c0_62, %c0_63] : memref<8x8x1xf32, #tpu.memory_space<vmem>>, vector<1x8x1xf32>
    %119 = vector.shape_cast %118 : vector<1x8x1xf32> to vector<8x1xf32>
    %cst_64 = arith.constant 0.000000e+00 : f32
    %120 = vector.broadcast %cst_64 : f32 to vector<8x1xf32>
    %121 = arith.cmpf ogt, %119, %120 : vector<8x1xf32>
    %cst_65 = arith.constant -1.000000e+08 : f32
    %122 = vector.broadcast %cst_65 : f32 to vector<8x1xf32>
    %123 = arith.select %121, %117, %122 : vector<8x1xi1>, vector<8x1xf32>
    %c6 = arith.constant 6 : index
    %c0_66 = arith.constant 0 : index
    %c0_67 = arith.constant 0 : index
    %124 = vector.load %arg5[%c6, %c0_66, %c0_67] : memref<8x8x128xf32, #tpu.memory_space<vmem>>, vector<1x8x128xf32>
    %125 = vector.shape_cast %124 : vector<1x8x128xf32> to vector<8x128xf32>
    %126 = arith.addf %125, %38 : vector<8x128xf32>
    %127 = math.tanh %126 : vector<8x128xf32>
    %128 = vector.broadcast %39 : vector<1x128xf32> to vector<8x128xf32>
    %129 = arith.mulf %127, %128 : vector<8x128xf32>
    %cst_68 = arith.constant dense<0.000000e+00> : vector<8xf32>
    %130 = vector.multi_reduction <add>, %129, %cst_68 [1] : vector<8x128xf32> to vector<8xf32>
    %131 = vector.shape_cast %130 : vector<8xf32> to vector<8x1xf32>
    %c6_69 = arith.constant 6 : index
    %c0_70 = arith.constant 0 : index
    %c0_71 = arith.constant 0 : index
    %132 = vector.load %arg6[%c6_69, %c0_70, %c0_71] : memref<8x8x1xf32, #tpu.memory_space<vmem>>, vector<1x8x1xf32>
    %133 = vector.shape_cast %132 : vector<1x8x1xf32> to vector<8x1xf32>
    %cst_72 = arith.constant 0.000000e+00 : f32
    %134 = vector.broadcast %cst_72 : f32 to vector<8x1xf32>
    %135 = arith.cmpf ogt, %133, %134 : vector<8x1xf32>
    %cst_73 = arith.constant -1.000000e+08 : f32
    %136 = vector.broadcast %cst_73 : f32 to vector<8x1xf32>
    %137 = arith.select %135, %131, %136 : vector<8x1xi1>, vector<8x1xf32>
    %c7 = arith.constant 7 : index
    %c0_74 = arith.constant 0 : index
    %c0_75 = arith.constant 0 : index
    %138 = vector.load %arg5[%c7, %c0_74, %c0_75] : memref<8x8x128xf32, #tpu.memory_space<vmem>>, vector<1x8x128xf32>
    %139 = vector.shape_cast %138 : vector<1x8x128xf32> to vector<8x128xf32>
    %140 = arith.addf %139, %38 : vector<8x128xf32>
    %141 = math.tanh %140 : vector<8x128xf32>
    %142 = vector.broadcast %39 : vector<1x128xf32> to vector<8x128xf32>
    %143 = arith.mulf %141, %142 : vector<8x128xf32>
    %cst_76 = arith.constant dense<0.000000e+00> : vector<8xf32>
    %144 = vector.multi_reduction <add>, %143, %cst_76 [1] : vector<8x128xf32> to vector<8xf32>
    %145 = vector.shape_cast %144 : vector<8xf32> to vector<8x1xf32>
    %c7_77 = arith.constant 7 : index
    %c0_78 = arith.constant 0 : index
    %c0_79 = arith.constant 0 : index
    %146 = vector.load %arg6[%c7_77, %c0_78, %c0_79] : memref<8x8x1xf32, #tpu.memory_space<vmem>>, vector<1x8x1xf32>
    %147 = vector.shape_cast %146 : vector<1x8x1xf32> to vector<8x1xf32>
    %cst_80 = arith.constant 0.000000e+00 : f32
    %148 = vector.broadcast %cst_80 : f32 to vector<8x1xf32>
    %149 = arith.cmpf ogt, %147, %148 : vector<8x1xf32>
    %cst_81 = arith.constant -1.000000e+08 : f32
    %150 = vector.broadcast %cst_81 : f32 to vector<8x1xf32>
    %151 = arith.select %149, %145, %150 : vector<8x1xi1>, vector<8x1xf32>
    %152 = arith.maximumf %53, %67 : vector<8x1xf32>
    %153 = arith.maximumf %152, %81 : vector<8x1xf32>
    %154 = arith.maximumf %153, %95 : vector<8x1xf32>
    %155 = arith.maximumf %154, %109 : vector<8x1xf32>
    %156 = arith.maximumf %155, %123 : vector<8x1xf32>
    %157 = arith.maximumf %156, %137 : vector<8x1xf32>
    %158 = arith.maximumf %157, %151 : vector<8x1xf32>
    %159 = arith.subf %53, %158 : vector<8x1xf32>
    %160 = math.exp %159 : vector<8x1xf32>
    %161 = arith.subf %67, %158 : vector<8x1xf32>
    %162 = math.exp %161 : vector<8x1xf32>
    %163 = arith.subf %81, %158 : vector<8x1xf32>
    %164 = math.exp %163 : vector<8x1xf32>
    %165 = arith.subf %95, %158 : vector<8x1xf32>
    %166 = math.exp %165 : vector<8x1xf32>
    %167 = arith.subf %109, %158 : vector<8x1xf32>
    %168 = math.exp %167 : vector<8x1xf32>
    %169 = arith.subf %123, %158 : vector<8x1xf32>
    %170 = math.exp %169 : vector<8x1xf32>
    %171 = arith.subf %137, %158 : vector<8x1xf32>
    %172 = math.exp %171 : vector<8x1xf32>
    %173 = arith.subf %151, %158 : vector<8x1xf32>
    %174 = math.exp %173 : vector<8x1xf32>
    %175 = arith.addf %160, %162 : vector<8x1xf32>
    %176 = arith.addf %175, %164 : vector<8x1xf32>
    %177 = arith.addf %176, %166 : vector<8x1xf32>
    %178 = arith.addf %177, %168 : vector<8x1xf32>
    %179 = arith.addf %178, %170 : vector<8x1xf32>
    %180 = arith.addf %179, %172 : vector<8x1xf32>
    %181 = arith.addf %180, %174 : vector<8x1xf32>
    %cst_82 = arith.constant 1.000000e+00 : f32
    %182 = vector.broadcast %cst_82 : f32 to vector<8x1xf32>
    %183 = arith.divf %182, %181 : vector<8x1xf32>
    %184 = arith.mulf %160, %183 : vector<8x1xf32>
    %c0_83 = arith.constant 0 : index
    %c0_84 = arith.constant 0 : index
    %c0_85 = arith.constant 0 : index
    %185 = vector.load %arg4[%c0_83, %c0_84, %c0_85] : memref<8x8x256xf32, #tpu.memory_space<vmem>>, vector<1x8x256xf32>
    %186 = vector.shape_cast %185 : vector<1x8x256xf32> to vector<8x256xf32>
    %187 = vector.broadcast %184 : vector<8x1xf32> to vector<8x256xf32>
    %188 = arith.mulf %187, %186 : vector<8x256xf32>
    %189 = arith.mulf %162, %183 : vector<8x1xf32>
    %c1_86 = arith.constant 1 : index
    %c0_87 = arith.constant 0 : index
    %c0_88 = arith.constant 0 : index
    %190 = vector.load %arg4[%c1_86, %c0_87, %c0_88] : memref<8x8x256xf32, #tpu.memory_space<vmem>>, vector<1x8x256xf32>
    %191 = vector.shape_cast %190 : vector<1x8x256xf32> to vector<8x256xf32>
    %192 = vector.broadcast %189 : vector<8x1xf32> to vector<8x256xf32>
    %193 = arith.mulf %192, %191 : vector<8x256xf32>
    %194 = arith.addf %188, %193 : vector<8x256xf32>
    %195 = arith.mulf %164, %183 : vector<8x1xf32>
    %c2_89 = arith.constant 2 : index
    %c0_90 = arith.constant 0 : index
    %c0_91 = arith.constant 0 : index
    %196 = vector.load %arg4[%c2_89, %c0_90, %c0_91] : memref<8x8x256xf32, #tpu.memory_space<vmem>>, vector<1x8x256xf32>
    %197 = vector.shape_cast %196 : vector<1x8x256xf32> to vector<8x256xf32>
    %198 = vector.broadcast %195 : vector<8x1xf32> to vector<8x256xf32>
    %199 = arith.mulf %198, %197 : vector<8x256xf32>
    %200 = arith.addf %194, %199 : vector<8x256xf32>
    %201 = arith.mulf %166, %183 : vector<8x1xf32>
    %c3_92 = arith.constant 3 : index
    %c0_93 = arith.constant 0 : index
    %c0_94 = arith.constant 0 : index
    %202 = vector.load %arg4[%c3_92, %c0_93, %c0_94] : memref<8x8x256xf32, #tpu.memory_space<vmem>>, vector<1x8x256xf32>
    %203 = vector.shape_cast %202 : vector<1x8x256xf32> to vector<8x256xf32>
    %204 = vector.broadcast %201 : vector<8x1xf32> to vector<8x256xf32>
    %205 = arith.mulf %204, %203 : vector<8x256xf32>
    %206 = arith.addf %200, %205 : vector<8x256xf32>
    %207 = arith.mulf %168, %183 : vector<8x1xf32>
    %c4_95 = arith.constant 4 : index
    %c0_96 = arith.constant 0 : index
    %c0_97 = arith.constant 0 : index
    %208 = vector.load %arg4[%c4_95, %c0_96, %c0_97] : memref<8x8x256xf32, #tpu.memory_space<vmem>>, vector<1x8x256xf32>
    %209 = vector.shape_cast %208 : vector<1x8x256xf32> to vector<8x256xf32>
    %210 = vector.broadcast %207 : vector<8x1xf32> to vector<8x256xf32>
    %211 = arith.mulf %210, %209 : vector<8x256xf32>
    %212 = arith.addf %206, %211 : vector<8x256xf32>
    %213 = arith.mulf %170, %183 : vector<8x1xf32>
    %c5_98 = arith.constant 5 : index
    %c0_99 = arith.constant 0 : index
    %c0_100 = arith.constant 0 : index
    %214 = vector.load %arg4[%c5_98, %c0_99, %c0_100] : memref<8x8x256xf32, #tpu.memory_space<vmem>>, vector<1x8x256xf32>
    %215 = vector.shape_cast %214 : vector<1x8x256xf32> to vector<8x256xf32>
    %216 = vector.broadcast %213 : vector<8x1xf32> to vector<8x256xf32>
    %217 = arith.mulf %216, %215 : vector<8x256xf32>
    %218 = arith.addf %212, %217 : vector<8x256xf32>
    %219 = arith.mulf %172, %183 : vector<8x1xf32>
    %c6_101 = arith.constant 6 : index
    %c0_102 = arith.constant 0 : index
    %c0_103 = arith.constant 0 : index
    %220 = vector.load %arg4[%c6_101, %c0_102, %c0_103] : memref<8x8x256xf32, #tpu.memory_space<vmem>>, vector<1x8x256xf32>
    %221 = vector.shape_cast %220 : vector<1x8x256xf32> to vector<8x256xf32>
    %222 = vector.broadcast %219 : vector<8x1xf32> to vector<8x256xf32>
    %223 = arith.mulf %222, %221 : vector<8x256xf32>
    %224 = arith.addf %218, %223 : vector<8x256xf32>
    %225 = arith.mulf %174, %183 : vector<8x1xf32>
    %c7_104 = arith.constant 7 : index
    %c0_105 = arith.constant 0 : index
    %c0_106 = arith.constant 0 : index
    %226 = vector.load %arg4[%c7_104, %c0_105, %c0_106] : memref<8x8x256xf32, #tpu.memory_space<vmem>>, vector<1x8x256xf32>
    %227 = vector.shape_cast %226 : vector<1x8x256xf32> to vector<8x256xf32>
    %228 = vector.broadcast %225 : vector<8x1xf32> to vector<8x256xf32>
    %229 = arith.mulf %228, %227 : vector<8x256xf32>
    %230 = arith.addf %224, %229 : vector<8x256xf32>
    %c0_107 = arith.constant 0 : index
    %c0_108 = arith.constant 0 : index
    %231 = vector.load %arg11[%c0_107, %c0_108] : memref<256x384xf32, #tpu.memory_space<vmem>>, vector<256x384xf32>
    %cst_109 = arith.constant dense<0.000000e+00> : vector<8x384xf32>
    %232 = tpu.matmul %230, %231, %cst_109 {dimension_numbers = #tpu.dot_dimension_numbers<[1], [0], [0], [1], [0, 0, 1, 1], [], []>} : vector<8x256xf32>, vector<256x384xf32>, vector<8x384xf32> -> vector<8x384xf32>
    %c0_110 = arith.constant 0 : index
    %c0_111 = arith.constant 0 : index
    %233 = vector.load %arg12[%c0_110, %c0_111] : memref<1x384xf32, #tpu.memory_space<vmem>>, vector<1x384xf32>
    %234 = vector.broadcast %233 : vector<1x384xf32> to vector<8x384xf32>
    %235 = arith.addf %232, %234 : vector<8x384xf32>
    %c0_112 = arith.constant 0 : index
    %c0_113 = arith.constant 0 : index
    %236 = vector.load %arg13[%c0_112, %c0_113] : memref<128x384xf32, #tpu.memory_space<vmem>>, vector<128x384xf32>
    %cst_114 = arith.constant dense<0.000000e+00> : vector<8x384xf32>
    %237 = tpu.matmul %36, %236, %cst_114 {dimension_numbers = #tpu.dot_dimension_numbers<[1], [0], [0], [1], [0, 0, 1, 1], [], []>} : vector<8x128xf32>, vector<128x384xf32>, vector<8x384xf32> -> vector<8x384xf32>
    %c0_115 = arith.constant 0 : index
    %c0_116 = arith.constant 0 : index
    %238 = vector.load %arg14[%c0_115, %c0_116] : memref<1x384xf32, #tpu.memory_space<vmem>>, vector<1x384xf32>
    %239 = vector.broadcast %238 : vector<1x384xf32> to vector<8x384xf32>
    %240 = arith.addf %237, %239 : vector<8x384xf32>
    %241 = vector.extract_strided_slice %235 {offsets = [0, 0], sizes = [8, 128], strides = [1, 1]} : vector<8x384xf32> to vector<8x128xf32>
    %242 = vector.extract_strided_slice %240 {offsets = [0, 0], sizes = [8, 128], strides = [1, 1]} : vector<8x384xf32> to vector<8x128xf32>
    %243 = arith.addf %241, %242 : vector<8x128xf32>
    %244 = arith.negf %243 : vector<8x128xf32>
    %245 = math.exp %244 : vector<8x128xf32>
    %cst_117 = arith.constant 1.000000e+00 : f32
    %246 = vector.broadcast %cst_117 : f32 to vector<8x128xf32>
    %247 = arith.addf %246, %245 : vector<8x128xf32>
    %248 = arith.divf %246, %247 : vector<8x128xf32>
    %249 = vector.extract_strided_slice %235 {offsets = [0, 128], sizes = [8, 128], strides = [1, 1]} : vector<8x384xf32> to vector<8x128xf32>
    %250 = vector.extract_strided_slice %240 {offsets = [0, 128], sizes = [8, 128], strides = [1, 1]} : vector<8x384xf32> to vector<8x128xf32>
    %251 = arith.addf %249, %250 : vector<8x128xf32>
    %252 = arith.negf %251 : vector<8x128xf32>
    %253 = math.exp %252 : vector<8x128xf32>
    %cst_118 = arith.constant 1.000000e+00 : f32
    %254 = vector.broadcast %cst_118 : f32 to vector<8x128xf32>
    %255 = arith.addf %254, %253 : vector<8x128xf32>
    %256 = arith.divf %254, %255 : vector<8x128xf32>
    %257 = vector.extract_strided_slice %235 {offsets = [0, 256], sizes = [8, 128], strides = [1, 1]} : vector<8x384xf32> to vector<8x128xf32>
    %258 = vector.extract_strided_slice %240 {offsets = [0, 256], sizes = [8, 128], strides = [1, 1]} : vector<8x384xf32> to vector<8x128xf32>
    %259 = arith.mulf %248, %258 : vector<8x128xf32>
    %260 = arith.addf %257, %259 : vector<8x128xf32>
    %261 = math.tanh %260 : vector<8x128xf32>
    %cst_119 = arith.constant 1.000000e+00 : f32
    %262 = vector.broadcast %cst_119 : f32 to vector<8x128xf32>
    %263 = arith.subf %262, %256 : vector<8x128xf32>
    %264 = arith.mulf %263, %261 : vector<8x128xf32>
    %265 = arith.mulf %256, %36 : vector<8x128xf32>
    %266 = arith.addf %264, %265 : vector<8x128xf32>
    %c0_120 = arith.constant 0 : index
    %c0_121 = arith.constant 0 : index
    %267 = vector.load %arg15[%c0_120, %c0_121] : memref<128x128xf32, #tpu.memory_space<vmem>>, vector<128x128xf32>
    %cst_122 = arith.constant dense<0.000000e+00> : vector<8x128xf32>
    %268 = tpu.matmul %266, %267, %cst_122 {dimension_numbers = #tpu.dot_dimension_numbers<[1], [0], [0], [1], [0, 0, 1, 1], [], []>} : vector<8x128xf32>, vector<128x128xf32>, vector<8x128xf32> -> vector<8x128xf32>
    %c0_123 = arith.constant 0 : index
    %c0_124 = arith.constant 0 : index
    %269 = vector.load %arg16[%c0_123, %c0_124] : memref<1x128xf32, #tpu.memory_space<vmem>>, vector<1x128xf32>
    %270 = vector.broadcast %269 : vector<1x128xf32> to vector<8x128xf32>
    %271 = arith.addf %268, %270 : vector<8x128xf32>
    %272 = math.tanh %271 : vector<8x128xf32>
    %c0_125 = arith.constant 0 : index
    %c0_126 = arith.constant 0 : index
    %273 = vector.load %arg17[%c0_125, %c0_126] : memref<128x128xf32, #tpu.memory_space<vmem>>, vector<128x128xf32>
    %cst_127 = arith.constant dense<0.000000e+00> : vector<8x128xf32>
    %274 = tpu.matmul %272, %273, %cst_127 {dimension_numbers = #tpu.dot_dimension_numbers<[1], [0], [0], [1], [0, 0, 1, 1], [], []>} : vector<8x128xf32>, vector<128x128xf32>, vector<8x128xf32> -> vector<8x128xf32>
    %c0_128 = arith.constant 0 : index
    %c0_129 = arith.constant 0 : index
    %275 = vector.load %arg18[%c0_128, %c0_129] : memref<1x128xf32, #tpu.memory_space<vmem>>, vector<1x128xf32>
    %276 = vector.broadcast %275 : vector<1x128xf32> to vector<8x128xf32>
    %277 = arith.addf %274, %276 : vector<8x128xf32>
    %cst_130 = arith.constant dense<0xFF800000> : vector<8xf32>
    %278 = vector.multi_reduction <maximumf>, %277, %cst_130 [1] : vector<8x128xf32> to vector<8xf32>
    %279 = vector.shape_cast %278 : vector<8xf32> to vector<8x1xf32>
    %280 = vector.broadcast %279 : vector<8x1xf32> to vector<8x128xf32>
    %281 = arith.subf %277, %280 : vector<8x128xf32>
    %282 = math.exp %281 : vector<8x128xf32>
    %cst_131 = arith.constant dense<0.000000e+00> : vector<8xf32>
    %283 = vector.multi_reduction <add>, %282, %cst_131 [1] : vector<8x128xf32> to vector<8xf32>
    %284 = vector.shape_cast %283 : vector<8xf32> to vector<8x1xf32>
    %285 = math.log %284 : vector<8x1xf32>
    %286 = arith.addf %285, %279 : vector<8x1xf32>
    %c0_132 = arith.constant 0 : index
    %c0_133 = arith.constant 0 : index
    %c0_134 = arith.constant 0 : index
    %287 = vector.load %arg2[%c0_132, %c0_133, %c0_134] : memref<1x8x1xi32, #tpu.memory_space<vmem>>, vector<1x8x1xi32>
    %288 = vector.shape_cast %287 : vector<1x8x1xi32> to vector<8x1xi32>
    %289 = tpu.iota {dimensions = array<i32: 1>} : vector<8x128xi32>
    %290 = vector.broadcast %288 : vector<8x1xi32> to vector<8x128xi32>
    %291 = arith.cmpi eq, %289, %290 : vector<8x128xi32>
    %cst_135 = arith.constant 0.000000e+00 : f32
    %292 = vector.broadcast %cst_135 : f32 to vector<8x128xf32>
    %293 = arith.select %291, %277, %292 : vector<8x128xi1>, vector<8x128xf32>
    %cst_136 = arith.constant dense<0.000000e+00> : vector<8xf32>
    %294 = vector.multi_reduction <add>, %293, %cst_136 [1] : vector<8x128xf32> to vector<8xf32>
    %295 = vector.shape_cast %294 : vector<8xf32> to vector<8x1xf32>
    %c0_i32_137 = arith.constant 0 : i32
    %296 = vector.broadcast %c0_i32_137 : i32 to vector<8x1xi32>
    %297 = arith.cmpi sgt, %288, %296 : vector<8x1xi32>
    %298 = arith.extui %297 : vector<8x1xi1> to vector<8x1xi32>
    %299 = arith.sitofp %298 : vector<8x1xi32> to vector<8x1xf32>
    %c0_138 = arith.constant 0 : index
    %c0_139 = arith.constant 0 : index
    %300 = vector.load %arg19[%c0_138, %c0_139] : memref<1x1xf32, #tpu.memory_space<vmem>>, vector<1x1xf32>
    %301 = arith.subf %286, %295 : vector<8x1xf32>
    %302 = arith.mulf %299, %301 : vector<8x1xf32>
    %303 = vector.shape_cast %302 : vector<8x1xf32> to vector<1x8x1xf32>
    %cst_140 = arith.constant dense<0.000000e+00> : vector<1xf32>
    %304 = vector.multi_reduction <add>, %303, %cst_140 [1, 2] : vector<1x8x1xf32> to vector<1xf32>
    %305 = vector.shape_cast %304 : vector<1xf32> to vector<1x1x1xf32>
    %306 = vector.extract %305[0, 0, 0] : f32 from vector<1x1x1xf32>
    %307 = vector.broadcast %306 : f32 to vector<1x1xf32>
    %308 = arith.addf %300, %307 : vector<1x1xf32>
    %c0_141 = arith.constant 0 : index
    %c0_142 = arith.constant 0 : index
    %309 = vector.load %arg19[%c0_141, %c0_142] : memref<1x1xf32, #tpu.memory_space<vmem>>, vector<1x1xf32>
    tpu.vector_store %arg19[%c0_141, %c0_142], %308 {strides = array<i32>} : memref<1x1xf32, #tpu.memory_space<vmem>>, vector<1x1xf32>,
    %c0_143 = arith.constant 0 : index
    %c0_144 = arith.constant 0 : index
    %310 = vector.load %arg20[%c0_143, %c0_144] : memref<8x128xf32, #tpu.memory_space<vmem>>, vector<8x128xf32>
    tpu.vector_store %arg20[%c0_143, %c0_144], %266 {strides = array<i32>} : memref<8x128xf32, #tpu.memory_space<vmem>>, vector<8x128xf32>,
    return
  }
  func.func @transform_0(%arg0: i32) -> (i32, i32, i32) {
    %c0_i32 = arith.constant 0 : i32
    %c0_i32_0 = arith.constant 0 : i32
    %c0_i32_1 = arith.constant 0 : i32
    return %arg0, %c0_i32, %c0_i32_0 : i32, i32, i32
  }
  func.func @transform_1(%arg0: i32) -> (i32, i32, i32) {
    %c0_i32 = arith.constant 0 : i32
    %c0_i32_0 = arith.constant 0 : i32
    %c0_i32_1 = arith.constant 0 : i32
    return %arg0, %c0_i32, %c0_i32_0 : i32, i32, i32
  }
  func.func @transform_2(%arg0: i32) -> (i32, i32) {
    %c0_i32 = arith.constant 0 : i32
    %c0_i32_0 = arith.constant 0 : i32
    %c0_i32_1 = arith.constant 0 : i32
    return %c0_i32, %c0_i32_0 : i32, i32
  }
  func.func @transform_3(%arg0: i32) -> (i32, i32, i32) {
    %c0_i32 = arith.constant 0 : i32
    %c0_i32_0 = arith.constant 0 : i32
    %c0_i32_1 = arith.constant 0 : i32
    %c0_i32_2 = arith.constant 0 : i32
    return %c0_i32, %c0_i32_0, %c0_i32_1 : i32, i32, i32
  }
  func.func @transform_4(%arg0: i32) -> (i32, i32, i32) {
    %c0_i32 = arith.constant 0 : i32
    %c0_i32_0 = arith.constant 0 : i32
    %c0_i32_1 = arith.constant 0 : i32
    %c0_i32_2 = arith.constant 0 : i32
    return %c0_i32, %c0_i32_0, %c0_i32_1 : i32, i32, i32
  }
  func.func @transform_5(%arg0: i32) -> (i32, i32, i32) {
    %c0_i32 = arith.constant 0 : i32
    %c0_i32_0 = arith.constant 0 : i32
    %c0_i32_1 = arith.constant 0 : i32
    %c0_i32_2 = arith.constant 0 : i32
    return %c0_i32, %c0_i32_0, %c0_i32_1 : i32, i32, i32
  }
  func.func @transform_6(%arg0: i32) -> (i32, i32) {
    %c0_i32 = arith.constant 0 : i32
    %c0_i32_0 = arith.constant 0 : i32
    %c0_i32_1 = arith.constant 0 : i32
    return %c0_i32, %c0_i32_0 : i32, i32
  }
  func.func @transform_7(%arg0: i32) -> (i32, i32) {
    %c0_i32 = arith.constant 0 : i32
    %c0_i32_0 = arith.constant 0 : i32
    %c0_i32_1 = arith.constant 0 : i32
    return %c0_i32, %c0_i32_0 : i32, i32
  }
  func.func @transform_8(%arg0: i32) -> (i32, i32) {
    %c0_i32 = arith.constant 0 : i32
    %c0_i32_0 = arith.constant 0 : i32
    %c0_i32_1 = arith.constant 0 : i32
    return %c0_i32, %c0_i32_0 : i32, i32
  }
  func.func @transform_9(%arg0: i32) -> (i32, i32) {
    %c0_i32 = arith.constant 0 : i32
    %c0_i32_0 = arith.constant 0 : i32
    %c0_i32_1 = arith.constant 0 : i32
    return %c0_i32, %c0_i32_0 : i32, i32
  }
  func.func @transform_10(%arg0: i32) -> (i32, i32) {
    %c0_i32 = arith.constant 0 : i32
    %c0_i32_0 = arith.constant 0 : i32
    %c0_i32_1 = arith.constant 0 : i32
    return %c0_i32, %c0_i32_0 : i32, i32
  }
  func.func @transform_11(%arg0: i32) -> (i32, i32) {
    %c0_i32 = arith.constant 0 : i32
    %c0_i32_0 = arith.constant 0 : i32
    %c0_i32_1 = arith.constant 0 : i32
    return %c0_i32, %c0_i32_0 : i32, i32
  }
  func.func @transform_12(%arg0: i32) -> (i32, i32) {
    %c0_i32 = arith.constant 0 : i32
    %c0_i32_0 = arith.constant 0 : i32
    %c0_i32_1 = arith.constant 0 : i32
    return %c0_i32, %c0_i32_0 : i32, i32
  }
  func.func @transform_13(%arg0: i32) -> (i32, i32) {
    %c0_i32 = arith.constant 0 : i32
    %c0_i32_0 = arith.constant 0 : i32
    %c0_i32_1 = arith.constant 0 : i32
    return %c0_i32, %c0_i32_0 : i32, i32
  }
  func.func @transform_14(%arg0: i32) -> (i32, i32) {
    %c0_i32 = arith.constant 0 : i32
    %c0_i32_0 = arith.constant 0 : i32
    %c0_i32_1 = arith.constant 0 : i32
    return %c0_i32, %c0_i32_0 : i32, i32
  }
  func.func @transform_15(%arg0: i32) -> (i32, i32) {
    %c0_i32 = arith.constant 0 : i32
    %c0_i32_0 = arith.constant 0 : i32
    %c0_i32_1 = arith.constant 0 : i32
    return %c0_i32, %c0_i32_0 : i32, i32
  }
  func.func @transform_16(%arg0: i32) -> (i32, i32) {
    %c0_i32 = arith.constant 0 : i32
    %c0_i32_0 = arith.constant 0 : i32
    %c0_i32_1 = arith.constant 0 : i32
    return %c0_i32, %c0_i32_0 : i32, i32
  }
  func.func @transform_17(%arg0: i32) -> (i32, i32) {
    %c0_i32 = arith.constant 0 : i32
    %c0_i32_0 = arith.constant 0 : i32
    %c0_i32_1 = arith.constant 0 : i32
    return %c0_i32, %c0_i32_0 : i32, i32
  }
  func.func @transform_18(%arg0: i32) -> (i32, i32) {
    %c0_i32 = arith.constant 0 : i32
    %c0_i32_0 = arith.constant 0 : i32
    %c0_i32_1 = arith.constant 0 : i32
    return %c0_i32, %c0_i32_0 : i32, i32
  }
}

</mosaic_0001>

<llo_original>
// kernel: _nmt_forward.12
$region0: #{_nmt_forward.12}
  #allocation0 [shape = 'u32[]', space=smem, size = 0x4, offset = 0x4, fixed_abs, tag = 'smem constant byte address 0x4 - core index']
  #allocation1 [shape = 'u32[144,128]{1,0:T(1,128)}', space=vmem, size = 0x12000, scoped, tag = 'internal scratch']
  %s0 = inlined_call_operand.vmem [shape: f32[8,256], index: 0, kind: input, shape index: {}]
  %s1 = inlined_call_operand.vmem [shape: f32[256,128], index: 1, kind: input, shape index: {}]
  %s2 = inlined_call_operand.vmem [shape: f32[1,128], index: 2, kind: input, shape index: {}]
  %s3 = inlined_call_operand.vmem [shape: f32[8,128], index: 3, kind: output, shape index: {}]
  %s4 = sld [smem:[#allocation0]]
  $region22: #{_nmt_forward.12} parent=0
    _
  %s6 = ssub.s32 1, %s4
  %s7 = scalar_select 0, %s6, %s4
  // Predicated region
  $region2: #{_nmt_forward.12} parent=0 // pred_check
    _
  $region3: #{_nmt_forward.12} parent=0 // pred_check_branch
    %9 = sbr.rel (0) target = $region5
  $region4: #{_nmt_forward.12} parent=0 // pred_region
    _
  $region5: #{_nmt_forward.12} parent=0 // pred_fallthru
    _
  // Predicated region
  $region6: #{_nmt_forward.12} parent=0 // pred_check
    _
  $region7: #{_nmt_forward.12} parent=0 // pred_check_branch
    %11 = sbr.rel (0) target = $region9
  $region8: #{_nmt_forward.12} parent=0 // pred_region
    _
  $region9: #{_nmt_forward.12} parent=0 // pred_fallthru
    _
  // Predicated region
  $region10: #{_nmt_forward.12} parent=0 // pred_check
    _
  $region11: #{_nmt_forward.12} parent=0 // pred_check_branch
    %13 = sbr.rel (0) target = $region13
  $region12: #{_nmt_forward.12} parent=0 // pred_region
    _
  $region13: #{_nmt_forward.12} parent=0 // pred_fallthru
    _
  %v14 = vld [vmem:[%s0] sm:$0xff]
  %v15 = vld [vmem:[%s0 + $0x8] sm:$0xff]
  %v16 = vld [vmem:[%s1] sm:$0xff]
  %v17 = vld [vmem:[%s1 + $0x8] sm:$0xff]
  %v18 = vld [vmem:[%s1 + $0x10] sm:$0xff]
  %v19 = vld [vmem:[%s1 + $0x18] sm:$0xff]
  %v20 = vld [vmem:[%s1 + $0x20] sm:$0xff]
  %v21 = vld [vmem:[%s1 + $0x28] sm:$0xff]
  %v22 = vld [vmem:[%s1 + $0x30] sm:$0xff]
  %v23 = vld [vmem:[%s1 + $0x38] sm:$0xff]
  %v24 = vld [vmem:[%s1 + $0x40] sm:$0xff]
  %v25 = vld [vmem:[%s1 + $0x48] sm:$0xff]
  %v26 = vld [vmem:[%s1 + $0x50] sm:$0xff]
  %v27 = vld [vmem:[%s1 + $0x58] sm:$0xff]
  %v28 = vld [vmem:[%s1 + $0x60] sm:$0xff]
  %v29 = vld [vmem:[%s1 + $0x68] sm:$0xff]
  %v30 = vld [vmem:[%s1 + $0x70] sm:$0xff]
  %v31 = vld [vmem:[%s1 + $0x78] sm:$0xff]
  %v32 = vld [vmem:[%s1 + $0x80] sm:$0xff]
  %v33 = vld [vmem:[%s1 + $0x88] sm:$0xff]
  %v34 = vld [vmem:[%s1 + $0x90] sm:$0xff]
  %v35 = vld [vmem:[%s1 + $0x98] sm:$0xff]
  %v36 = vld [vmem:[%s1 + $0xa0] sm:$0xff]
  %v37 = vld [vmem:[%s1 + $0xa8] sm:$0xff]
  %v38 = vld [vmem:[%s1 + $0xb0] sm:$0xff]
  %v39 = vld [vmem:[%s1 + $0xb8] sm:$0xff]
  %v40 = vld [vmem:[%s1 + $0xc0] sm:$0xff]
  %v41 = vld [vmem:[%s1 + $0xc8] sm:$0xff]
  %v42 = vld [vmem:[%s1 + $0xd0] sm:$0xff]
  %v43 = vld [vmem:[%s1 + $0xd8] sm:$0xff]
  %v44 = vld [vmem:[%s1 + $0xe0] sm:$0xff]
  %v45 = vld [vmem:[%s1 + $0xe8] sm:$0xff]
  %v46 = vld [vmem:[%s1 + $0xf0] sm:$0xff]
  %v47 = vld [vmem:[%s1 + $0xf8] sm:$0xff]
  %v48 = vld [vmem:[%s2] sm:$0x1]
  %v50 = vlaneseq
  %v51 = vshrl.u32 %v50, 7
  %v52 = vsub.s32 0, %v51
  %v53 = vrot.slane %v48, %v52
  %55 = vmatprep.subr.mxu0 0.0
  %56 = vmatpush1.msra.mxu0 %v16
  %57 = vmatprep.subr.mxu0 0.0
  %58 = vmatpush1.msra.mxu0 %v17
  %59 = vmatprep.subr.mxu0 0.0
  %60 = vmatpush1.msra.mxu0 %v18
  %61 = vmatprep.subr.mxu0 0.0
  %62 = vmatpush1.msra.mxu0 %v19
  %63 = vmatprep.subr.mxu0 0.0
  %64 = vmatpush1.msra.mxu0 %v20
  %65 = vmatprep.subr.mxu0 0.0
  %66 = vmatpush1.msra.mxu0 %v21
  %67 = vmatprep.subr.mxu0 0.0
  %68 = vmatpush1.msra.mxu0 %v22
  %69 = vmatprep.subr.mxu0 0.0
  %70 = vmatpush1.msra.mxu0 %v23
  %71 = vmatprep.subr.mxu0 0.0
  %72 = vmatpush1.msra.mxu0 %v24
  %73 = vmatprep.subr.mxu0 0.0
  %74 = vmatpush1.msra.mxu0 %v25
  %75 = vmatprep.subr.mxu0 0.0
  %76 = vmatpush1.msra.mxu0 %v26
  %77 = vmatprep.subr.mxu0 0.0
  %78 = vmatpush1.msra.mxu0 %v27
  %79 = vmatprep.subr.mxu0 0.0
  %80 = vmatpush1.msra.mxu0 %v28
  %81 = vmatprep.subr.mxu0 0.0
  %82 = vmatpush1.msra.mxu0 %v29
  %83 = vmatprep.subr.mxu0 0.0
  %84 = vmatpush1.msra.mxu0 %v30
  %85 = vmatprep.subr.mxu0 0.0
  %86 = vmatpush1.msra.mxu0 %v31
  %87 = vmatprep.subr.mxu0 0.0
  %88 = vmatpush1.msra.mxu0 %v32
  %89 = vmatprep.subr.mxu0 0.0
  %90 = vmatpush1.msra.mxu0 %v33
  %91 = vmatprep.subr.mxu0 0.0
  %92 = vmatpush1.msra.mxu0 %v34
  %93 = vmatprep.subr.mxu0 0.0
  %94 = vmatpush1.msra.mxu0 %v35
  %95 = vmatprep.subr.mxu0 0.0
  %96 = vmatpush1.msra.mxu0 %v36
  %97 = vmatprep.subr.mxu0 0.0
  %98 = vmatpush1.msra.mxu0 %v37
  %99 = vmatprep.subr.mxu0 0.0
  %100 = vmatpush1.msra.mxu0 %v38
  %101 = vmatprep.subr.mxu0 0.0
  %102 = vmatpush1.msra.mxu0 %v39
  %103 = vmatprep.subr.mxu0 0.0
  %104 = vmatpush1.msra.mxu0 %v40
  %105 = vmatprep.subr.mxu0 0.0
  %106 = vmatpush1.msra.mxu0 %v41
  %107 = vmatprep.subr.mxu0 0.0
  %108 = vmatpush1.msra.mxu0 %v42
  %109 = vmatprep.subr.mxu0 0.0
  %110 = vmatpush1.msra.mxu0 %v43
  %111 = vmatprep.subr.mxu0 0.0
  %112 = vmatpush1.msra.mxu0 %v44
  %113 = vmatprep.subr.mxu0 0.0
  %114 = vmatpush1.msra.mxu0 %v45
  %115 = vmatprep.subr.mxu0 0.0
  %116 = vmatpush1.msra.mxu0 %v46
  %117 = vmatprep.subr.mxu0 0.0
  %118 = vmatpush1.msra.mxu0 %v47
  %119 = vmatprep.mubr.f32.mxu0 %v15
  %120 = vmatmul.mubr.f32.gmra.mrb[0].mxu0 %v14
  %v121 = vpop.f32.mrb[0].mxu0
  %v122 = vadd.f32 %v53, %v121
  %v123 = vpop.f32.mrb[0].mxu0
  %124 = vdwg.mxu0
  %v125 = vtanh.pop %v122
  %126 = vst [vmem:[%s3] sm:$0xff] %v125
  // Predicated region
  $region14: #{_nmt_forward.12} parent=0 // pred_check
    _
  $region15: #{_nmt_forward.12} parent=0 // pred_check_branch
    %128 = sbr.rel (0) target = $region17
  $region16: #{_nmt_forward.12} parent=0 // pred_region
    _
  $region17: #{_nmt_forward.12} parent=0 // pred_fallthru
    _
  // Predicated region
  $region18: #{_nmt_forward.12} parent=0 // pred_check
    _
  $region19: #{_nmt_forward.12} parent=0 // pred_check_branch
    %130 = sbr.rel (0) target = $region21
  $region20: #{_nmt_forward.12} parent=0 // pred_region
    _
  $region21: #{_nmt_forward.12} parent=0 // pred_fallthru
    _

// kernel: _nmt_forward.11
$region0: #{_nmt_forward.11}
  #allocation0 [shape = 'u32[]', space=smem, size = 0x4, offset = 0x4, fixed_abs, tag = 'smem constant byte address 0x4 - core index']
  #allocation1 [shape = 'u32[144,128]{1,0:T(1,128)}', space=vmem, size = 0x12000, scoped, tag = 'internal scratch']
  #allocation2 [shape = 'f32[8,128]{1,0:T(8,128)}', space=vmem, size = 0x1000, scoped, tag = 'scratch operand']
  %s0 = inlined_call_operand.vmem [shape: f32[8,8,384], index: 0, kind: input, shape index: {}]
  %s1 = inlined_call_operand.vmem [shape: f32[8,8,1], index: 1, kind: input, shape index: {}]
  %s2 = inlined_call_operand.vmem [shape: f32[128,384], index: 2, kind: input, shape index: {}]
  %s3 = inlined_call_operand.vmem [shape: f32[1,384], index: 3, kind: input, shape index: {}]
  %s4 = inlined_call_operand.vmem [shape: f32[8,8,128], index: 4, kind: output, shape index: {}]
  %s5 = sld [smem:[#allocation0]]
  $region53: #{_nmt_forward.11} parent=0
    _
  %s7 = ssub.s32 1, %s5
  %s8 = scalar_select 0, %s7, %s5
  loop: start=0, step=1, limit=10
  $region2: #{_nmt_forward.11} parent=0 // loop_pre_header
    _
  $region3: #{_nmt_forward.11} parent=0 // loop_header
    %s10 = sphi 0, %s14
    %p11 = scmp.ge.s32.totalorder %s10, 10
    %s22 = sphi 0, %s24
    %s25 = sphi 0, %s22
    %s26 = sphi 0, %s25
    %s42 = sphi 0, %s26
    %s50 = sphi 0, %s52
    %s53 = sphi 0, %s50
    %s54 = sphi 0, %s53
    %s70 = sphi 0, %s54
    %s74 = sphi 0, %s74
    %s76 = sphi 0, %s74
    %s77 = sphi 0, %s76
    %s91 = sphi 0, %s77
    %s95 = sphi 0, %s95
    %s97 = sphi 0, %s95
    %s98 = sphi 0, %s97
    %s112 = sphi 0, %s98
    %s120 = sphi 0, %s122
    %s123 = sphi 0, %s120
    %s124 = sphi 0, %s123
    %s140 = sphi 0, %s124
  $region4: #{_nmt_forward.11} parent=0 // loop_header_branch
    %13 = sbr.rel (%p11) target = $region8
  $region5: #{_nmt_forward.11} parent=0 // loop_body
    %s15 = ssub.s32 %s10, 1
    %s16 = ssub.s32 %s10, 2
    %s17 = sadd.s32 %s10, 1
    %s18 = ssub.s32 7, %s10
    %s19 = ssub.s32 7, %s17
    %s20 = ssub.s32 %s18, %s19
    %p21 = scmp.eq.s32.totalorder %s20, 0
    %s23 = sadd.s32 %s22, 1
    %s24 = scalar_select %p21, %s22, %s23
    %p27 = pneg %p21
    %p28 = scmp.eq.s32.totalorder %s10, 7
    %p29 = por %p27, %p28
    %p30 = scmp.ne.s32.totalorder %s22, %s25
    %p31 = scmp.eq.s32.totalorder %s10, 0
    %p32 = por %p30, %p31
    %p33 = scmp.ne.s32.totalorder %s22, %s25
    %p34 = scmp.eq.s32.totalorder %s15, 7
    %p35 = por %p33, %p34
    %p36 = scmp.ne.s32.totalorder %s25, %s26
    %p37 = scmp.eq.s32.totalorder %s15, 0
    %p38 = por %p36, %p37
    %p39 = scmp.ne.s32.totalorder %s25, %s26
    %p40 = scmp.eq.s32.totalorder %s16, 7
    %p41 = por %p39, %p40
    %p43 = scmp.ne.s32.totalorder %s26, %s42
    %p44 = scmp.eq.s32.totalorder %s16, 0
    %p45 = por %p43, %p44
    %s46 = ssub.s32 7, %s10
    %s47 = ssub.s32 7, %s17
    %s48 = ssub.s32 %s46, %s47
    %p49 = scmp.eq.s32.totalorder %s48, 0
    %s51 = sadd.s32 %s50, 1
    %s52 = scalar_select %p49, %s50, %s51
    %p55 = pneg %p49
    %p56 = scmp.eq.s32.totalorder %s10, 7
    %p57 = por %p55, %p56
    %p58 = scmp.ne.s32.totalorder %s50, %s53
    %p59 = scmp.eq.s32.totalorder %s10, 0
    %p60 = por %p58, %p59
    %p61 = scmp.ne.s32.totalorder %s50, %s53
    %p62 = scmp.eq.s32.totalorder %s15, 7
    %p63 = por %p61, %p62
    %p64 = scmp.ne.s32.totalorder %s53, %s54
    %p65 = scmp.eq.s32.totalorder %s15, 0
    %p66 = por %p64, %p65
    %p67 = scmp.ne.s32.totalorder %s53, %s54
    %p68 = scmp.eq.s32.totalorder %s16, 7
    %p69 = por %p67, %p68
    %p71 = scmp.ne.s32.totalorder %s54, %s70
    %p72 = scmp.eq.s32.totalorder %s16, 0
    %p73 = por %p71, %p72
    %s75 = sadd.s32 %s74, 1
    %p78 = scmp.eq.s32.totalorder %s10, 7
    %p79 = scmp.ne.s32.totalorder %s74, %s76
    %p80 = scmp.eq.s32.totalorder %s10, 0
    %p81 = por %p79, %p80
    %p82 = scmp.ne.s32.totalorder %s74, %s76
    %p83 = scmp.eq.s32.totalorder %s15, 7
    %p84 = por %p82, %p83
    %p85 = scmp.ne.s32.totalorder %s76, %s77
    %p86 = scmp.eq.s32.totalorder %s15, 0
    %p87 = por %p85, %p86
    %p88 = scmp.ne.s32.totalorder %s76, %s77
    %p89 = scmp.eq.s32.totalorder %s16, 7
    %p90 = por %p88, %p89
    %p92 = scmp.ne.s32.totalorder %s77, %s91
    %p93 = scmp.eq.s32.totalorder %s16, 0
    %p94 = por %p92, %p93
    %s96 = sadd.s32 %s95, 1
    %p99 = scmp.eq.s32.totalorder %s10, 7
    %p100 = scmp.ne.s32.totalorder %s95, %s97
    %p101 = scmp.eq.s32.totalorder %s10, 0
    %p102 = por %p100, %p101
    %p103 = scmp.ne.s32.totalorder %s95, %s97
    %p104 = scmp.eq.s32.totalorder %s15, 7
    %p105 = por %p103, %p104
    %p106 = scmp.ne.s32.totalorder %s97, %s98
    %p107 = scmp.eq.s32.totalorder %s15, 0
    %p108 = por %p106, %p107
    %p109 = scmp.ne.s32.totalorder %s97, %s98
    %p110 = scmp.eq.s32.totalorder %s16, 7
    %p111 = por %p109, %p110
    %p113 = scmp.ne.s32.totalorder %s98, %s112
    %p114 = scmp.eq.s32.totalorder %s16, 0
    %p115 = por %p113, %p114
    %s116 = ssub.s32 7, %s10
    %s117 = ssub.s32 7, %s17
    %s118 = ssub.s32 %s116, %s117
    %p119 = scmp.eq.s32.totalorder %s118, 0
    %s121 = sadd.s32 %s120, 1
    %s122 = scalar_select %p119, %s120, %s121
    %p125 = pneg %p119
    %p126 = scmp.eq.s32.totalorder %s10, 7
    %p127 = por %p125, %p126
    %p128 = scmp.ne.s32.totalorder %s120, %s123
    %p129 = scmp.eq.s32.totalorder %s10, 0
    %p130 = por %p128, %p129
    %p131 = scmp.ne.s32.totalorder %s120, %s123
    %p132 = scmp.eq.s32.totalorder %s15, 7
    %p133 = por %p131, %p132
    %p134 = scmp.ne.s32.totalorder %s123, %s124
    %p135 = scmp.eq.s32.totalorder %s15, 0
    %p136 = por %p134, %p135
    %p137 = scmp.ne.s32.totalorder %s123, %s124
    %p138 = scmp.eq.s32.totalorder %s16, 7
    %p139 = por %p137, %p138
    %p141 = scmp.ne.s32.totalorder %s124, %s140
    %p142 = scmp.eq.s32.totalorder %s16, 0
    %p143 = por %p141, %p142
    %p144 = scmp.le.s32.totalorder 1, %s10
    %p145 = scmp.lt.s32.totalorder %s10, 9
    %p146 = pnand %p144, %p145
    %p147 = pneg %p146
    // Predicated region
    $region9: #{_nmt_forward.11} parent=5 // pred_check
      _
    $region10: #{_nmt_forward.11} parent=5 // pred_check_branch
      %149 = sbr.rel (%p146) target = $region12
    $region11: #{_nmt_forward.11} parent=5 // pred_region
      %s150 = ssub.s32 %s10, 1
      // Predicated region
      $region13: #{_nmt_forward.11} parent=11 // pred_check
        %p151 = pneg %p87
      $region14: #{_nmt_forward.11} parent=11 // pred_check_branch
        %153 = sbr.rel (%p151) target = $region16
      $region15: #{_nmt_forward.11} parent=11 // pred_region
        _
      $region16: #{_nmt_forward.11} parent=11 // pred_fallthru
        _
      // Predicated region
      $region17: #{_nmt_forward.11} parent=11 // pred_check
        %p154 = pneg %p108
      $region18: #{_nmt_forward.11} parent=11 // pred_check_branch
        %156 = sbr.rel (%p154) target = $region20
      $region19: #{_nmt_forward.11} parent=11 // pred_region
        _
      $region20: #{_nmt_forward.11} parent=11 // pred_fallthru
        _
    $region12: #{_nmt_forward.11} parent=5 // pred_fallthru
      _
    %p157 = scmp.lt.s32.totalorder %s10, 8
    // Predicated region
    $region21: #{_nmt_forward.11} parent=5 // pred_check
      %p158 = pneg %p157
    $region22: #{_nmt_forward.11} parent=5 // pred_check_branch
      %160 = sbr.rel (%p158) target = $region24
    $region23: #{_nmt_forward.11} parent=5 // pred_region
      // Predicated region
      $region25: #{_nmt_forward.11} parent=23 // pred_check
        %p161 = pneg %p32
      $region26: #{_nmt_forward.11} parent=23 // pred_check_branch
        %163 = sbr.rel (%p161) target = $region28
      $region27: #{_nmt_forward.11} parent=23 // pred_region
        %s164 = ssub.s32 7, %s10
        %p165 = scmp.lt.s32.totalorder %s164, 7
        %s166 = scalar_select %p165, %s164, 7
        %s167 = smul.addr %s166, 3
        %s168 = smul.addr %s167, 8
        %s169 = scalar_lea.vmem %s0, %s168
        %s170 = ssub.s32 7, %s10
      $region28: #{_nmt_forward.11} parent=23 // pred_fallthru
        _
      // Predicated region
      $region29: #{_nmt_forward.11} parent=23 // pred_check
        %p171 = pneg %p60
      $region30: #{_nmt_forward.11} parent=23 // pred_check_branch
        %173 = sbr.rel (%p171) target = $region32
      $region31: #{_nmt_forward.11} parent=23 // pred_region
        %s174 = ssub.s32 7, %s10
        %p175 = scmp.lt.s32.totalorder %s174, 7
        %s176 = scalar_select %p175, %s174, 7
        %s177 = smul.addr %s176, 8
        %s178 = scalar_lea.vmem %s1, %s177
        %s179 = ssub.s32 7, %s10
      $region32: #{_nmt_forward.11} parent=23 // pred_fallthru
        _
    $region24: #{_nmt_forward.11} parent=5 // pred_fallthru
      _
    %p180 = scmp.le.s32.totalorder 1, %s10
    %p181 = scmp.lt.s32.totalorder %s10, 9
    %p182 = pnand %p180, %p181
    %p183 = pneg %p182
    // Predicated region
    $region33: #{_nmt_forward.11} parent=5 // pred_check
      _
    $region34: #{_nmt_forward.11} parent=5 // pred_check_branch
      %185 = sbr.rel (%p182) target = $region36
    $region35: #{_nmt_forward.11} parent=5 // pred_region
      %s186 = ssub.s32 %s10, 1
      %s187 = ssub.s32 7, %s15
      %p188 = scmp.lt.s32.totalorder %s187, 7
      %s189 = scalar_select %p188, %s187, 7
      %s190 = smul.addr %s189, 3
      %s191 = smul.addr %s190, 8
      %s192 = scalar_lea.vmem %s0, %s191
      %p193 = pneg %p38
      %p194 = pneg %p35
      %s195 = ssub.s32 7, %s15
      %p196 = scmp.lt.s32.totalorder %s195, 7
      %s197 = scalar_select %p196, %s195, 7
      %s198 = smul.addr %s197, 8
      %s199 = scalar_lea.vmem %s1, %s198
      %p200 = pneg %p66
      %p201 = pneg %p63
      %p202 = pneg %p87
      %p203 = pneg %p84
      %p204 = pneg %p108
      %p205 = pneg %p105
      %p206 = pneg %p136
      %p207 = pneg %p133
      %s208 = ssub.s32 7, %s15
      %p209 = scmp.lt.s32.totalorder %s208, 7
      %s210 = scalar_select %p209, %s208, 7
      %s211 = smul.addr %s210, 8
      %s212 = scalar_lea.vmem %s4, %s211
      %s213 = ssub.s32 7, %s15
      %p214 = scmp.lt.s32.totalorder %s213, 7
      %s215 = scalar_select %p214, %s213, 7
      %s216 = smul.addr %s215, 3
      %s217 = smul.addr %s216, 8
      %s218 = scalar_lea.vmem %s0, %s217
      %s219 = ssub.s32 7, %s15
      %s220 = ssub.s32 7, %s15
      %p221 = scmp.lt.s32.totalorder %s220, 7
      %s222 = scalar_select %p221, %s220, 7
      %s223 = smul.addr %s222, 8
      %s224 = scalar_lea.vmem %s1, %s223
      %s225 = ssub.s32 7, %s15
      %s226 = ssub.s32 7, %s15
      %p227 = scmp.lt.s32.totalorder %s226, 7
      %s228 = scalar_select %p227, %s226, 7
      %s229 = smul.addr %s228, 8
      %s230 = scalar_lea.vmem %s4, %s229
      %s231 = ssub.s32 7, %s15
      %p232 = scmp.eq.s32.totalorder %s15, 0
      // Predicated region
      $region37: #{_nmt_forward.11} parent=35 // pred_check
        %p233 = pneg %p232
      $region38: #{_nmt_forward.11} parent=35 // pred_check_branch
        %235 = sbr.rel (%p233) target = $region40
      $region39: #{_nmt_forward.11} parent=35 // pred_region
        %236 = vst [vmem:[#allocation2] sm:$0xff] 0.0
      $region40: #{_nmt_forward.11} parent=35 // pred_fallthru
        _
      %v237 = vld [vmem:[#allocation2] sm:$0xff]
      %v238 = vld [vmem:[%s218] sm:$0xff]
      %v239 = vld [vmem:[%s218 + $0x8] sm:$0xff]
      %v240 = vld [vmem:[%s218 + $0x10] sm:$0xff]
      %v241 = vld [vmem:[%s2] sm:$0xff]
      %v242 = vld [vmem:[%s2 + $0x8] sm:$0xff]
      %v243 = vld [vmem:[%s2 + $0x10] sm:$0xff]
      %v244 = vld [vmem:[%s2 + $0x18] sm:$0xff]
      %v245 = vld [vmem:[%s2 + $0x20] sm:$0xff]
      %v246 = vld [vmem:[%s2 + $0x28] sm:$0xff]
      %v247 = vld [vmem:[%s2 + $0x30] sm:$0xff]
      %v248 = vld [vmem:[%s2 + $0x38] sm:$0xff]
      %v249 = vld [vmem:[%s2 + $0x40] sm:$0xff]
      %v250 = vld [vmem:[%s2 + $0x48] sm:$0xff]
      %v251 = vld [vmem:[%s2 + $0x50] sm:$0xff]
      %v252 = vld [vmem:[%s2 + $0x58] sm:$0xff]
      %v253 = vld [vmem:[%s2 + $0x60] sm:$0xff]
      %v254 = vld [vmem:[%s2 + $0x68] sm:$0xff]
      %v255 = vld [vmem:[%s2 + $0x70] sm:$0xff]
      %v256 = vld [vmem:[%s2 + $0x78] sm:$0xff]
      %v257 = vld [vmem:[%s2 + $0x80] sm:$0xff]
      %v258 = vld [vmem:[%s2 + $0x88] sm:$0xff]
      %v259 = vld [vmem:[%s2 + $0x90] sm:$0xff]
      %v260 = vld [vmem:[%s2 + $0x98] sm:$0xff]
      %v261 = vld [vmem:[%s2 + $0xa0] sm:$0xff]
      %v262 = vld [vmem:[%s2 + $0xa8] sm:$0xff]
      %v263 = vld [vmem:[%s2 + $0xb0] sm:$0xff]
      %v264 = vld [vmem:[%s2 + $0xb8] sm:$0xff]
      %v265 = vld [vmem:[%s2 + $0xc0] sm:$0xff]
      %v266 = vld [vmem:[%s2 + $0xc8] sm:$0xff]
      %v267 = vld [vmem:[%s2 + $0xd0] sm:$0xff]
      %v268 = vld [vmem:[%s2 + $0xd8] sm:$0xff]
      %v269 = vld [vmem:[%s2 + $0xe0] sm:$0xff]
      %v270 = vld [vmem:[%s2 + $0xe8] sm:$0xff]
      %v271 = vld [vmem:[%s2 + $0xf0] sm:$0xff]
      %v272 = vld [vmem:[%s2 + $0xf8] sm:$0xff]
      %v273 = vld [vmem:[%s2 + $0x100] sm:$0xff]
      %v274 = vld [vmem:[%s2 + $0x108] sm:$0xff]
      %v275 = vld [vmem:[%s2 + $0x110] sm:$0xff]
      %v276 = vld [vmem:[%s2 + $0x118] sm:$0xff]
      %v277 = vld [vmem:[%s2 + $0x120] sm:$0xff]
      %v278 = vld [vmem:[%s2 + $0x128] sm:$0xff]
      %v279 = vld [vmem:[%s2 + $0x130] sm:$0xff]
      %v280 = vld [vmem:[%s2 + $0x138] sm:$0xff]
      %v281 = vld [vmem:[%s2 + $0x140] sm:$0xff]
      %v282 = vld [vmem:[%s2 + $0x148] sm:$0xff]
      %v283 = vld [vmem:[%s2 + $0x150] sm:$0xff]
      %v284 = vld [vmem:[%s2 + $0x158] sm:$0xff]
      %v285 = vld [vmem:[%s2 + $0x160] sm:$0xff]
      %v286 = vld [vmem:[%s2 + $0x168] sm:$0xff]
      %v287 = vld [vmem:[%s2 + $0x170] sm:$0xff]
      %v288 = vld [vmem:[%s2 + $0x178] sm:$0xff]
      %v289 = vld [vmem:[%s3] sm:$0x7]
      %v291 = vlaneseq
      %v292 = vshrl.u32 %v291, 7
      %v293 = vsub.s32 0, %v292
      %v294 = vrot.slane %v289, %v293
      %v295 = vlaneseq
      %v296 = vshrl.u32 %v295, 7
      %v297 = vsub.s32 1, %v296
      %v298 = vrot.slane %v289, %v297
      %v299 = vlaneseq
      %v300 = vshrl.u32 %v299, 7
      %v301 = vsub.s32 2, %v300
      %v302 = vrot.slane %v289, %v301
      %306 = vmatprep.subr.mxu0 %v242
      %307 = vmatpush1.msra.mxu0 %v241
      %308 = vmatprep.subr.mxu0 %v245
      %309 = vmatpush1.msra.mxu0 %v244
      %310 = vmatprep.subr.mxu0 %v248
      %311 = vmatpush1.msra.mxu0 %v247
      %312 = vmatprep.subr.mxu0 %v251
      %313 = vmatpush1.msra.mxu0 %v250
      %314 = vmatprep.subr.mxu0 %v254
      %315 = vmatpush1.msra.mxu0 %v253
      %316 = vmatprep.subr.mxu0 %v257
      %317 = vmatpush1.msra.mxu0 %v256
      %318 = vmatprep.subr.mxu0 %v260
      %319 = vmatpush1.msra.mxu0 %v259
      %320 = vmatprep.subr.mxu0 %v263
      %321 = vmatpush1.msra.mxu0 %v262
      %322 = vmatprep.subr.mxu0 %v266
      %323 = vmatpush1.msra.mxu0 %v265
      %324 = vmatprep.subr.mxu0 %v269
      %325 = vmatpush1.msra.mxu0 %v268
      %326 = vmatprep.subr.mxu0 %v272
      %327 = vmatpush1.msra.mxu0 %v271
      %328 = vmatprep.subr.mxu0 %v275
      %329 = vmatpush1.msra.mxu0 %v274
      %330 = vmatprep.subr.mxu0 %v278
      %331 = vmatpush1.msra.mxu0 %v277
      %332 = vmatprep.subr.mxu0 %v281
      %333 = vmatpush1.msra.mxu0 %v280
      %334 = vmatprep.subr.mxu0 %v284
      %335 = vmatpush1.msra.mxu0 %v283
      %336 = vmatprep.subr.mxu0 %v287
      %337 = vmatpush1.msra.mxu0 %v286
      %338 = vmatprep.subr.mxu0 0.0
      %339 = vmatpush1.msra.mxu0 0.0
      %340 = vmatprep.subr.mxu0 0.0
      %341 = vmatpush1.msra.mxu0 0.0
      %342 = vmatprep.subr.mxu0 0.0
      %343 = vmatpush1.msra.mxu0 0.0
      %344 = vmatprep.subr.mxu0 0.0
      %345 = vmatpush1.msra.mxu0 0.0
      %346 = vmatprep.subr.mxu0 0.0
      %347 = vmatpush1.msra.mxu0 0.0
      %348 = vmatprep.subr.mxu0 0.0
      %349 = vmatpush1.msra.mxu0 0.0
      %350 = vmatprep.subr.mxu0 0.0
      %351 = vmatpush1.msra.mxu0 0.0
      %352 = vmatprep.subr.mxu0 0.0
      %353 = vmatpush1.msra.mxu0 0.0
      %354 = vmatprep.subr.mxu0 0.0
      %355 = vmatpush1.msra.mxu0 0.0
      %356 = vmatprep.subr.mxu0 0.0
      %357 = vmatpush1.msra.mxu0 0.0
      %358 = vmatprep.subr.mxu0 0.0
      %359 = vmatpush1.msra.mxu0 0.0
      %360 = vmatprep.subr.mxu0 0.0
      %361 = vmatpush1.msra.mxu0 0.0
      %362 = vmatprep.subr.mxu0 0.0
      %363 = vmatpush1.msra.mxu0 0.0
      %364 = vmatprep.subr.mxu0 0.0
      %365 = vmatpush1.msra.mxu0 0.0
      %366 = vmatprep.subr.mxu0 0.0
      %367 = vmatpush1.msra.mxu0 0.0
      %368 = vmatprep.subr.mxu0 0.0
      %369 = vmatpush1.msra.mxu0 0.0
      %370 = vmatprep.mubr.f32.mxu0 0.0
      %371 = vmatmul.mubr.f32.gmra.mrb[0].mxu0 %v237
      %v372 = vpop.f32.mrb[0].mxu0
      %v373 = vadd.f32 %v294, %v372
      %v374 = vpop.f32.mrb[0].mxu0
      %v375 = vadd.f32 %v298, %v374
      %376 = vdwg.mxu0
      %377 = vmatprep.subr.mxu0 0.0
      %378 = vmatpush1.msra.mxu0 %v243
      %379 = vmatprep.subr.mxu0 0.0
      %380 = vmatpush1.msra.mxu0 %v246
      %381 = vmatprep.subr.mxu0 0.0
      %382 = vmatpush1.msra.mxu0 %v249
      %383 = vmatprep.subr.mxu0 0.0
      %384 = vmatpush1.msra.mxu0 %v252
      %385 = vmatprep.subr.mxu0 0.0
      %386 = vmatpush1.msra.mxu0 %v255
      %387 = vmatprep.subr.mxu0 0.0
      %388 = vmatpush1.msra.mxu0 %v258
      %389 = vmatprep.subr.mxu0 0.0
      %390 = vmatpush1.msra.mxu0 %v261
      %391 = vmatprep.subr.mxu0 0.0
      %392 = vmatpush1.msra.mxu0 %v264
      %393 = vmatprep.subr.mxu0 0.0
      %394 = vmatpush1.msra.mxu0 %v267
      %395 = vmatprep.subr.mxu0 0.0
      %396 = vmatpush1.msra.mxu0 %v270
      %397 = vmatprep.subr.mxu0 0.0
      %398 = vmatpush1.msra.mxu0 %v273
      %399 = vmatprep.subr.mxu0 0.0
      %400 = vmatpush1.msra.mxu0 %v276
      %401 = vmatprep.subr.mxu0 0.0
      %402 = vmatpush1.msra.mxu0 %v279
      %403 = vmatprep.subr.mxu0 0.0
      %404 = vmatpush1.msra.mxu0 %v282
      %405 = vmatprep.subr.mxu0 0.0
      %406 = vmatpush1.msra.mxu0 %v285
      %407 = vmatprep.subr.mxu0 0.0
      %408 = vmatpush1.msra.mxu0 %v288
      %409 = vmatprep.subr.mxu0 0.0
      %410 = vmatpush1.msra.mxu0 0.0
      %411 = vmatprep.subr.mxu0 0.0
      %412 = vmatpush1.msra.mxu0 0.0
      %413 = vmatprep.subr.mxu0 0.0
      %414 = vmatpush1.msra.mxu0 0.0
      %415 = vmatprep.subr.mxu0 0.0
      %416 = vmatpush1.msra.mxu0 0.0
      %417 = vmatprep.subr.mxu0 0.0
      %418 = vmatpush1.msra.mxu0 0.0
      %419 = vmatprep.subr.mxu0 0.0
      %420 = vmatpush1.msra.mxu0 0.0
      %421 = vmatprep.subr.mxu0 0.0
      %422 = vmatpush1.msra.mxu0 0.0
      %423 = vmatprep.subr.mxu0 0.0
      %424 = vmatpush1.msra.mxu0 0.0
      %425 = vmatprep.subr.mxu0 0.0
      %426 = vmatpush1.msra.mxu0 0.0
      %427 = vmatprep.subr.mxu0 0.0
      %428 = vmatpush1.msra.mxu0 0.0
      %429 = vmatprep.subr.mxu0 0.0
      %430 = vmatpush1.msra.mxu0 0.0
      %431 = vmatprep.subr.mxu0 0.0
      %432 = vmatpush1.msra.mxu0 0.0
      %433 = vmatprep.subr.mxu0 0.0
      %434 = vmatpush1.msra.mxu0 0.0
      %435 = vmatprep.subr.mxu0 0.0
      %436 = vmatpush1.msra.mxu0 0.0
      %437 = vmatprep.subr.mxu0 0.0
      %438 = vmatpush1.msra.mxu0 0.0
      %439 = vmatprep.subr.mxu0 0.0
      %440 = vmatpush1.msra.mxu0 0.0
      %441 = vmatprep.mubr.f32.mxu0 0.0
      %442 = vmatmul.mubr.f32.gmra.mrb[0].mxu0 %v237
      %v443 = vpop.f32.mrb[0].mxu0
      %v444 = vadd.f32 %v302, %v443
      %v445 = vpop.f32.mrb[0].mxu0
      %446 = vdwg.mxu0
      %v447 = vadd.f32 %v238, %v373
      %v448 = vxor.u32 %v447, 2147483648
      %v449 = vmul.f32 %v448, 1.442695
      %v450 = vpow.pop %v449
      %v451 = vadd.f32 %v450, 1.0
      %v452 = vrcp.pop %v451
      %v453 = vmul.f32 1.0, %v452
      %v454 = vadd.f32 %v239, %v375
      %v455 = vxor.u32 %v454, 2147483648
      %v456 = vmul.f32 %v455, 1.442695
      %v457 = vpow.pop %v456
      %v458 = vadd.f32 %v457, 1.0
      %v459 = vrcp.pop %v458
      %v460 = vmul.f32 1.0, %v459
      %v461 = vmul.f32 %v453, %v444
      %v462 = vadd.f32 %v240, %v461
      %v463 = vtanh.pop %v462
      %v464 = vsub.f32 1.0, %v460
      %v465 = vmul.f32 %v464, %v463
      %v466 = vmul.f32 %v460, %v237
      %v467 = vadd.f32 %v465, %v466
      %v468 = vld [vmem:[%s224] sm:$0xff]
      %470 = vset.pattern.permute.xlu0 0
      %471 = vperm.xlu0 %470, %v468
      %v472 = vpop.permute.xlu0 %471
      %v474 = vmul.f32 %v472, %v467
      %475 = vst [vmem:[%s230] sm:$0xff] %v474
      %v476 = vsub.f32 1.0, %v468
      %478 = vset.pattern.permute.xlu0 0
      %479 = vperm.xlu0 %478, %v476
      %v480 = vpop.permute.xlu0 %479
      %v482 = vmul.f32 %v480, %v237
      %v483 = vadd.f32 %v474, %v482
      %484 = vst [vmem:[#allocation2] sm:$0xff] %v483
      %s485 = ssub.s32 7, %s15
      %p486 = scmp.lt.s32.totalorder %s485, 7
      %s487 = scalar_select %p486, %s485, 7
      %s488 = smul.addr %s487, 8
      %s489 = scalar_lea.vmem %s4, %s488
      // Predicated region
      $region41: #{_nmt_forward.11} parent=35 // pred_check
        %p490 = pneg %p133
      $region42: #{_nmt_forward.11} parent=35 // pred_check_branch
        %492 = sbr.rel (%p490) target = $region44
      $region43: #{_nmt_forward.11} parent=35 // pred_region
        %s493 = ssub.s32 7, %s15
      $region44: #{_nmt_forward.11} parent=35 // pred_fallthru
        _
    $region36: #{_nmt_forward.11} parent=5 // pred_fallthru
      _
    %p494 = scmp.le.s32.totalorder 2, %s10
    // Predicated region
    $region45: #{_nmt_forward.11} parent=5 // pred_check
      %p495 = pneg %p494
    $region46: #{_nmt_forward.11} parent=5 // pred_check_branch
      %497 = sbr.rel (%p495) target = $region48
    $region47: #{_nmt_forward.11} parent=5 // pred_region
      %s498 = ssub.s32 %s10, 2
      // Predicated region
      $region49: #{_nmt_forward.11} parent=47 // pred_check
        %p499 = pneg %p139
      $region50: #{_nmt_forward.11} parent=47 // pred_check_branch
        %501 = sbr.rel (%p499) target = $region52
      $region51: #{_nmt_forward.11} parent=47 // pred_region
        %s502 = ssub.s32 7, %s16
        %p503 = scmp.lt.s32.totalorder %s502, 7
        %s504 = scalar_select %p503, %s502, 7
        %s505 = smul.addr %s504, 8
        %s506 = scalar_lea.vmem %s4, %s505
      $region52: #{_nmt_forward.11} parent=47 // pred_fallthru
        _
    $region48: #{_nmt_forward.11} parent=5 // pred_fallthru
      _
  $region6: #{_nmt_forward.11} parent=0 // loop_footer
    %s14 = sadd.s32 1, %s10
  $region7: #{_nmt_forward.11} parent=0 // loop_footer_branch
    %9 = sbr.rel target = $region3
  $region8: #{_nmt_forward.11} parent=0 // loop_exit
    _

// kernel: _nmt_forward.10
$region0: #{_nmt_forward.10}
  #allocation0 [shape = 'u32[]', space=smem, size = 0x4, offset = 0x4, fixed_abs, tag = 'smem constant byte address 0x4 - core index']
  #allocation1 [shape = 'u32[144,128]{1,0:T(1,128)}', space=vmem, size = 0x12000, scoped, tag = 'internal scratch']
  #allocation2 [shape = 'f32[8,128]{1,0:T(8,128)}', space=vmem, size = 0x1000, scoped, tag = 'scratch operand']
  %s0 = inlined_call_operand.vmem [shape: f32[8,8,384], index: 0, kind: input, shape index: {}]
  %s1 = inlined_call_operand.vmem [shape: f32[8,8,1], index: 1, kind: input, shape index: {}]
  %s2 = inlined_call_operand.vmem [shape: f32[128,384], index: 2, kind: input, shape index: {}]
  %s3 = inlined_call_operand.vmem [shape: f32[1,384], index: 3, kind: input, shape index: {}]
  %s4 = inlined_call_operand.vmem [shape: f32[8,8,128], index: 4, kind: output, shape index: {}]
  %s5 = sld [smem:[#allocation0]]
  $region53: #{_nmt_forward.10} parent=0
    _
  %s7 = ssub.s32 1, %s5
  %s8 = scalar_select 0, %s7, %s5
  loop: start=0, step=1, limit=10
  $region2: #{_nmt_forward.10} parent=0 // loop_pre_header
    _
  $region3: #{_nmt_forward.10} parent=0 // loop_header
    %s10 = sphi 0, %s14
    %p11 = scmp.ge.s32.totalorder %s10, 10
    %s20 = sphi 0, %s22
    %s23 = sphi 0, %s20
    %s24 = sphi 0, %s23
    %s40 = sphi 0, %s24
    %s46 = sphi 0, %s48
    %s49 = sphi 0, %s46
    %s50 = sphi 0, %s49
    %s66 = sphi 0, %s50
    %s70 = sphi 0, %s70
    %s72 = sphi 0, %s70
    %s73 = sphi 0, %s72
    %s87 = sphi 0, %s73
    %s91 = sphi 0, %s91
    %s93 = sphi 0, %s91
    %s94 = sphi 0, %s93
    %s108 = sphi 0, %s94
    %s114 = sphi 0, %s116
    %s117 = sphi 0, %s114
    %s118 = sphi 0, %s117
    %s134 = sphi 0, %s118
  $region4: #{_nmt_forward.10} parent=0 // loop_header_branch
    %13 = sbr.rel (%p11) target = $region8
  $region5: #{_nmt_forward.10} parent=0 // loop_body
    %s15 = ssub.s32 %s10, 1
    %s16 = ssub.s32 %s10, 2
    %s17 = sadd.s32 %s10, 1
    %s18 = ssub.s32 %s10, %s17
    %p19 = scmp.eq.s32.totalorder %s18, 0
    %s21 = sadd.s32 %s20, 1
    %s22 = scalar_select %p19, %s20, %s21
    %p25 = pneg %p19
    %p26 = scmp.eq.s32.totalorder %s10, 7
    %p27 = por %p25, %p26
    %p28 = scmp.ne.s32.totalorder %s20, %s23
    %p29 = scmp.eq.s32.totalorder %s10, 0
    %p30 = por %p28, %p29
    %p31 = scmp.ne.s32.totalorder %s20, %s23
    %p32 = scmp.eq.s32.totalorder %s15, 7
    %p33 = por %p31, %p32
    %p34 = scmp.ne.s32.totalorder %s23, %s24
    %p35 = scmp.eq.s32.totalorder %s15, 0
    %p36 = por %p34, %p35
    %p37 = scmp.ne.s32.totalorder %s23, %s24
    %p38 = scmp.eq.s32.totalorder %s16, 7
    %p39 = por %p37, %p38
    %p41 = scmp.ne.s32.totalorder %s24, %s40
    %p42 = scmp.eq.s32.totalorder %s16, 0
    %p43 = por %p41, %p42
    %s44 = ssub.s32 %s10, %s17
    %p45 = scmp.eq.s32.totalorder %s44, 0
    %s47 = sadd.s32 %s46, 1
    %s48 = scalar_select %p45, %s46, %s47
    %p51 = pneg %p45
    %p52 = scmp.eq.s32.totalorder %s10, 7
    %p53 = por %p51, %p52
    %p54 = scmp.ne.s32.totalorder %s46, %s49
    %p55 = scmp.eq.s32.totalorder %s10, 0
    %p56 = por %p54, %p55
    %p57 = scmp.ne.s32.totalorder %s46, %s49
    %p58 = scmp.eq.s32.totalorder %s15, 7
    %p59 = por %p57, %p58
    %p60 = scmp.ne.s32.totalorder %s49, %s50
    %p61 = scmp.eq.s32.totalorder %s15, 0
    %p62 = por %p60, %p61
    %p63 = scmp.ne.s32.totalorder %s49, %s50
    %p64 = scmp.eq.s32.totalorder %s16, 7
    %p65 = por %p63, %p64
    %p67 = scmp.ne.s32.totalorder %s50, %s66
    %p68 = scmp.eq.s32.totalorder %s16, 0
    %p69 = por %p67, %p68
    %s71 = sadd.s32 %s70, 1
    %p74 = scmp.eq.s32.totalorder %s10, 7
    %p75 = scmp.ne.s32.totalorder %s70, %s72
    %p76 = scmp.eq.s32.totalorder %s10, 0
    %p77 = por %p75, %p76
    %p78 = scmp.ne.s32.totalorder %s70, %s72
    %p79 = scmp.eq.s32.totalorder %s15, 7
    %p80 = por %p78, %p79
    %p81 = scmp.ne.s32.totalorder %s72, %s73
    %p82 = scmp.eq.s32.totalorder %s15, 0
    %p83 = por %p81, %p82
    %p84 = scmp.ne.s32.totalorder %s72, %s73
    %p85 = scmp.eq.s32.totalorder %s16, 7
    %p86 = por %p84, %p85
    %p88 = scmp.ne.s32.totalorder %s73, %s87
    %p89 = scmp.eq.s32.totalorder %s16, 0
    %p90 = por %p88, %p89
    %s92 = sadd.s32 %s91, 1
    %p95 = scmp.eq.s32.totalorder %s10, 7
    %p96 = scmp.ne.s32.totalorder %s91, %s93
    %p97 = scmp.eq.s32.totalorder %s10, 0
    %p98 = por %p96, %p97
    %p99 = scmp.ne.s32.totalorder %s91, %s93
    %p100 = scmp.eq.s32.totalorder %s15, 7
    %p101 = por %p99, %p100
    %p102 = scmp.ne.s32.totalorder %s93, %s94
    %p103 = scmp.eq.s32.totalorder %s15, 0
    %p104 = por %p102, %p103
    %p105 = scmp.ne.s32.totalorder %s93, %s94
    %p106 = scmp.eq.s32.totalorder %s16, 7
    %p107 = por %p105, %p106
    %p109 = scmp.ne.s32.totalorder %s94, %s108
    %p110 = scmp.eq.s32.totalorder %s16, 0
    %p111 = por %p109, %p110
    %s112 = ssub.s32 %s10, %s17
    %p113 = scmp.eq.s32.totalorder %s112, 0
    %s115 = sadd.s32 %s114, 1
    %s116 = scalar_select %p113, %s114, %s115
    %p119 = pneg %p113
    %p120 = scmp.eq.s32.totalorder %s10, 7
    %p121 = por %p119, %p120
    %p122 = scmp.ne.s32.totalorder %s114, %s117
    %p123 = scmp.eq.s32.totalorder %s10, 0
    %p124 = por %p122, %p123
    %p125 = scmp.ne.s32.totalorder %s114, %s117
    %p126 = scmp.eq.s32.totalorder %s15, 7
    %p127 = por %p125, %p126
    %p128 = scmp.ne.s32.totalorder %s117, %s118
    %p129 = scmp.eq.s32.totalorder %s15, 0
    %p130 = por %p128, %p129
    %p131 = scmp.ne.s32.totalorder %s117, %s118
    %p132 = scmp.eq.s32.totalorder %s16, 7
    %p133 = por %p131, %p132
    %p135 = scmp.ne.s32.totalorder %s118, %s134
    %p136 = scmp.eq.s32.totalorder %s16, 0
    %p137 = por %p135, %p136
    %p138 = scmp.le.s32.totalorder 1, %s10
    %p139 = scmp.lt.s32.totalorder %s10, 9
    %p140 = pnand %p138, %p139
    %p141 = pneg %p140
    // Predicated region
    $region9: #{_nmt_forward.10} parent=5 // pred_check
      _
    $region10: #{_nmt_forward.10} parent=5 // pred_check_branch
      %143 = sbr.rel (%p140) target = $region12
    $region11: #{_nmt_forward.10} parent=5 // pred_region
      %s144 = ssub.s32 %s10, 1
      // Predicated region
      $region13: #{_nmt_forward.10} parent=11 // pred_check
        %p145 = pneg %p83
      $region14: #{_nmt_forward.10} parent=11 // pred_check_branch
        %147 = sbr.rel (%p145) target = $region16
      $region15: #{_nmt_forward.10} parent=11 // pred_region
        _
      $region16: #{_nmt_forward.10} parent=11 // pred_fallthru
        _
      // Predicated region
      $region17: #{_nmt_forward.10} parent=11 // pred_check
        %p148 = pneg %p104
      $region18: #{_nmt_forward.10} parent=11 // pred_check_branch
        %150 = sbr.rel (%p148) target = $region20
      $region19: #{_nmt_forward.10} parent=11 // pred_region
        _
      $region20: #{_nmt_forward.10} parent=11 // pred_fallthru
        _
    $region12: #{_nmt_forward.10} parent=5 // pred_fallthru
      _
    %p151 = scmp.lt.s32.totalorder %s10, 8
    // Predicated region
    $region21: #{_nmt_forward.10} parent=5 // pred_check
      %p152 = pneg %p151
    $region22: #{_nmt_forward.10} parent=5 // pred_check_branch
      %154 = sbr.rel (%p152) target = $region24
    $region23: #{_nmt_forward.10} parent=5 // pred_region
      // Predicated region
      $region25: #{_nmt_forward.10} parent=23 // pred_check
        %p155 = pneg %p30
      $region26: #{_nmt_forward.10} parent=23 // pred_check_branch
        %157 = sbr.rel (%p155) target = $region28
      $region27: #{_nmt_forward.10} parent=23 // pred_region
        %p158 = scmp.lt.s32.totalorder %s10, 7
        %s159 = scalar_select %p158, %s10, 7
        %s160 = smul.addr %s159, 3
        %s161 = smul.addr %s160, 8
        %s162 = scalar_lea.vmem %s0, %s161
      $region28: #{_nmt_forward.10} parent=23 // pred_fallthru
        _
      // Predicated region
      $region29: #{_nmt_forward.10} parent=23 // pred_check
        %p163 = pneg %p56
      $region30: #{_nmt_forward.10} parent=23 // pred_check_branch
        %165 = sbr.rel (%p163) target = $region32
      $region31: #{_nmt_forward.10} parent=23 // pred_region
        %p166 = scmp.lt.s32.totalorder %s10, 7
        %s167 = scalar_select %p166, %s10, 7
        %s168 = smul.addr %s167, 8
        %s169 = scalar_lea.vmem %s1, %s168
      $region32: #{_nmt_forward.10} parent=23 // pred_fallthru
        _
    $region24: #{_nmt_forward.10} parent=5 // pred_fallthru
      _
    %p170 = scmp.le.s32.totalorder 1, %s10
    %p171 = scmp.lt.s32.totalorder %s10, 9
    %p172 = pnand %p170, %p171
    %p173 = pneg %p172
    // Predicated region
    $region33: #{_nmt_forward.10} parent=5 // pred_check
      _
    $region34: #{_nmt_forward.10} parent=5 // pred_check_branch
      %175 = sbr.rel (%p172) target = $region36
    $region35: #{_nmt_forward.10} parent=5 // pred_region
      %s176 = ssub.s32 %s10, 1
      %p177 = scmp.lt.s32.totalorder %s15, 7
      %s178 = scalar_select %p177, %s15, 7
      %s179 = smul.addr %s178, 3
      %s180 = smul.addr %s179, 8
      %s181 = scalar_lea.vmem %s0, %s180
      %p182 = pneg %p36
      %p183 = pneg %p33
      %p184 = scmp.lt.s32.totalorder %s15, 7
      %s185 = scalar_select %p184, %s15, 7
      %s186 = smul.addr %s185, 8
      %s187 = scalar_lea.vmem %s1, %s186
      %p188 = pneg %p62
      %p189 = pneg %p59
      %p190 = pneg %p83
      %p191 = pneg %p80
      %p192 = pneg %p104
      %p193 = pneg %p101
      %p194 = pneg %p130
      %p195 = pneg %p127
      %p196 = scmp.lt.s32.totalorder %s15, 7
      %s197 = scalar_select %p196, %s15, 7
      %s198 = smul.addr %s197, 8
      %s199 = scalar_lea.vmem %s4, %s198
      %p200 = scmp.lt.s32.totalorder %s15, 7
      %s201 = scalar_select %p200, %s15, 7
      %s202 = smul.addr %s201, 3
      %s203 = smul.addr %s202, 8
      %s204 = scalar_lea.vmem %s0, %s203
      %p205 = scmp.lt.s32.totalorder %s15, 7
      %s206 = scalar_select %p205, %s15, 7
      %s207 = smul.addr %s206, 8
      %s208 = scalar_lea.vmem %s1, %s207
      %p209 = scmp.lt.s32.totalorder %s15, 7
      %s210 = scalar_select %p209, %s15, 7
      %s211 = smul.addr %s210, 8
      %s212 = scalar_lea.vmem %s4, %s211
      %p213 = scmp.eq.s32.totalorder %s15, 0
      // Predicated region
      $region37: #{_nmt_forward.10} parent=35 // pred_check
        %p214 = pneg %p213
      $region38: #{_nmt_forward.10} parent=35 // pred_check_branch
        %216 = sbr.rel (%p214) target = $region40
      $region39: #{_nmt_forward.10} parent=35 // pred_region
        %217 = vst [vmem:[#allocation2] sm:$0xff] 0.0
      $region40: #{_nmt_forward.10} parent=35 // pred_fallthru
        _
      %v218 = vld [vmem:[#allocation2] sm:$0xff]
      %v219 = vld [vmem:[%s204] sm:$0xff]
      %v220 = vld [vmem:[%s204 + $0x8] sm:$0xff]
      %v221 = vld [vmem:[%s204 + $0x10] sm:$0xff]
      %v222 = vld [vmem:[%s2] sm:$0xff]
      %v223 = vld [vmem:[%s2 + $0x8] sm:$0xff]
      %v224 = vld [vmem:[%s2 + $0x10] sm:$0xff]
      %v225 = vld [vmem:[%s2 + $0x18] sm:$0xff]
      %v226 = vld [vmem:[%s2 + $0x20] sm:$0xff]
      %v227 = vld [vmem:[%s2 + $0x28] sm:$0xff]
      %v228 = vld [vmem:[%s2 + $0x30] sm:$0xff]
      %v229 = vld [vmem:[%s2 + $0x38] sm:$0xff]
      %v230 = vld [vmem:[%s2 + $0x40] sm:$0xff]
      %v231 = vld [vmem:[%s2 + $0x48] sm:$0xff]
      %v232 = vld [vmem:[%s2 + $0x50] sm:$0xff]
      %v233 = vld [vmem:[%s2 + $0x58] sm:$0xff]
      %v234 = vld [vmem:[%s2 + $0x60] sm:$0xff]
      %v235 = vld [vmem:[%s2 + $0x68] sm:$0xff]
      %v236 = vld [vmem:[%s2 + $0x70] sm:$0xff]
      %v237 = vld [vmem:[%s2 + $0x78] sm:$0xff]
      %v238 = vld [vmem:[%s2 + $0x80] sm:$0xff]
      %v239 = vld [vmem:[%s2 + $0x88] sm:$0xff]
      %v240 = vld [vmem:[%s2 + $0x90] sm:$0xff]
      %v241 = vld [vmem:[%s2 + $0x98] sm:$0xff]
      %v242 = vld [vmem:[%s2 + $0xa0] sm:$0xff]
      %v243 = vld [vmem:[%s2 + $0xa8] sm:$0xff]
      %v244 = vld [vmem:[%s2 + $0xb0] sm:$0xff]
      %v245 = vld [vmem:[%s2 + $0xb8] sm:$0xff]
      %v246 = vld [vmem:[%s2 + $0xc0] sm:$0xff]
      %v247 = vld [vmem:[%s2 + $0xc8] sm:$0xff]
      %v248 = vld [vmem:[%s2 + $0xd0] sm:$0xff]
      %v249 = vld [vmem:[%s2 + $0xd8] sm:$0xff]
      %v250 = vld [vmem:[%s2 + $0xe0] sm:$0xff]
      %v251 = vld [vmem:[%s2 + $0xe8] sm:$0xff]
      %v252 = vld [vmem:[%s2 + $0xf0] sm:$0xff]
      %v253 = vld [vmem:[%s2 + $0xf8] sm:$0xff]
      %v254 = vld [vmem:[%s2 + $0x100] sm:$0xff]
      %v255 = vld [vmem:[%s2 + $0x108] sm:$0xff]
      %v256 = vld [vmem:[%s2 + $0x110] sm:$0xff]
      %v257 = vld [vmem:[%s2 + $0x118] sm:$0xff]
      %v258 = vld [vmem:[%s2 + $0x120] sm:$0xff]
      %v259 = vld [vmem:[%s2 + $0x128] sm:$0xff]
      %v260 = vld [vmem:[%s2 + $0x130] sm:$0xff]
      %v261 = vld [vmem:[%s2 + $0x138] sm:$0xff]
      %v262 = vld [vmem:[%s2 + $0x140] sm:$0xff]
      %v263 = vld [vmem:[%s2 + $0x148] sm:$0xff]
      %v264 = vld [vmem:[%s2 + $0x150] sm:$0xff]
      %v265 = vld [vmem:[%s2 + $0x158] sm:$0xff]
      %v266 = vld [vmem:[%s2 + $0x160] sm:$0xff]
      %v267 = vld [vmem:[%s2 + $0x168] sm:$0xff]
      %v268 = vld [vmem:[%s2 + $0x170] sm:$0xff]
      %v269 = vld [vmem:[%s2 + $0x178] sm:$0xff]
      %v270 = vld [vmem:[%s3] sm:$0x7]
      %v272 = vlaneseq
      %v273 = vshrl.u32 %v272, 7
      %v274 = vsub.s32 0, %v273
      %v275 = vrot.slane %v270, %v274
      %v276 = vlaneseq
      %v277 = vshrl.u32 %v276, 7
      %v278 = vsub.s32 1, %v277
      %v279 = vrot.slane %v270, %v278
      %v280 = vlaneseq
      %v281 = vshrl.u32 %v280, 7
      %v282 = vsub.s32 2, %v281
      %v283 = vrot.slane %v270, %v282
      %287 = vmatprep.subr.mxu0 %v223
      %288 = vmatpush1.msra.mxu0 %v222
      %289 = vmatprep.subr.mxu0 %v226
      %290 = vmatpush1.msra.mxu0 %v225
      %291 = vmatprep.subr.mxu0 %v229
      %292 = vmatpush1.msra.mxu0 %v228
      %293 = vmatprep.subr.mxu0 %v232
      %294 = vmatpush1.msra.mxu0 %v231
      %295 = vmatprep.subr.mxu0 %v235
      %296 = vmatpush1.msra.mxu0 %v234
      %297 = vmatprep.subr.mxu0 %v238
      %298 = vmatpush1.msra.mxu0 %v237
      %299 = vmatprep.subr.mxu0 %v241
      %300 = vmatpush1.msra.mxu0 %v240
      %301 = vmatprep.subr.mxu0 %v244
      %302 = vmatpush1.msra.mxu0 %v243
      %303 = vmatprep.subr.mxu0 %v247
      %304 = vmatpush1.msra.mxu0 %v246
      %305 = vmatprep.subr.mxu0 %v250
      %306 = vmatpush1.msra.mxu0 %v249
      %307 = vmatprep.subr.mxu0 %v253
      %308 = vmatpush1.msra.mxu0 %v252
      %309 = vmatprep.subr.mxu0 %v256
      %310 = vmatpush1.msra.mxu0 %v255
      %311 = vmatprep.subr.mxu0 %v259
      %312 = vmatpush1.msra.mxu0 %v258
      %313 = vmatprep.subr.mxu0 %v262
      %314 = vmatpush1.msra.mxu0 %v261
      %315 = vmatprep.subr.mxu0 %v265
      %316 = vmatpush1.msra.mxu0 %v264
      %317 = vmatprep.subr.mxu0 %v268
      %318 = vmatpush1.msra.mxu0 %v267
      %319 = vmatprep.subr.mxu0 0.0
      %320 = vmatpush1.msra.mxu0 0.0
      %321 = vmatprep.subr.mxu0 0.0
      %322 = vmatpush1.msra.mxu0 0.0
      %323 = vmatprep.subr.mxu0 0.0
      %324 = vmatpush1.msra.mxu0 0.0
      %325 = vmatprep.subr.mxu0 0.0
      %326 = vmatpush1.msra.mxu0 0.0
      %327 = vmatprep.subr.mxu0 0.0
      %328 = vmatpush1.msra.mxu0 0.0
      %329 = vmatprep.subr.mxu0 0.0
      %330 = vmatpush1.msra.mxu0 0.0
      %331 = vmatprep.subr.mxu0 0.0
      %332 = vmatpush1.msra.mxu0 0.0
      %333 = vmatprep.subr.mxu0 0.0
      %334 = vmatpush1.msra.mxu0 0.0
      %335 = vmatprep.subr.mxu0 0.0
      %336 = vmatpush1.msra.mxu0 0.0
      %337 = vmatprep.subr.mxu0 0.0
      %338 = vmatpush1.msra.mxu0 0.0
      %339 = vmatprep.subr.mxu0 0.0
      %340 = vmatpush1.msra.mxu0 0.0
      %341 = vmatprep.subr.mxu0 0.0
      %342 = vmatpush1.msra.mxu0 0.0
      %343 = vmatprep.subr.mxu0 0.0
      %344 = vmatpush1.msra.mxu0 0.0
      %345 = vmatprep.subr.mxu0 0.0
      %346 = vmatpush1.msra.mxu0 0.0
      %347 = vmatprep.subr.mxu0 0.0
      %348 = vmatpush1.msra.mxu0 0.0
      %349 = vmatprep.subr.mxu0 0.0
      %350 = vmatpush1.msra.mxu0 0.0
      %351 = vmatprep.mubr.f32.mxu0 0.0
      %352 = vmatmul.mubr.f32.gmra.mrb[0].mxu0 %v218
      %v353 = vpop.f32.mrb[0].mxu0
      %v354 = vadd.f32 %v275, %v353
      %v355 = vpop.f32.mrb[0].mxu0
      %v356 = vadd.f32 %v279, %v355
      %357 = vdwg.mxu0
      %358 = vmatprep.subr.mxu0 0.0
      %359 = vmatpush1.msra.mxu0 %v224
      %360 = vmatprep.subr.mxu0 0.0
      %361 = vmatpush1.msra.mxu0 %v227
      %362 = vmatprep.subr.mxu0 0.0
      %363 = vmatpush1.msra.mxu0 %v230
      %364 = vmatprep.subr.mxu0 0.0
      %365 = vmatpush1.msra.mxu0 %v233
      %366 = vmatprep.subr.mxu0 0.0
      %367 = vmatpush1.msra.mxu0 %v236
      %368 = vmatprep.subr.mxu0 0.0
      %369 = vmatpush1.msra.mxu0 %v239
      %370 = vmatprep.subr.mxu0 0.0
      %371 = vmatpush1.msra.mxu0 %v242
      %372 = vmatprep.subr.mxu0 0.0
      %373 = vmatpush1.msra.mxu0 %v245
      %374 = vmatprep.subr.mxu0 0.0
      %375 = vmatpush1.msra.mxu0 %v248
      %376 = vmatprep.subr.mxu0 0.0
      %377 = vmatpush1.msra.mxu0 %v251
      %378 = vmatprep.subr.mxu0 0.0
      %379 = vmatpush1.msra.mxu0 %v254
      %380 = vmatprep.subr.mxu0 0.0
      %381 = vmatpush1.msra.mxu0 %v257
      %382 = vmatprep.subr.mxu0 0.0
      %383 = vmatpush1.msra.mxu0 %v260
      %384 = vmatprep.subr.mxu0 0.0
      %385 = vmatpush1.msra.mxu0 %v263
      %386 = vmatprep.subr.mxu0 0.0
      %387 = vmatpush1.msra.mxu0 %v266
      %388 = vmatprep.subr.mxu0 0.0
      %389 = vmatpush1.msra.mxu0 %v269
      %390 = vmatprep.subr.mxu0 0.0
      %391 = vmatpush1.msra.mxu0 0.0
      %392 = vmatprep.subr.mxu0 0.0
      %393 = vmatpush1.msra.mxu0 0.0
      %394 = vmatprep.subr.mxu0 0.0
      %395 = vmatpush1.msra.mxu0 0.0
      %396 = vmatprep.subr.mxu0 0.0
      %397 = vmatpush1.msra.mxu0 0.0
      %398 = vmatprep.subr.mxu0 0.0
      %399 = vmatpush1.msra.mxu0 0.0
      %400 = vmatprep.subr.mxu0 0.0
      %401 = vmatpush1.msra.mxu0 0.0
      %402 = vmatprep.subr.mxu0 0.0
      %403 = vmatpush1.msra.mxu0 0.0
      %404 = vmatprep.subr.mxu0 0.0
      %405 = vmatpush1.msra.mxu0 0.0
      %406 = vmatprep.subr.mxu0 0.0
      %407 = vmatpush1.msra.mxu0 0.0
      %408 = vmatprep.subr.mxu0 0.0
      %409 = vmatpush1.msra.mxu0 0.0
      %410 = vmatprep.subr.mxu0 0.0
      %411 = vmatpush1.msra.mxu0 0.0
      %412 = vmatprep.subr.mxu0 0.0
      %413 = vmatpush1.msra.mxu0 0.0
      %414 = vmatprep.subr.mxu0 0.0
      %415 = vmatpush1.msra.mxu0 0.0
      %416 = vmatprep.subr.mxu0 0.0
      %417 = vmatpush1.msra.mxu0 0.0
      %418 = vmatprep.subr.mxu0 0.0
      %419 = vmatpush1.msra.mxu0 0.0
      %420 = vmatprep.subr.mxu0 0.0
      %421 = vmatpush1.msra.mxu0 0.0
      %422 = vmatprep.mubr.f32.mxu0 0.0
      %423 = vmatmul.mubr.f32.gmra.mrb[0].mxu0 %v218
      %v424 = vpop.f32.mrb[0].mxu0
      %v425 = vadd.f32 %v283, %v424
      %v426 = vpop.f32.mrb[0].mxu0
      %427 = vdwg.mxu0
      %v428 = vadd.f32 %v219, %v354
      %v429 = vxor.u32 %v428, 2147483648
      %v430 = vmul.f32 %v429, 1.442695
      %v431 = vpow.pop %v430
      %v432 = vadd.f32 %v431, 1.0
      %v433 = vrcp.pop %v432
      %v434 = vmul.f32 1.0, %v433
      %v435 = vadd.f32 %v220, %v356
      %v436 = vxor.u32 %v435, 2147483648
      %v437 = vmul.f32 %v436, 1.442695
      %v438 = vpow.pop %v437
      %v439 = vadd.f32 %v438, 1.0
      %v440 = vrcp.pop %v439
      %v441 = vmul.f32 1.0, %v440
      %v442 = vmul.f32 %v434, %v425
      %v443 = vadd.f32 %v221, %v442
      %v444 = vtanh.pop %v443
      %v445 = vsub.f32 1.0, %v441
      %v446 = vmul.f32 %v445, %v444
      %v447 = vmul.f32 %v441, %v218
      %v448 = vadd.f32 %v446, %v447
      %v449 = vld [vmem:[%s208] sm:$0xff]
      %451 = vset.pattern.permute.xlu0 0
      %452 = vperm.xlu0 %451, %v449
      %v453 = vpop.permute.xlu0 %452
      %v455 = vmul.f32 %v453, %v448
      %456 = vst [vmem:[%s212] sm:$0xff] %v455
      %v457 = vsub.f32 1.0, %v449
      %459 = vset.pattern.permute.xlu0 0
      %460 = vperm.xlu0 %459, %v457
      %v461 = vpop.permute.xlu0 %460
      %v463 = vmul.f32 %v461, %v218
      %v464 = vadd.f32 %v455, %v463
      %465 = vst [vmem:[#allocation2] sm:$0xff] %v464
      %p466 = scmp.lt.s32.totalorder %s15, 7
      %s467 = scalar_select %p466, %s15, 7
      %s468 = smul.addr %s467, 8
      %s469 = scalar_lea.vmem %s4, %s468
      // Predicated region
      $region41: #{_nmt_forward.10} parent=35 // pred_check
        %p470 = pneg %p127
      $region42: #{_nmt_forward.10} parent=35 // pred_check_branch
        %472 = sbr.rel (%p470) target = $region44
      $region43: #{_nmt_forward.10} parent=35 // pred_region
        _
      $region44: #{_nmt_forward.10} parent=35 // pred_fallthru
        _
    $region36: #{_nmt_forward.10} parent=5 // pred_fallthru
      _
    %p473 = scmp.le.s32.totalorder 2, %s10
    // Predicated region
    $region45: #{_nmt_forward.10} parent=5 // pred_check
      %p474 = pneg %p473
    $region46: #{_nmt_forward.10} parent=5 // pred_check_branch
      %476 = sbr.rel (%p474) target = $region48
    $region47: #{_nmt_forward.10} parent=5 // pred_region
      %s477 = ssub.s32 %s10, 2
      // Predicated region
      $region49: #{_nmt_forward.10} parent=47 // pred_check
        %p478 = pneg %p133
      $region50: #{_nmt_forward.10} parent=47 // pred_check_branch
        %480 = sbr.rel (%p478) target = $region52
      $region51: #{_nmt_forward.10} parent=47 // pred_region
        %p481 = scmp.lt.s32.totalorder %s16, 7
        %s482 = scalar_select %p481, %s16, 7
        %s483 = smul.addr %s482, 8
        %s484 = scalar_lea.vmem %s4, %s483
      $region52: #{_nmt_forward.10} parent=47 // pred_fallthru
        _
    $region48: #{_nmt_forward.10} parent=5 // pred_fallthru
      _
  $region6: #{_nmt_forward.10} parent=0 // loop_footer
    %s14 = sadd.s32 1, %s10
  $region7: #{_nmt_forward.10} parent=0 // loop_footer_branch
    %9 = sbr.rel target = $region3
  $region8: #{_nmt_forward.10} parent=0 // loop_exit
    _

// kernel: _nmt_forward.8
$region0: #{_nmt_forward.8}
  #allocation0 [shape = 'u32[]', space=smem, size = 0x4, offset = 0x4, fixed_abs, tag = 'smem constant byte address 0x4 - core index']
  #allocation1 [shape = 'u32[144,128]{1,0:T(1,128)}', space=vmem, size = 0x12000, scoped, tag = 'internal scratch']
  %s0 = inlined_call_operand.vmem [shape: f32[64,128], index: 0, kind: input, shape index: {}]
  %s1 = inlined_call_operand.vmem [shape: f32[128,384], index: 1, kind: input, shape index: {}]
  %s2 = inlined_call_operand.vmem [shape: f32[1,384], index: 2, kind: input, shape index: {}]
  %s3 = inlined_call_operand.vmem [shape: f32[64,384], index: 3, kind: output, shape index: {}]
  %s4 = sld [smem:[#allocation0]]
  $region22: #{_nmt_forward.8} parent=0
    _
  %s6 = ssub.s32 1, %s4
  %s7 = scalar_select 0, %s6, %s4
  // Predicated region
  $region2: #{_nmt_forward.8} parent=0 // pred_check
    _
  $region3: #{_nmt_forward.8} parent=0 // pred_check_branch
    %9 = sbr.rel (0) target = $region5
  $region4: #{_nmt_forward.8} parent=0 // pred_region
    _
  $region5: #{_nmt_forward.8} parent=0 // pred_fallthru
    _
  // Predicated region
  $region6: #{_nmt_forward.8} parent=0 // pred_check
    _
  $region7: #{_nmt_forward.8} parent=0 // pred_check_branch
    %11 = sbr.rel (0) target = $region9
  $region8: #{_nmt_forward.8} parent=0 // pred_region
    _
  $region9: #{_nmt_forward.8} parent=0 // pred_fallthru
    _
  // Predicated region
  $region10: #{_nmt_forward.8} parent=0 // pred_check
    _
  $region11: #{_nmt_forward.8} parent=0 // pred_check_branch
    %13 = sbr.rel (0) target = $region13
  $region12: #{_nmt_forward.8} parent=0 // pred_region
    _
  $region13: #{_nmt_forward.8} parent=0 // pred_fallthru
    _
  %v14 = vld [vmem:[%s0] sm:$0xff]
  %v15 = vld [vmem:[%s0 + $0x8] sm:$0xff]
  %v16 = vld [vmem:[%s0 + $0x10] sm:$0xff]
  %v17 = vld [vmem:[%s0 + $0x18] sm:$0xff]
  %v18 = vld [vmem:[%s0 + $0x20] sm:$0xff]
  %v19 = vld [vmem:[%s0 + $0x28] sm:$0xff]
  %v20 = vld [vmem:[%s0 + $0x30] sm:$0xff]
  %v21 = vld [vmem:[%s0 + $0x38] sm:$0xff]
  %v22 = vld [vmem:[%s1] sm:$0xff]
  %v23 = vld [vmem:[%s1 + $0x8] sm:$0xff]
  %v24 = vld [vmem:[%s1 + $0x10] sm:$0xff]
  %v25 = vld [vmem:[%s1 + $0x18] sm:$0xff]
  %v26 = vld [vmem:[%s1 + $0x20] sm:$0xff]
  %v27 = vld [vmem:[%s1 + $0x28] sm:$0xff]
  %v28 = vld [vmem:[%s1 + $0x30] sm:$0xff]
  %v29 = vld [vmem:[%s1 + $0x38] sm:$0xff]
  %v30 = vld [vmem:[%s1 + $0x40] sm:$0xff]
  %v31 = vld [vmem:[%s1 + $0x48] sm:$0xff]
  %v32 = vld [vmem:[%s1 + $0x50] sm:$0xff]
  %v33 = vld [vmem:[%s1 + $0x58] sm:$0xff]
  %v34 = vld [vmem:[%s1 + $0x60] sm:$0xff]
  %v35 = vld [vmem:[%s1 + $0x68] sm:$0xff]
  %v36 = vld [vmem:[%s1 + $0x70] sm:$0xff]
  %v37 = vld [vmem:[%s1 + $0x78] sm:$0xff]
  %v38 = vld [vmem:[%s1 + $0x80] sm:$0xff]
  %v39 = vld [vmem:[%s1 + $0x88] sm:$0xff]
  %v40 = vld [vmem:[%s1 + $0x90] sm:$0xff]
  %v41 = vld [vmem:[%s1 + $0x98] sm:$0xff]
  %v42 = vld [vmem:[%s1 + $0xa0] sm:$0xff]
  %v43 = vld [vmem:[%s1 + $0xa8] sm:$0xff]
  %v44 = vld [vmem:[%s1 + $0xb0] sm:$0xff]
  %v45 = vld [vmem:[%s1 + $0xb8] sm:$0xff]
  %v46 = vld [vmem:[%s1 + $0xc0] sm:$0xff]
  %v47 = vld [vmem:[%s1 + $0xc8] sm:$0xff]
  %v48 = vld [vmem:[%s1 + $0xd0] sm:$0xff]
  %v49 = vld [vmem:[%s1 + $0xd8] sm:$0xff]
  %v50 = vld [vmem:[%s1 + $0xe0] sm:$0xff]
  %v51 = vld [vmem:[%s1 + $0xe8] sm:$0xff]
  %v52 = vld [vmem:[%s1 + $0xf0] sm:$0xff]
  %v53 = vld [vmem:[%s1 + $0xf8] sm:$0xff]
  %v54 = vld [vmem:[%s1 + $0x100] sm:$0xff]
  %v55 = vld [vmem:[%s1 + $0x108] sm:$0xff]
  %v56 = vld [vmem:[%s1 + $0x110] sm:$0xff]
  %v57 = vld [vmem:[%s1 + $0x118] sm:$0xff]
  %v58 = vld [vmem:[%s1 + $0x120] sm:$0xff]
  %v59 = vld [vmem:[%s1 + $0x128] sm:$0xff]
  %v60 = vld [vmem:[%s1 + $0x130] sm:$0xff]
  %v61 = vld [vmem:[%s1 + $0x138] sm:$0xff]
  %v62 = vld [vmem:[%s1 + $0x140] sm:$0xff]
  %v63 = vld [vmem:[%s1 + $0x148] sm:$0xff]
  %v64 = vld [vmem:[%s1 + $0x150] sm:$0xff]
  %v65 = vld [vmem:[%s1 + $0x158] sm:$0xff]
  %v66 = vld [vmem:[%s1 + $0x160] sm:$0xff]
  %v67 = vld [vmem:[%s1 + $0x168] sm:$0xff]
  %v68 = vld [vmem:[%s1 + $0x170] sm:$0xff]
  %v69 = vld [vmem:[%s1 + $0x178] sm:$0xff]
  %v70 = vld [vmem:[%s2] sm:$0x7]
  %v72 = vlaneseq
  %v73 = vshrl.u32 %v72, 7
  %v74 = vsub.s32 0, %v73
  %v75 = vrot.slane %v70, %v74
  %v76 = vlaneseq
  %v77 = vshrl.u32 %v76, 7
  %v78 = vsub.s32 1, %v77
  %v79 = vrot.slane %v70, %v78
  %v80 = vlaneseq
  %v81 = vshrl.u32 %v80, 7
  %v82 = vsub.s32 2, %v81
  %v83 = vrot.slane %v70, %v82
  %87 = vmatprep.subr.mxu0 %v23
  %88 = vmatpush1.msra.mxu0 %v22
  %89 = vmatprep.subr.mxu0 %v26
  %90 = vmatpush1.msra.mxu0 %v25
  %91 = vmatprep.subr.mxu0 %v29
  %92 = vmatpush1.msra.mxu0 %v28
  %93 = vmatprep.subr.mxu0 %v32
  %94 = vmatpush1.msra.mxu0 %v31
  %95 = vmatprep.subr.mxu0 %v35
  %96 = vmatpush1.msra.mxu0 %v34
  %97 = vmatprep.subr.mxu0 %v38
  %98 = vmatpush1.msra.mxu0 %v37
  %99 = vmatprep.subr.mxu0 %v41
  %100 = vmatpush1.msra.mxu0 %v40
  %101 = vmatprep.subr.mxu0 %v44
  %102 = vmatpush1.msra.mxu0 %v43
  %103 = vmatprep.subr.mxu0 %v47
  %104 = vmatpush1.msra.mxu0 %v46
  %105 = vmatprep.subr.mxu0 %v50
  %106 = vmatpush1.msra.mxu0 %v49
  %107 = vmatprep.subr.mxu0 %v53
  %108 = vmatpush1.msra.mxu0 %v52
  %109 = vmatprep.subr.mxu0 %v56
  %110 = vmatpush1.msra.mxu0 %v55
  %111 = vmatprep.subr.mxu0 %v59
  %112 = vmatpush1.msra.mxu0 %v58
  %113 = vmatprep.subr.mxu0 %v62
  %114 = vmatpush1.msra.mxu0 %v61
  %115 = vmatprep.subr.mxu0 %v65
  %116 = vmatpush1.msra.mxu0 %v64
  %117 = vmatprep.subr.mxu0 %v68
  %118 = vmatpush1.msra.mxu0 %v67
  %119 = vmatprep.subr.mxu0 0.0
  %120 = vmatpush1.msra.mxu0 0.0
  %121 = vmatprep.subr.mxu0 0.0
  %122 = vmatpush1.msra.mxu0 0.0
  %123 = vmatprep.subr.mxu0 0.0
  %124 = vmatpush1.msra.mxu0 0.0
  %125 = vmatprep.subr.mxu0 0.0
  %126 = vmatpush1.msra.mxu0 0.0
  %127 = vmatprep.subr.mxu0 0.0
  %128 = vmatpush1.msra.mxu0 0.0
  %129 = vmatprep.subr.mxu0 0.0
  %130 = vmatpush1.msra.mxu0 0.0
  %131 = vmatprep.subr.mxu0 0.0
  %132 = vmatpush1.msra.mxu0 0.0
  %133 = vmatprep.subr.mxu0 0.0
  %134 = vmatpush1.msra.mxu0 0.0
  %135 = vmatprep.subr.mxu0 0.0
  %136 = vmatpush1.msra.mxu0 0.0
  %137 = vmatprep.subr.mxu0 0.0
  %138 = vmatpush1.msra.mxu0 0.0
  %139 = vmatprep.subr.mxu0 0.0
  %140 = vmatpush1.msra.mxu0 0.0
  %141 = vmatprep.subr.mxu0 0.0
  %142 = vmatpush1.msra.mxu0 0.0
  %143 = vmatprep.subr.mxu0 0.0
  %144 = vmatpush1.msra.mxu0 0.0
  %145 = vmatprep.subr.mxu0 0.0
  %146 = vmatpush1.msra.mxu0 0.0
  %147 = vmatprep.subr.mxu0 0.0
  %148 = vmatpush1.msra.mxu0 0.0
  %149 = vmatprep.subr.mxu0 0.0
  %150 = vmatpush1.msra.mxu0 0.0
  %151 = vmatprep.mubr.f32.mxu0 0.0
  %152 = vmatmul.mubr.f32.gmra.mrb[0].mxu0 %v14
  %v153 = vpop.f32.mrb[0].mxu0
  %v154 = vadd.f32 %v75, %v153
  %v155 = vpop.f32.mrb[0].mxu0
  %v156 = vadd.f32 %v79, %v155
  %157 = vmatprep.mubr.f32.mxu0 0.0
  %158 = vmatmul.mubr.f32.gmra.mrb[0].mxu0 %v15
  %v159 = vpop.f32.mrb[0].mxu0
  %v160 = vadd.f32 %v75, %v159
  %v161 = vpop.f32.mrb[0].mxu0
  %v162 = vadd.f32 %v79, %v161
  %163 = vmatprep.mubr.f32.mxu0 0.0
  %164 = vmatmul.mubr.f32.gmra.mrb[0].mxu0 %v16
  %v165 = vpop.f32.mrb[0].mxu0
  %v166 = vadd.f32 %v75, %v165
  %v167 = vpop.f32.mrb[0].mxu0
  %v168 = vadd.f32 %v79, %v167
  %169 = vmatprep.mubr.f32.mxu0 0.0
  %170 = vmatmul.mubr.f32.gmra.mrb[0].mxu0 %v17
  %v171 = vpop.f32.mrb[0].mxu0
  %v172 = vadd.f32 %v75, %v171
  %v173 = vpop.f32.mrb[0].mxu0
  %v174 = vadd.f32 %v79, %v173
  %175 = vmatprep.mubr.f32.mxu0 0.0
  %176 = vmatmul.mubr.f32.gmra.mrb[0].mxu0 %v18
  %v177 = vpop.f32.mrb[0].mxu0
  %v178 = vadd.f32 %v75, %v177
  %v179 = vpop.f32.mrb[0].mxu0
  %v180 = vadd.f32 %v79, %v179
  %181 = vmatprep.mubr.f32.mxu0 0.0
  %182 = vmatmul.mubr.f32.gmra.mrb[0].mxu0 %v19
  %v183 = vpop.f32.mrb[0].mxu0
  %v184 = vadd.f32 %v75, %v183
  %v185 = vpop.f32.mrb[0].mxu0
  %v186 = vadd.f32 %v79, %v185
  %187 = vmatprep.mubr.f32.mxu0 0.0
  %188 = vmatmul.mubr.f32.gmra.mrb[0].mxu0 %v20
  %v189 = vpop.f32.mrb[0].mxu0
  %v190 = vadd.f32 %v75, %v189
  %v191 = vpop.f32.mrb[0].mxu0
  %v192 = vadd.f32 %v79, %v191
  %193 = vmatprep.mubr.f32.mxu0 0.0
  %194 = vmatmul.mubr.f32.gmra.mrb[0].mxu0 %v21
  %v195 = vpop.f32.mrb[0].mxu0
  %v196 = vadd.f32 %v75, %v195
  %v197 = vpop.f32.mrb[0].mxu0
  %v198 = vadd.f32 %v79, %v197
  %199 = vdwg.mxu0
  %200 = vmatprep.subr.mxu0 0.0
  %201 = vmatpush1.msra.mxu0 %v24
  %202 = vmatprep.subr.mxu0 0.0
  %203 = vmatpush1.msra.mxu0 %v27
  %204 = vmatprep.subr.mxu0 0.0
  %205 = vmatpush1.msra.mxu0 %v30
  %206 = vmatprep.subr.mxu0 0.0
  %207 = vmatpush1.msra.mxu0 %v33
  %208 = vmatprep.subr.mxu0 0.0
  %209 = vmatpush1.msra.mxu0 %v36
  %210 = vmatprep.subr.mxu0 0.0
  %211 = vmatpush1.msra.mxu0 %v39
  %212 = vmatprep.subr.mxu0 0.0
  %213 = vmatpush1.msra.mxu0 %v42
  %214 = vmatprep.subr.mxu0 0.0
  %215 = vmatpush1.msra.mxu0 %v45
  %216 = vmatprep.subr.mxu0 0.0
  %217 = vmatpush1.msra.mxu0 %v48
  %218 = vmatprep.subr.mxu0 0.0
  %219 = vmatpush1.msra.mxu0 %v51
  %220 = vmatprep.subr.mxu0 0.0
  %221 = vmatpush1.msra.mxu0 %v54
  %222 = vmatprep.subr.mxu0 0.0
  %223 = vmatpush1.msra.mxu0 %v57
  %224 = vmatprep.subr.mxu0 0.0
  %225 = vmatpush1.msra.mxu0 %v60
  %226 = vmatprep.subr.mxu0 0.0
  %227 = vmatpush1.msra.mxu0 %v63
  %228 = vmatprep.subr.mxu0 0.0
  %229 = vmatpush1.msra.mxu0 %v66
  %230 = vmatprep.subr.mxu0 0.0
  %231 = vmatpush1.msra.mxu0 %v69
  %232 = vmatprep.subr.mxu0 0.0
  %233 = vmatpush1.msra.mxu0 0.0
  %234 = vmatprep.subr.mxu0 0.0
  %235 = vmatpush1.msra.mxu0 0.0
  %236 = vmatprep.subr.mxu0 0.0
  %237 = vmatpush1.msra.mxu0 0.0
  %238 = vmatprep.subr.mxu0 0.0
  %239 = vmatpush1.msra.mxu0 0.0
  %240 = vmatprep.subr.mxu0 0.0
  %241 = vmatpush1.msra.mxu0 0.0
  %242 = vmatprep.subr.mxu0 0.0
  %243 = vmatpush1.msra.mxu0 0.0
  %244 = vmatprep.subr.mxu0 0.0
  %245 = vmatpush1.msra.mxu0 0.0
  %246 = vmatprep.subr.mxu0 0.0
  %247 = vmatpush1.msra.mxu0 0.0
  %248 = vmatprep.subr.mxu0 0.0
  %249 = vmatpush1.msra.mxu0 0.0
  %250 = vmatprep.subr.mxu0 0.0
  %251 = vmatpush1.msra.mxu0 0.0
  %252 = vmatprep.subr.mxu0 0.0
  %253 = vmatpush1.msra.mxu0 0.0
  %254 = vmatprep.subr.mxu0 0.0
  %255 = vmatpush1.msra.mxu0 0.0
  %256 = vmatprep.subr.mxu0 0.0
  %257 = vmatpush1.msra.mxu0 0.0
  %258 = vmatprep.subr.mxu0 0.0
  %259 = vmatpush1.msra.mxu0 0.0
  %260 = vmatprep.subr.mxu0 0.0
  %261 = vmatpush1.msra.mxu0 0.0
  %262 = vmatprep.subr.mxu0 0.0
  %263 = vmatpush1.msra.mxu0 0.0
  %264 = vmatprep.mubr.f32.mxu0 0.0
  %265 = vmatmul.mubr.f32.gmra.mrb[0].mxu0 %v14
  %v266 = vpop.f32.mrb[0].mxu0
  %v267 = vadd.f32 %v83, %v266
  %v268 = vpop.f32.mrb[0].mxu0
  %269 = vmatprep.mubr.f32.mxu0 0.0
  %270 = vmatmul.mubr.f32.gmra.mrb[0].mxu0 %v15
  %v271 = vpop.f32.mrb[0].mxu0
  %v272 = vadd.f32 %v83, %v271
  %v273 = vpop.f32.mrb[0].mxu0
  %274 = vmatprep.mubr.f32.mxu0 0.0
  %275 = vmatmul.mubr.f32.gmra.mrb[0].mxu0 %v16
  %v276 = vpop.f32.mrb[0].mxu0
  %v277 = vadd.f32 %v83, %v276
  %v278 = vpop.f32.mrb[0].mxu0
  %279 = vmatprep.mubr.f32.mxu0 0.0
  %280 = vmatmul.mubr.f32.gmra.mrb[0].mxu0 %v17
  %v281 = vpop.f32.mrb[0].mxu0
  %v282 = vadd.f32 %v83, %v281
  %v283 = vpop.f32.mrb[0].mxu0
  %284 = vmatprep.mubr.f32.mxu0 0.0
  %285 = vmatmul.mubr.f32.gmra.mrb[0].mxu0 %v18
  %v286 = vpop.f32.mrb[0].mxu0
  %v287 = vadd.f32 %v83, %v286
  %v288 = vpop.f32.mrb[0].mxu0
  %289 = vmatprep.mubr.f32.mxu0 0.0
  %290 = vmatmul.mubr.f32.gmra.mrb[0].mxu0 %v19
  %v291 = vpop.f32.mrb[0].mxu0
  %v292 = vadd.f32 %v83, %v291
  %v293 = vpop.f32.mrb[0].mxu0
  %294 = vmatprep.mubr.f32.mxu0 0.0
  %295 = vmatmul.mubr.f32.gmra.mrb[0].mxu0 %v20
  %v296 = vpop.f32.mrb[0].mxu0
  %v297 = vadd.f32 %v83, %v296
  %v298 = vpop.f32.mrb[0].mxu0
  %299 = vmatprep.mubr.f32.mxu0 0.0
  %300 = vmatmul.mubr.f32.gmra.mrb[0].mxu0 %v21
  %v301 = vpop.f32.mrb[0].mxu0
  %v302 = vadd.f32 %v83, %v301
  %v303 = vpop.f32.mrb[0].mxu0
  %304 = vdwg.mxu0
  %305 = vst [vmem:[%s3] sm:$0xff] %v154
  %306 = vst [vmem:[%s3 + $0x8] sm:$0xff] %v156
  %307 = vst [vmem:[%s3 + $0x10] sm:$0xff] %v267
  %308 = vst [vmem:[%s3 + $0x18] sm:$0xff] %v160
  %309 = vst [vmem:[%s3 + $0x20] sm:$0xff] %v162
  %310 = vst [vmem:[%s3 + $0x28] sm:$0xff] %v272
  %311 = vst [vmem:[%s3 + $0x30] sm:$0xff] %v166
  %312 = vst [vmem:[%s3 + $0x38] sm:$0xff] %v168
  %313 = vst [vmem:[%s3 + $0x40] sm:$0xff] %v277
  %314 = vst [vmem:[%s3 + $0x48] sm:$0xff] %v172
  %315 = vst [vmem:[%s3 + $0x50] sm:$0xff] %v174
  %316 = vst [vmem:[%s3 + $0x58] sm:$0xff] %v282
  %317 = vst [vmem:[%s3 + $0x60] sm:$0xff] %v178
  %318 = vst [vmem:[%s3 + $0x68] sm:$0xff] %v180
  %319 = vst [vmem:[%s3 + $0x70] sm:$0xff] %v287
  %320 = vst [vmem:[%s3 + $0x78] sm:$0xff] %v184
  %321 = vst [vmem:[%s3 + $0x80] sm:$0xff] %v186
  %322 = vst [vmem:[%s3 + $0x88] sm:$0xff] %v292
  %323 = vst [vmem:[%s3 + $0x90] sm:$0xff] %v190
  %324 = vst [vmem:[%s3 + $0x98] sm:$0xff] %v192
  %325 = vst [vmem:[%s3 + $0xa0] sm:$0xff] %v297
  %326 = vst [vmem:[%s3 + $0xa8] sm:$0xff] %v196
  %327 = vst [vmem:[%s3 + $0xb0] sm:$0xff] %v198
  %328 = vst [vmem:[%s3 + $0xb8] sm:$0xff] %v302
  // Predicated region
  $region14: #{_nmt_forward.8} parent=0 // pred_check
    _
  $region15: #{_nmt_forward.8} parent=0 // pred_check_branch
    %330 = sbr.rel (0) target = $region17
  $region16: #{_nmt_forward.8} parent=0 // pred_region
    _
  $region17: #{_nmt_forward.8} parent=0 // pred_fallthru
    _
  // Predicated region
  $region18: #{_nmt_forward.8} parent=0 // pred_check
    _
  $region19: #{_nmt_forward.8} parent=0 // pred_check_branch
    %332 = sbr.rel (0) target = $region21
  $region20: #{_nmt_forward.8} parent=0 // pred_region
    _
  $region21: #{_nmt_forward.8} parent=0 // pred_fallthru
    _

// kernel: _nmt_forward.13
$region0: #{_nmt_forward.13}
  #allocation0 [shape = 'u32[]', space=smem, size = 0x4, offset = 0x4, fixed_abs, tag = 'smem constant byte address 0x4 - core index']
  #allocation1 [shape = 'u32[144,128]{1,0:T(1,128)}', space=vmem, size = 0x12000, scoped, tag = 'internal scratch']
  %s0 = inlined_call_operand.vmem [shape: f32[64,256], index: 0, kind: input, shape index: {}]
  %s1 = inlined_call_operand.vmem [shape: f32[256,128], index: 1, kind: input, shape index: {}]
  %s2 = inlined_call_operand.vmem [shape: f32[1,128], index: 2, kind: input, shape index: {}]
  %s3 = inlined_call_operand.vmem [shape: f32[64,128], index: 3, kind: output, shape index: {}]
  %s4 = sld [smem:[#allocation0]]
  $region22: #{_nmt_forward.13} parent=0
    _
  %s6 = ssub.s32 1, %s4
  %s7 = scalar_select 0, %s6, %s4
  // Predicated region
  $region2: #{_nmt_forward.13} parent=0 // pred_check
    _
  $region3: #{_nmt_forward.13} parent=0 // pred_check_branch
    %9 = sbr.rel (0) target = $region5
  $region4: #{_nmt_forward.13} parent=0 // pred_region
    _
  $region5: #{_nmt_forward.13} parent=0 // pred_fallthru
    _
  // Predicated region
  $region6: #{_nmt_forward.13} parent=0 // pred_check
    _
  $region7: #{_nmt_forward.13} parent=0 // pred_check_branch
    %11 = sbr.rel (0) target = $region9
  $region8: #{_nmt_forward.13} parent=0 // pred_region
    _
  $region9: #{_nmt_forward.13} parent=0 // pred_fallthru
    _
  // Predicated region
  $region10: #{_nmt_forward.13} parent=0 // pred_check
    _
  $region11: #{_nmt_forward.13} parent=0 // pred_check_branch
    %13 = sbr.rel (0) target = $region13
  $region12: #{_nmt_forward.13} parent=0 // pred_region
    _
  $region13: #{_nmt_forward.13} parent=0 // pred_fallthru
    _
  %v14 = vld [vmem:[%s0] sm:$0xff]
  %v15 = vld [vmem:[%s0 + $0x8] sm:$0xff]
  %v16 = vld [vmem:[%s0 + $0x10] sm:$0xff]
  %v17 = vld [vmem:[%s0 + $0x18] sm:$0xff]
  %v18 = vld [vmem:[%s0 + $0x20] sm:$0xff]
  %v19 = vld [vmem:[%s0 + $0x28] sm:$0xff]
  %v20 = vld [vmem:[%s0 + $0x30] sm:$0xff]
  %v21 = vld [vmem:[%s0 + $0x38] sm:$0xff]
  %v22 = vld [vmem:[%s0 + $0x40] sm:$0xff]
  %v23 = vld [vmem:[%s0 + $0x48] sm:$0xff]
  %v24 = vld [vmem:[%s0 + $0x50] sm:$0xff]
  %v25 = vld [vmem:[%s0 + $0x58] sm:$0xff]
  %v26 = vld [vmem:[%s0 + $0x60] sm:$0xff]
  %v27 = vld [vmem:[%s0 + $0x68] sm:$0xff]
  %v28 = vld [vmem:[%s0 + $0x70] sm:$0xff]
  %v29 = vld [vmem:[%s0 + $0x78] sm:$0xff]
  %v30 = vld [vmem:[%s1] sm:$0xff]
  %v31 = vld [vmem:[%s1 + $0x8] sm:$0xff]
  %v32 = vld [vmem:[%s1 + $0x10] sm:$0xff]
  %v33 = vld [vmem:[%s1 + $0x18] sm:$0xff]
  %v34 = vld [vmem:[%s1 + $0x20] sm:$0xff]
  %v35 = vld [vmem:[%s1 + $0x28] sm:$0xff]
  %v36 = vld [vmem:[%s1 + $0x30] sm:$0xff]
  %v37 = vld [vmem:[%s1 + $0x38] sm:$0xff]
  %v38 = vld [vmem:[%s1 + $0x40] sm:$0xff]
  %v39 = vld [vmem:[%s1 + $0x48] sm:$0xff]
  %v40 = vld [vmem:[%s1 + $0x50] sm:$0xff]
  %v41 = vld [vmem:[%s1 + $0x58] sm:$0xff]
  %v42 = vld [vmem:[%s1 + $0x60] sm:$0xff]
  %v43 = vld [vmem:[%s1 + $0x68] sm:$0xff]
  %v44 = vld [vmem:[%s1 + $0x70] sm:$0xff]
  %v45 = vld [vmem:[%s1 + $0x78] sm:$0xff]
  %v46 = vld [vmem:[%s1 + $0x80] sm:$0xff]
  %v47 = vld [vmem:[%s1 + $0x88] sm:$0xff]
  %v48 = vld [vmem:[%s1 + $0x90] sm:$0xff]
  %v49 = vld [vmem:[%s1 + $0x98] sm:$0xff]
  %v50 = vld [vmem:[%s1 + $0xa0] sm:$0xff]
  %v51 = vld [vmem:[%s1 + $0xa8] sm:$0xff]
  %v52 = vld [vmem:[%s1 + $0xb0] sm:$0xff]
  %v53 = vld [vmem:[%s1 + $0xb8] sm:$0xff]
  %v54 = vld [vmem:[%s1 + $0xc0] sm:$0xff]
  %v55 = vld [vmem:[%s1 + $0xc8] sm:$0xff]
  %v56 = vld [vmem:[%s1 + $0xd0] sm:$0xff]
  %v57 = vld [vmem:[%s1 + $0xd8] sm:$0xff]
  %v58 = vld [vmem:[%s1 + $0xe0] sm:$0xff]
  %v59 = vld [vmem:[%s1 + $0xe8] sm:$0xff]
  %v60 = vld [vmem:[%s1 + $0xf0] sm:$0xff]
  %v61 = vld [vmem:[%s1 + $0xf8] sm:$0xff]
  %v62 = vld [vmem:[%s2] sm:$0x1]
  %v64 = vlaneseq
  %v65 = vshrl.u32 %v64, 7
  %v66 = vsub.s32 0, %v65
  %v67 = vrot.slane %v62, %v66
  %69 = vmatprep.subr.mxu0 0.0
  %70 = vmatpush1.msra.mxu0 %v30
  %71 = vmatprep.subr.mxu0 0.0
  %72 = vmatpush1.msra.mxu0 %v31
  %73 = vmatprep.subr.mxu0 0.0
  %74 = vmatpush1.msra.mxu0 %v32
  %75 = vmatprep.subr.mxu0 0.0
  %76 = vmatpush1.msra.mxu0 %v33
  %77 = vmatprep.subr.mxu0 0.0
  %78 = vmatpush1.msra.mxu0 %v34
  %79 = vmatprep.subr.mxu0 0.0
  %80 = vmatpush1.msra.mxu0 %v35
  %81 = vmatprep.subr.mxu0 0.0
  %82 = vmatpush1.msra.mxu0 %v36
  %83 = vmatprep.subr.mxu0 0.0
  %84 = vmatpush1.msra.mxu0 %v37
  %85 = vmatprep.subr.mxu0 0.0
  %86 = vmatpush1.msra.mxu0 %v38
  %87 = vmatprep.subr.mxu0 0.0
  %88 = vmatpush1.msra.mxu0 %v39
  %89 = vmatprep.subr.mxu0 0.0
  %90 = vmatpush1.msra.mxu0 %v40
  %91 = vmatprep.subr.mxu0 0.0
  %92 = vmatpush1.msra.mxu0 %v41
  %93 = vmatprep.subr.mxu0 0.0
  %94 = vmatpush1.msra.mxu0 %v42
  %95 = vmatprep.subr.mxu0 0.0
  %96 = vmatpush1.msra.mxu0 %v43
  %97 = vmatprep.subr.mxu0 0.0
  %98 = vmatpush1.msra.mxu0 %v44
  %99 = vmatprep.subr.mxu0 0.0
  %100 = vmatpush1.msra.mxu0 %v45
  %101 = vmatprep.subr.mxu0 0.0
  %102 = vmatpush1.msra.mxu0 %v46
  %103 = vmatprep.subr.mxu0 0.0
  %104 = vmatpush1.msra.mxu0 %v47
  %105 = vmatprep.subr.mxu0 0.0
  %106 = vmatpush1.msra.mxu0 %v48
  %107 = vmatprep.subr.mxu0 0.0
  %108 = vmatpush1.msra.mxu0 %v49
  %109 = vmatprep.subr.mxu0 0.0
  %110 = vmatpush1.msra.mxu0 %v50
  %111 = vmatprep.subr.mxu0 0.0
  %112 = vmatpush1.msra.mxu0 %v51
  %113 = vmatprep.subr.mxu0 0.0
  %114 = vmatpush1.msra.mxu0 %v52
  %115 = vmatprep.subr.mxu0 0.0
  %116 = vmatpush1.msra.mxu0 %v53
  %117 = vmatprep.subr.mxu0 0.0
  %118 = vmatpush1.msra.mxu0 %v54
  %119 = vmatprep.subr.mxu0 0.0
  %120 = vmatpush1.msra.mxu0 %v55
  %121 = vmatprep.subr.mxu0 0.0
  %122 = vmatpush1.msra.mxu0 %v56
  %123 = vmatprep.subr.mxu0 0.0
  %124 = vmatpush1.msra.mxu0 %v57
  %125 = vmatprep.subr.mxu0 0.0
  %126 = vmatpush1.msra.mxu0 %v58
  %127 = vmatprep.subr.mxu0 0.0
  %128 = vmatpush1.msra.mxu0 %v59
  %129 = vmatprep.subr.mxu0 0.0
  %130 = vmatpush1.msra.mxu0 %v60
  %131 = vmatprep.subr.mxu0 0.0
  %132 = vmatpush1.msra.mxu0 %v61
  %133 = vmatprep.mubr.f32.mxu0 %v15
  %134 = vmatmul.mubr.f32.gmra.mrb[0].mxu0 %v14
  %v135 = vpop.f32.mrb[0].mxu0
  %v136 = vadd.f32 %v67, %v135
  %v137 = vpop.f32.mrb[0].mxu0
  %138 = vmatprep.mubr.f32.mxu0 %v17
  %139 = vmatmul.mubr.f32.gmra.mrb[0].mxu0 %v16
  %v140 = vpop.f32.mrb[0].mxu0
  %v141 = vadd.f32 %v67, %v140
  %v142 = vpop.f32.mrb[0].mxu0
  %143 = vmatprep.mubr.f32.mxu0 %v19
  %144 = vmatmul.mubr.f32.gmra.mrb[0].mxu0 %v18
  %v145 = vpop.f32.mrb[0].mxu0
  %v146 = vadd.f32 %v67, %v145
  %v147 = vpop.f32.mrb[0].mxu0
  %148 = vmatprep.mubr.f32.mxu0 %v21
  %149 = vmatmul.mubr.f32.gmra.mrb[0].mxu0 %v20
  %v150 = vpop.f32.mrb[0].mxu0
  %v151 = vadd.f32 %v67, %v150
  %v152 = vpop.f32.mrb[0].mxu0
  %153 = vmatprep.mubr.f32.mxu0 %v23
  %154 = vmatmul.mubr.f32.gmra.mrb[0].mxu0 %v22
  %v155 = vpop.f32.mrb[0].mxu0
  %v156 = vadd.f32 %v67, %v155
  %v157 = vpop.f32.mrb[0].mxu0
  %158 = vmatprep.mubr.f32.mxu0 %v25
  %159 = vmatmul.mubr.f32.gmra.mrb[0].mxu0 %v24
  %v160 = vpop.f32.mrb[0].mxu0
  %v161 = vadd.f32 %v67, %v160
  %v162 = vpop.f32.mrb[0].mxu0
  %163 = vmatprep.mubr.f32.mxu0 %v27
  %164 = vmatmul.mubr.f32.gmra.mrb[0].mxu0 %v26
  %v165 = vpop.f32.mrb[0].mxu0
  %v166 = vadd.f32 %v67, %v165
  %v167 = vpop.f32.mrb[0].mxu0
  %168 = vmatprep.mubr.f32.mxu0 %v29
  %169 = vmatmul.mubr.f32.gmra.mrb[0].mxu0 %v28
  %v170 = vpop.f32.mrb[0].mxu0
  %v171 = vadd.f32 %v67, %v170
  %v172 = vpop.f32.mrb[0].mxu0
  %173 = vdwg.mxu0
  %174 = vst [vmem:[%s3] sm:$0xff] %v136
  %175 = vst [vmem:[%s3 + $0x8] sm:$0xff] %v141
  %176 = vst [vmem:[%s3 + $0x10] sm:$0xff] %v146
  %177 = vst [vmem:[%s3 + $0x18] sm:$0xff] %v151
  %178 = vst [vmem:[%s3 + $0x20] sm:$0xff] %v156
  %179 = vst [vmem:[%s3 + $0x28] sm:$0xff] %v161
  %180 = vst [vmem:[%s3 + $0x30] sm:$0xff] %v166
  %181 = vst [vmem:[%s3 + $0x38] sm:$0xff] %v171
  // Predicated region
  $region14: #{_nmt_forward.13} parent=0 // pred_check
    _
  $region15: #{_nmt_forward.13} parent=0 // pred_check_branch
    %183 = sbr.rel (0) target = $region17
  $region16: #{_nmt_forward.13} parent=0 // pred_region
    _
  $region17: #{_nmt_forward.13} parent=0 // pred_fallthru
    _
  // Predicated region
  $region18: #{_nmt_forward.13} parent=0 // pred_check
    _
  $region19: #{_nmt_forward.13} parent=0 // pred_check_branch
    %185 = sbr.rel (0) target = $region21
  $region20: #{_nmt_forward.13} parent=0 // pred_region
    _
  $region21: #{_nmt_forward.13} parent=0 // pred_fallthru
    _

// kernel: _nmt_forward.14
$region0: #{_nmt_forward.14}
  #allocation0 [shape = 'u32[]', space=smem, size = 0x4, offset = 0x4, fixed_abs, tag = 'smem constant byte address 0x4 - core index']
  #allocation1 [shape = 'u32[144,128]{1,0:T(1,128)}', space=vmem, size = 0x12000, scoped, tag = 'internal scratch']
  %s0 = inlined_call_operand.vmem [shape: f32[56,128], index: 0, kind: input, shape index: {}]
  %s1 = inlined_call_operand.vmem [shape: f32[128,384], index: 1, kind: input, shape index: {}]
  %s2 = inlined_call_operand.vmem [shape: f32[1,384], index: 2, kind: input, shape index: {}]
  %s3 = inlined_call_operand.vmem [shape: f32[56,384], index: 3, kind: output, shape index: {}]
  %s4 = sld [smem:[#allocation0]]
  $region22: #{_nmt_forward.14} parent=0
    _
  %s6 = ssub.s32 1, %s4
  %s7 = scalar_select 0, %s6, %s4
  // Predicated region
  $region2: #{_nmt_forward.14} parent=0 // pred_check
    _
  $region3: #{_nmt_forward.14} parent=0 // pred_check_branch
    %9 = sbr.rel (0) target = $region5
  $region4: #{_nmt_forward.14} parent=0 // pred_region
    _
  $region5: #{_nmt_forward.14} parent=0 // pred_fallthru
    _
  // Predicated region
  $region6: #{_nmt_forward.14} parent=0 // pred_check
    _
  $region7: #{_nmt_forward.14} parent=0 // pred_check_branch
    %11 = sbr.rel (0) target = $region9
  $region8: #{_nmt_forward.14} parent=0 // pred_region
    _
  $region9: #{_nmt_forward.14} parent=0 // pred_fallthru
    _
  // Predicated region
  $region10: #{_nmt_forward.14} parent=0 // pred_check
    _
  $region11: #{_nmt_forward.14} parent=0 // pred_check_branch
    %13 = sbr.rel (0) target = $region13
  $region12: #{_nmt_forward.14} parent=0 // pred_region
    _
  $region13: #{_nmt_forward.14} parent=0 // pred_fallthru
    _
  %v14 = vld [vmem:[%s0] sm:$0xff]
  %v15 = vld [vmem:[%s0 + $0x8] sm:$0xff]
  %v16 = vld [vmem:[%s0 + $0x10] sm:$0xff]
  %v17 = vld [vmem:[%s0 + $0x18] sm:$0xff]
  %v18 = vld [vmem:[%s0 + $0x20] sm:$0xff]
  %v19 = vld [vmem:[%s0 + $0x28] sm:$0xff]
  %v20 = vld [vmem:[%s0 + $0x30] sm:$0xff]
  %v21 = vld [vmem:[%s1] sm:$0xff]
  %v22 = vld [vmem:[%s1 + $0x8] sm:$0xff]
  %v23 = vld [vmem:[%s1 + $0x10] sm:$0xff]
  %v24 = vld [vmem:[%s1 + $0x18] sm:$0xff]
  %v25 = vld [vmem:[%s1 + $0x20] sm:$0xff]
  %v26 = vld [vmem:[%s1 + $0x28] sm:$0xff]
  %v27 = vld [vmem:[%s1 + $0x30] sm:$0xff]
  %v28 = vld [vmem:[%s1 + $0x38] sm:$0xff]
  %v29 = vld [vmem:[%s1 + $0x40] sm:$0xff]
  %v30 = vld [vmem:[%s1 + $0x48] sm:$0xff]
  %v31 = vld [vmem:[%s1 + $0x50] sm:$0xff]
  %v32 = vld [vmem:[%s1 + $0x58] sm:$0xff]
  %v33 = vld [vmem:[%s1 + $0x60] sm:$0xff]
  %v34 = vld [vmem:[%s1 + $0x68] sm:$0xff]
  %v35 = vld [vmem:[%s1 + $0x70] sm:$0xff]
  %v36 = vld [vmem:[%s1 + $0x78] sm:$0xff]
  %v37 = vld [vmem:[%s1 + $0x80] sm:$0xff]
  %v38 = vld [vmem:[%s1 + $0x88] sm:$0xff]
  %v39 = vld [vmem:[%s1 + $0x90] sm:$0xff]
  %v40 = vld [vmem:[%s1 + $0x98] sm:$0xff]
  %v41 = vld [vmem:[%s1 + $0xa0] sm:$0xff]
  %v42 = vld [vmem:[%s1 + $0xa8] sm:$0xff]
  %v43 = vld [vmem:[%s1 + $0xb0] sm:$0xff]
  %v44 = vld [vmem:[%s1 + $0xb8] sm:$0xff]
  %v45 = vld [vmem:[%s1 + $0xc0] sm:$0xff]
  %v46 = vld [vmem:[%s1 + $0xc8] sm:$0xff]
  %v47 = vld [vmem:[%s1 + $0xd0] sm:$0xff]
  %v48 = vld [vmem:[%s1 + $0xd8] sm:$0xff]
  %v49 = vld [vmem:[%s1 + $0xe0] sm:$0xff]
  %v50 = vld [vmem:[%s1 + $0xe8] sm:$0xff]
  %v51 = vld [vmem:[%s1 + $0xf0] sm:$0xff]
  %v52 = vld [vmem:[%s1 + $0xf8] sm:$0xff]
  %v53 = vld [vmem:[%s1 + $0x100] sm:$0xff]
  %v54 = vld [vmem:[%s1 + $0x108] sm:$0xff]
  %v55 = vld [vmem:[%s1 + $0x110] sm:$0xff]
  %v56 = vld [vmem:[%s1 + $0x118] sm:$0xff]
  %v57 = vld [vmem:[%s1 + $0x120] sm:$0xff]
  %v58 = vld [vmem:[%s1 + $0x128] sm:$0xff]
  %v59 = vld [vmem:[%s1 + $0x130] sm:$0xff]
  %v60 = vld [vmem:[%s1 + $0x138] sm:$0xff]
  %v61 = vld [vmem:[%s1 + $0x140] sm:$0xff]
  %v62 = vld [vmem:[%s1 + $0x148] sm:$0xff]
  %v63 = vld [vmem:[%s1 + $0x150] sm:$0xff]
  %v64 = vld [vmem:[%s1 + $0x158] sm:$0xff]
  %v65 = vld [vmem:[%s1 + $0x160] sm:$0xff]
  %v66 = vld [vmem:[%s1 + $0x168] sm:$0xff]
  %v67 = vld [vmem:[%s1 + $0x170] sm:$0xff]
  %v68 = vld [vmem:[%s1 + $0x178] sm:$0xff]
  %v69 = vld [vmem:[%s2] sm:$0x7]
  %v71 = vlaneseq
  %v72 = vshrl.u32 %v71, 7
  %v73 = vsub.s32 0, %v72
  %v74 = vrot.slane %v69, %v73
  %v75 = vlaneseq
  %v76 = vshrl.u32 %v75, 7
  %v77 = vsub.s32 1, %v76
  %v78 = vrot.slane %v69, %v77
  %v79 = vlaneseq
  %v80 = vshrl.u32 %v79, 7
  %v81 = vsub.s32 2, %v80
  %v82 = vrot.slane %v69, %v81
  %86 = vmatprep.subr.mxu0 %v22
  %87 = vmatpush1.msra.mxu0 %v21
  %88 = vmatprep.subr.mxu0 %v25
  %89 = vmatpush1.msra.mxu0 %v24
  %90 = vmatprep.subr.mxu0 %v28
  %91 = vmatpush1.msra.mxu0 %v27
  %92 = vmatprep.subr.mxu0 %v31
  %93 = vmatpush1.msra.mxu0 %v30
  %94 = vmatprep.subr.mxu0 %v34
  %95 = vmatpush1.msra.mxu0 %v33
  %96 = vmatprep.subr.mxu0 %v37
  %97 = vmatpush1.msra.mxu0 %v36
  %98 = vmatprep.subr.mxu0 %v40
  %99 = vmatpush1.msra.mxu0 %v39
  %100 = vmatprep.subr.mxu0 %v43
  %101 = vmatpush1.msra.mxu0 %v42
  %102 = vmatprep.subr.mxu0 %v46
  %103 = vmatpush1.msra.mxu0 %v45
  %104 = vmatprep.subr.mxu0 %v49
  %105 = vmatpush1.msra.mxu0 %v48
  %106 = vmatprep.subr.mxu0 %v52
  %107 = vmatpush1.msra.mxu0 %v51
  %108 = vmatprep.subr.mxu0 %v55
  %109 = vmatpush1.msra.mxu0 %v54
  %110 = vmatprep.subr.mxu0 %v58
  %111 = vmatpush1.msra.mxu0 %v57
  %112 = vmatprep.subr.mxu0 %v61
  %113 = vmatpush1.msra.mxu0 %v60
  %114 = vmatprep.subr.mxu0 %v64
  %115 = vmatpush1.msra.mxu0 %v63
  %116 = vmatprep.subr.mxu0 %v67
  %117 = vmatpush1.msra.mxu0 %v66
  %118 = vmatprep.subr.mxu0 0.0
  %119 = vmatpush1.msra.mxu0 0.0
  %120 = vmatprep.subr.mxu0 0.0
  %121 = vmatpush1.msra.mxu0 0.0
  %122 = vmatprep.subr.mxu0 0.0
  %123 = vmatpush1.msra.mxu0 0.0
  %124 = vmatprep.subr.mxu0 0.0
  %125 = vmatpush1.msra.mxu0 0.0
  %126 = vmatprep.subr.mxu0 0.0
  %127 = vmatpush1.msra.mxu0 0.0
  %128 = vmatprep.subr.mxu0 0.0
  %129 = vmatpush1.msra.mxu0 0.0
  %130 = vmatprep.subr.mxu0 0.0
  %131 = vmatpush1.msra.mxu0 0.0
  %132 = vmatprep.subr.mxu0 0.0
  %133 = vmatpush1.msra.mxu0 0.0
  %134 = vmatprep.subr.mxu0 0.0
  %135 = vmatpush1.msra.mxu0 0.0
  %136 = vmatprep.subr.mxu0 0.0
  %137 = vmatpush1.msra.mxu0 0.0
  %138 = vmatprep.subr.mxu0 0.0
  %139 = vmatpush1.msra.mxu0 0.0
  %140 = vmatprep.subr.mxu0 0.0
  %141 = vmatpush1.msra.mxu0 0.0
  %142 = vmatprep.subr.mxu0 0.0
  %143 = vmatpush1.msra.mxu0 0.0
  %144 = vmatprep.subr.mxu0 0.0
  %145 = vmatpush1.msra.mxu0 0.0
  %146 = vmatprep.subr.mxu0 0.0
  %147 = vmatpush1.msra.mxu0 0.0
  %148 = vmatprep.subr.mxu0 0.0
  %149 = vmatpush1.msra.mxu0 0.0
  %150 = vmatprep.mubr.f32.mxu0 0.0
  %151 = vmatmul.mubr.f32.gmra.mrb[0].mxu0 %v14
  %v152 = vpop.f32.mrb[0].mxu0
  %v153 = vadd.f32 %v74, %v152
  %v154 = vpop.f32.mrb[0].mxu0
  %v155 = vadd.f32 %v78, %v154
  %156 = vmatprep.mubr.f32.mxu0 0.0
  %157 = vmatmul.mubr.f32.gmra.mrb[0].mxu0 %v15
  %v158 = vpop.f32.mrb[0].mxu0
  %v159 = vadd.f32 %v74, %v158
  %v160 = vpop.f32.mrb[0].mxu0
  %v161 = vadd.f32 %v78, %v160
  %162 = vmatprep.mubr.f32.mxu0 0.0
  %163 = vmatmul.mubr.f32.gmra.mrb[0].mxu0 %v16
  %v164 = vpop.f32.mrb[0].mxu0
  %v165 = vadd.f32 %v74, %v164
  %v166 = vpop.f32.mrb[0].mxu0
  %v167 = vadd.f32 %v78, %v166
  %168 = vmatprep.mubr.f32.mxu0 0.0
  %169 = vmatmul.mubr.f32.gmra.mrb[0].mxu0 %v17
  %v170 = vpop.f32.mrb[0].mxu0
  %v171 = vadd.f32 %v74, %v170
  %v172 = vpop.f32.mrb[0].mxu0
  %v173 = vadd.f32 %v78, %v172
  %174 = vmatprep.mubr.f32.mxu0 0.0
  %175 = vmatmul.mubr.f32.gmra.mrb[0].mxu0 %v18
  %v176 = vpop.f32.mrb[0].mxu0
  %v177 = vadd.f32 %v74, %v176
  %v178 = vpop.f32.mrb[0].mxu0
  %v179 = vadd.f32 %v78, %v178
  %180 = vmatprep.mubr.f32.mxu0 0.0
  %181 = vmatmul.mubr.f32.gmra.mrb[0].mxu0 %v19
  %v182 = vpop.f32.mrb[0].mxu0
  %v183 = vadd.f32 %v74, %v182
  %v184 = vpop.f32.mrb[0].mxu0
  %v185 = vadd.f32 %v78, %v184
  %186 = vmatprep.mubr.f32.mxu0 0.0
  %187 = vmatmul.mubr.f32.gmra.mrb[0].mxu0 %v20
  %v188 = vpop.f32.mrb[0].mxu0
  %v189 = vadd.f32 %v74, %v188
  %v190 = vpop.f32.mrb[0].mxu0
  %v191 = vadd.f32 %v78, %v190
  %192 = vdwg.mxu0
  %193 = vmatprep.subr.mxu0 0.0
  %194 = vmatpush1.msra.mxu0 %v23
  %195 = vmatprep.subr.mxu0 0.0
  %196 = vmatpush1.msra.mxu0 %v26
  %197 = vmatprep.subr.mxu0 0.0
  %198 = vmatpush1.msra.mxu0 %v29
  %199 = vmatprep.subr.mxu0 0.0
  %200 = vmatpush1.msra.mxu0 %v32
  %201 = vmatprep.subr.mxu0 0.0
  %202 = vmatpush1.msra.mxu0 %v35
  %203 = vmatprep.subr.mxu0 0.0
  %204 = vmatpush1.msra.mxu0 %v38
  %205 = vmatprep.subr.mxu0 0.0
  %206 = vmatpush1.msra.mxu0 %v41
  %207 = vmatprep.subr.mxu0 0.0
  %208 = vmatpush1.msra.mxu0 %v44
  %209 = vmatprep.subr.mxu0 0.0
  %210 = vmatpush1.msra.mxu0 %v47
  %211 = vmatprep.subr.mxu0 0.0
  %212 = vmatpush1.msra.mxu0 %v50
  %213 = vmatprep.subr.mxu0 0.0
  %214 = vmatpush1.msra.mxu0 %v53
  %215 = vmatprep.subr.mxu0 0.0
  %216 = vmatpush1.msra.mxu0 %v56
  %217 = vmatprep.subr.mxu0 0.0
  %218 = vmatpush1.msra.mxu0 %v59
  %219 = vmatprep.subr.mxu0 0.0
  %220 = vmatpush1.msra.mxu0 %v62
  %221 = vmatprep.subr.mxu0 0.0
  %222 = vmatpush1.msra.mxu0 %v65
  %223 = vmatprep.subr.mxu0 0.0
  %224 = vmatpush1.msra.mxu0 %v68
  %225 = vmatprep.subr.mxu0 0.0
  %226 = vmatpush1.msra.mxu0 0.0
  %227 = vmatprep.subr.mxu0 0.0
  %228 = vmatpush1.msra.mxu0 0.0
  %229 = vmatprep.subr.mxu0 0.0
  %230 = vmatpush1.msra.mxu0 0.0
  %231 = vmatprep.subr.mxu0 0.0
  %232 = vmatpush1.msra.mxu0 0.0
  %233 = vmatprep.subr.mxu0 0.0
  %234 = vmatpush1.msra.mxu0 0.0
  %235 = vmatprep.subr.mxu0 0.0
  %236 = vmatpush1.msra.mxu0 0.0
  %237 = vmatprep.subr.mxu0 0.0
  %238 = vmatpush1.msra.mxu0 0.0
  %239 = vmatprep.subr.mxu0 0.0
  %240 = vmatpush1.msra.mxu0 0.0
  %241 = vmatprep.subr.mxu0 0.0
  %242 = vmatpush1.msra.mxu0 0.0
  %243 = vmatprep.subr.mxu0 0.0
  %244 = vmatpush1.msra.mxu0 0.0
  %245 = vmatprep.subr.mxu0 0.0
  %246 = vmatpush1.msra.mxu0 0.0
  %247 = vmatprep.subr.mxu0 0.0
  %248 = vmatpush1.msra.mxu0 0.0
  %249 = vmatprep.subr.mxu0 0.0
  %250 = vmatpush1.msra.mxu0 0.0
  %251 = vmatprep.subr.mxu0 0.0
  %252 = vmatpush1.msra.mxu0 0.0
  %253 = vmatprep.subr.mxu0 0.0
  %254 = vmatpush1.msra.mxu0 0.0
  %255 = vmatprep.subr.mxu0 0.0
  %256 = vmatpush1.msra.mxu0 0.0
  %257 = vmatprep.mubr.f32.mxu0 0.0
  %258 = vmatmul.mubr.f32.gmra.mrb[0].mxu0 %v14
  %v259 = vpop.f32.mrb[0].mxu0
  %v260 = vadd.f32 %v82, %v259
  %v261 = vpop.f32.mrb[0].mxu0
  %262 = vmatprep.mubr.f32.mxu0 0.0
  %263 = vmatmul.mubr.f32.gmra.mrb[0].mxu0 %v15
  %v264 = vpop.f32.mrb[0].mxu0
  %v265 = vadd.f32 %v82, %v264
  %v266 = vpop.f32.mrb[0].mxu0
  %267 = vmatprep.mubr.f32.mxu0 0.0
  %268 = vmatmul.mubr.f32.gmra.mrb[0].mxu0 %v16
  %v269 = vpop.f32.mrb[0].mxu0
  %v270 = vadd.f32 %v82, %v269
  %v271 = vpop.f32.mrb[0].mxu0
  %272 = vmatprep.mubr.f32.mxu0 0.0
  %273 = vmatmul.mubr.f32.gmra.mrb[0].mxu0 %v17
  %v274 = vpop.f32.mrb[0].mxu0
  %v275 = vadd.f32 %v82, %v274
  %v276 = vpop.f32.mrb[0].mxu0
  %277 = vmatprep.mubr.f32.mxu0 0.0
  %278 = vmatmul.mubr.f32.gmra.mrb[0].mxu0 %v18
  %v279 = vpop.f32.mrb[0].mxu0
  %v280 = vadd.f32 %v82, %v279
  %v281 = vpop.f32.mrb[0].mxu0
  %282 = vmatprep.mubr.f32.mxu0 0.0
  %283 = vmatmul.mubr.f32.gmra.mrb[0].mxu0 %v19
  %v284 = vpop.f32.mrb[0].mxu0
  %v285 = vadd.f32 %v82, %v284
  %v286 = vpop.f32.mrb[0].mxu0
  %287 = vmatprep.mubr.f32.mxu0 0.0
  %288 = vmatmul.mubr.f32.gmra.mrb[0].mxu0 %v20
  %v289 = vpop.f32.mrb[0].mxu0
  %v290 = vadd.f32 %v82, %v289
  %v291 = vpop.f32.mrb[0].mxu0
  %292 = vdwg.mxu0
  %293 = vst [vmem:[%s3] sm:$0xff] %v153
  %294 = vst [vmem:[%s3 + $0x8] sm:$0xff] %v155
  %295 = vst [vmem:[%s3 + $0x10] sm:$0xff] %v260
  %296 = vst [vmem:[%s3 + $0x18] sm:$0xff] %v159
  %297 = vst [vmem:[%s3 + $0x20] sm:$0xff] %v161
  %298 = vst [vmem:[%s3 + $0x28] sm:$0xff] %v265
  %299 = vst [vmem:[%s3 + $0x30] sm:$0xff] %v165
  %300 = vst [vmem:[%s3 + $0x38] sm:$0xff] %v167
  %301 = vst [vmem:[%s3 + $0x40] sm:$0xff] %v270
  %302 = vst [vmem:[%s3 + $0x48] sm:$0xff] %v171
  %303 = vst [vmem:[%s3 + $0x50] sm:$0xff] %v173
  %304 = vst [vmem:[%s3 + $0x58] sm:$0xff] %v275
  %305 = vst [vmem:[%s3 + $0x60] sm:$0xff] %v177
  %306 = vst [vmem:[%s3 + $0x68] sm:$0xff] %v179
  %307 = vst [vmem:[%s3 + $0x70] sm:$0xff] %v280
  %308 = vst [vmem:[%s3 + $0x78] sm:$0xff] %v183
  %309 = vst [vmem:[%s3 + $0x80] sm:$0xff] %v185
  %310 = vst [vmem:[%s3 + $0x88] sm:$0xff] %v285
  %311 = vst [vmem:[%s3 + $0x90] sm:$0xff] %v189
  %312 = vst [vmem:[%s3 + $0x98] sm:$0xff] %v191
  %313 = vst [vmem:[%s3 + $0xa0] sm:$0xff] %v290
  // Predicated region
  $region14: #{_nmt_forward.14} parent=0 // pred_check
    _
  $region15: #{_nmt_forward.14} parent=0 // pred_check_branch
    %315 = sbr.rel (0) target = $region17
  $region16: #{_nmt_forward.14} parent=0 // pred_region
    _
  $region17: #{_nmt_forward.14} parent=0 // pred_fallthru
    _
  // Predicated region
  $region18: #{_nmt_forward.14} parent=0 // pred_check
    _
  $region19: #{_nmt_forward.14} parent=0 // pred_check_branch
    %317 = sbr.rel (0) target = $region21
  $region20: #{_nmt_forward.14} parent=0 // pred_region
    _
  $region21: #{_nmt_forward.14} parent=0 // pred_fallthru
    _

// kernel: _nmt_forward.15
$region0: #{_nmt_forward.15}
  #allocation0 [shape = 'u32[]', space=smem, size = 0x4, offset = 0x4, fixed_abs, tag = 'smem constant byte address 0x4 - core index']
  #allocation1 [shape = 'u32[144,128]{1,0:T(1,128)}', space=vmem, size = 0x12000, scoped, tag = 'internal scratch']
  #allocation2 [shape = 'f32[8,128]{1,0:T(8,128)}', space=vmem, size = 0x1000, scoped, tag = 'scratch operand']
  %s0 = inlined_call_operand.vmem [shape: f32[7,8,384], index: 0, kind: input, shape index: {}]
  %s1 = inlined_call_operand.vmem [shape: s32[7,8,1], index: 1, kind: input, shape index: {}]
  %s2 = inlined_call_operand.vmem [shape: f32[8,128], index: 2, kind: input, shape index: {}]
  %s3 = inlined_call_operand.vmem [shape: f32[8,8,256], index: 3, kind: input, shape index: {}]
  %s4 = inlined_call_operand.vmem [shape: f32[8,8,128], index: 4, kind: input, shape index: {}]
  %s5 = inlined_call_operand.vmem [shape: f32[8,8,1], index: 5, kind: input, shape index: {}]
  %s6 = inlined_call_operand.vmem [shape: f32[128,384], index: 6, kind: input, shape index: {}]
  %s7 = inlined_call_operand.vmem [shape: f32[1,384], index: 7, kind: input, shape index: {}]
  %s8 = inlined_call_operand.vmem [shape: f32[128,128], index: 8, kind: input, shape index: {}]
  %s9 = inlined_call_operand.vmem [shape: f32[1,128], index: 9, kind: input, shape index: {}]
  %s10 = inlined_call_operand.vmem [shape: f32[256,384], index: 10, kind: input, shape index: {}]
  %s11 = inlined_call_operand.vmem [shape: f32[1,384], index: 11, kind: input, shape index: {}]
  %s12 = inlined_call_operand.vmem [shape: f32[128,384], index: 12, kind: input, shape index: {}]
  %s13 = inlined_call_operand.vmem [shape: f32[1,384], index: 13, kind: input, shape index: {}]
  %s14 = inlined_call_operand.vmem [shape: f32[128,128], index: 14, kind: input, shape index: {}]
  %s15 = inlined_call_operand.vmem [shape: f32[1,128], index: 15, kind: input, shape index: {}]
  %s16 = inlined_call_operand.vmem [shape: f32[128,128], index: 16, kind: input, shape index: {}]
  %s17 = inlined_call_operand.vmem [shape: f32[1,128], index: 17, kind: input, shape index: {}]
  %s18 = inlined_call_operand.hbm [shape: f32[1,1], index: 18, kind: output, shape index: {}]
  %s19 = sld [smem:[#allocation0]]
  $region109: #{_nmt_forward.15} parent=0
    _
  %s21 = ssub.s32 1, %s19
  %s22 = scalar_select 0, %s21, %s19
  $region1: #{_nmt_forward.15} parent=0
    #allocation3 [shape = 'u8[512]{0}', space=vmem, size = 0x400, scoped, tag = 'output window, operand 0, single buffered']
    #allocation4 [shape = 's32[2]{0}', space=sflag, size = 0x8, scoped, tag = 'scoped memory for _nmt_forward.15']
    %23 = vsyncpa [#allocation4], 0
    loop: start=0, step=1, limit=9
    $region2: #{_nmt_forward.15} parent=1 // loop_pre_header
      _
    $region3: #{_nmt_forward.15} parent=1 // loop_header
      %s25 = sphi 0, %s29
      %p26 = scmp.ge.s32.totalorder %s25, 9
      %s35 = sphi 0, %s37
      %s38 = sphi 0, %s35
      %s39 = sphi 0, %s38
      %s55 = sphi 0, %s39
      %s61 = sphi 0, %s63
      %s64 = sphi 0, %s61
      %s65 = sphi 0, %s64
      %s81 = sphi 0, %s65
      %s85 = sphi 0, %s85
      %s87 = sphi 0, %s85
      %s88 = sphi 0, %s87
      %s102 = sphi 0, %s88
      %s106 = sphi 0, %s106
      %s108 = sphi 0, %s106
      %s109 = sphi 0, %s108
      %s123 = sphi 0, %s109
      %s127 = sphi 0, %s127
      %s129 = sphi 0, %s127
      %s130 = sphi 0, %s129
      %s144 = sphi 0, %s130
      %s148 = sphi 0, %s148
      %s150 = sphi 0, %s148
      %s151 = sphi 0, %s150
      %s165 = sphi 0, %s151
      %s169 = sphi 0, %s169
      %s171 = sphi 0, %s169
      %s172 = sphi 0, %s171
      %s186 = sphi 0, %s172
      %s190 = sphi 0, %s190
      %s192 = sphi 0, %s190
      %s193 = sphi 0, %s192
      %s207 = sphi 0, %s193
      %s211 = sphi 0, %s211
      %s213 = sphi 0, %s211
      %s214 = sphi 0, %s213
      %s228 = sphi 0, %s214
      %s232 = sphi 0, %s232
      %s234 = sphi 0, %s232
      %s235 = sphi 0, %s234
      %s249 = sphi 0, %s235
      %s253 = sphi 0, %s253
      %s255 = sphi 0, %s253
      %s256 = sphi 0, %s255
      %s270 = sphi 0, %s256
      %s274 = sphi 0, %s274
      %s276 = sphi 0, %s274
      %s277 = sphi 0, %s276
      %s291 = sphi 0, %s277
      %s295 = sphi 0, %s295
      %s297 = sphi 0, %s295
      %s298 = sphi 0, %s297
      %s312 = sphi 0, %s298
      %s316 = sphi 0, %s316
      %s318 = sphi 0, %s316
      %s319 = sphi 0, %s318
      %s333 = sphi 0, %s319
      %s337 = sphi 0, %s337
      %s339 = sphi 0, %s337
      %s340 = sphi 0, %s339
      %s354 = sphi 0, %s340
      %s358 = sphi 0, %s358
      %s360 = sphi 0, %s358
      %s361 = sphi 0, %s360
      %s375 = sphi 0, %s361
      %s379 = sphi 0, %s379
      %s381 = sphi 0, %s379
      %s382 = sphi 0, %s381
      %s396 = sphi 0, %s382
      %s400 = sphi 0, %s400
      %s402 = sphi 0, %s400
      %s403 = sphi 0, %s402
      %s417 = sphi 0, %s403
      %s421 = sphi 0, %s421
      %s423 = sphi 0, %s421
      %s424 = sphi 0, %s423
      %s438 = sphi 0, %s424
    $region4: #{_nmt_forward.15} parent=1 // loop_header_branch
      %28 = sbr.rel (%p26) target = $region8
    $region5: #{_nmt_forward.15} parent=1 // loop_body
      %s30 = ssub.s32 %s25, 1
      %s31 = ssub.s32 %s25, 2
      %s32 = sadd.s32 %s25, 1
      %s33 = ssub.s32 %s25, %s32
      %p34 = scmp.eq.s32.totalorder %s33, 0
      %s36 = sadd.s32 %s35, 1
      %s37 = scalar_select %p34, %s35, %s36
      %p40 = pneg %p34
      %p41 = scmp.eq.s32.totalorder %s25, 6
      %p42 = por %p40, %p41
      %p43 = scmp.ne.s32.totalorder %s35, %s38
      %p44 = scmp.eq.s32.totalorder %s25, 0
      %p45 = por %p43, %p44
      %p46 = scmp.ne.s32.totalorder %s35, %s38
      %p47 = scmp.eq.s32.totalorder %s30, 6
      %p48 = por %p46, %p47
      %p49 = scmp.ne.s32.totalorder %s38, %s39
      %p50 = scmp.eq.s32.totalorder %s30, 0
      %p51 = por %p49, %p50
      %p52 = scmp.ne.s32.totalorder %s38, %s39
      %p53 = scmp.eq.s32.totalorder %s31, 6
      %p54 = por %p52, %p53
      %p56 = scmp.ne.s32.totalorder %s39, %s55
      %p57 = scmp.eq.s32.totalorder %s31, 0
      %p58 = por %p56, %p57
      %s59 = ssub.s32 %s25, %s32
      %p60 = scmp.eq.s32.totalorder %s59, 0
      %s62 = sadd.s32 %s61, 1
      %s63 = scalar_select %p60, %s61, %s62
      %p66 = pneg %p60
      %p67 = scmp.eq.s32.totalorder %s25, 6
      %p68 = por %p66, %p67
      %p69 = scmp.ne.s32.totalorder %s61, %s64
      %p70 = scmp.eq.s32.totalorder %s25, 0
      %p71 = por %p69, %p70
      %p72 = scmp.ne.s32.totalorder %s61, %s64
      %p73 = scmp.eq.s32.totalorder %s30, 6
      %p74 = por %p72, %p73
      %p75 = scmp.ne.s32.totalorder %s64, %s65
      %p76 = scmp.eq.s32.totalorder %s30, 0
      %p77 = por %p75, %p76
      %p78 = scmp.ne.s32.totalorder %s64, %s65
      %p79 = scmp.eq.s32.totalorder %s31, 6
      %p80 = por %p78, %p79
      %p82 = scmp.ne.s32.totalorder %s65, %s81
      %p83 = scmp.eq.s32.totalorder %s31, 0
      %p84 = por %p82, %p83
      %s86 = sadd.s32 %s85, 1
      %p89 = scmp.eq.s32.totalorder %s25, 6
      %p90 = scmp.ne.s32.totalorder %s85, %s87
      %p91 = scmp.eq.s32.totalorder %s25, 0
      %p92 = por %p90, %p91
      %p93 = scmp.ne.s32.totalorder %s85, %s87
      %p94 = scmp.eq.s32.totalorder %s30, 6
      %p95 = por %p93, %p94
      %p96 = scmp.ne.s32.totalorder %s87, %s88
      %p97 = scmp.eq.s32.totalorder %s30, 0
      %p98 = por %p96, %p97
      %p99 = scmp.ne.s32.totalorder %s87, %s88
      %p100 = scmp.eq.s32.totalorder %s31, 6
      %p101 = por %p99, %p100
      %p103 = scmp.ne.s32.totalorder %s88, %s102
      %p104 = scmp.eq.s32.totalorder %s31, 0
      %p105 = por %p103, %p104
      %s107 = sadd.s32 %s106, 1
      %p110 = scmp.eq.s32.totalorder %s25, 6
      %p111 = scmp.ne.s32.totalorder %s106, %s108
      %p112 = scmp.eq.s32.totalorder %s25, 0
      %p113 = por %p111, %p112
      %p114 = scmp.ne.s32.totalorder %s106, %s108
      %p115 = scmp.eq.s32.totalorder %s30, 6
      %p116 = por %p114, %p115
      %p117 = scmp.ne.s32.totalorder %s108, %s109
      %p118 = scmp.eq.s32.totalorder %s30, 0
      %p119 = por %p117, %p118
      %p120 = scmp.ne.s32.totalorder %s108, %s109
      %p121 = scmp.eq.s32.totalorder %s31, 6
      %p122 = por %p120, %p121
      %p124 = scmp.ne.s32.totalorder %s109, %s123
      %p125 = scmp.eq.s32.totalorder %s31, 0
      %p126 = por %p124, %p125
      %s128 = sadd.s32 %s127, 1
      %p131 = scmp.eq.s32.totalorder %s25, 6
      %p132 = scmp.ne.s32.totalorder %s127, %s129
      %p133 = scmp.eq.s32.totalorder %s25, 0
      %p134 = por %p132, %p133
      %p135 = scmp.ne.s32.totalorder %s127, %s129
      %p136 = scmp.eq.s32.totalorder %s30, 6
      %p137 = por %p135, %p136
      %p138 = scmp.ne.s32.totalorder %s129, %s130
      %p139 = scmp.eq.s32.totalorder %s30, 0
      %p140 = por %p138, %p139
      %p141 = scmp.ne.s32.totalorder %s129, %s130
      %p142 = scmp.eq.s32.totalorder %s31, 6
      %p143 = por %p141, %p142
      %p145 = scmp.ne.s32.totalorder %s130, %s144
      %p146 = scmp.eq.s32.totalorder %s31, 0
      %p147 = por %p145, %p146
      %s149 = sadd.s32 %s148, 1
      %p152 = scmp.eq.s32.totalorder %s25, 6
      %p153 = scmp.ne.s32.totalorder %s148, %s150
      %p154 = scmp.eq.s32.totalorder %s25, 0
      %p155 = por %p153, %p154
      %p156 = scmp.ne.s32.totalorder %s148, %s150
      %p157 = scmp.eq.s32.totalorder %s30, 6
      %p158 = por %p156, %p157
      %p159 = scmp.ne.s32.totalorder %s150, %s151
      %p160 = scmp.eq.s32.totalorder %s30, 0
      %p161 = por %p159, %p160
      %p162 = scmp.ne.s32.totalorder %s150, %s151
      %p163 = scmp.eq.s32.totalorder %s31, 6
      %p164 = por %p162, %p163
      %p166 = scmp.ne.s32.totalorder %s151, %s165
      %p167 = scmp.eq.s32.totalorder %s31, 0
      %p168 = por %p166, %p167
      %s170 = sadd.s32 %s169, 1
      %p173 = scmp.eq.s32.totalorder %s25, 6
      %p174 = scmp.ne.s32.totalorder %s169, %s171
      %p175 = scmp.eq.s32.totalorder %s25, 0
      %p176 = por %p174, %p175
      %p177 = scmp.ne.s32.totalorder %s169, %s171
      %p178 = scmp.eq.s32.totalorder %s30, 6
      %p179 = por %p177, %p178
      %p180 = scmp.ne.s32.totalorder %s171, %s172
      %p181 = scmp.eq.s32.totalorder %s30, 0
      %p182 = por %p180, %p181
      %p183 = scmp.ne.s32.totalorder %s171, %s172
      %p184 = scmp.eq.s32.totalorder %s31, 6
      %p185 = por %p183, %p184
      %p187 = scmp.ne.s32.totalorder %s172, %s186
      %p188 = scmp.eq.s32.totalorder %s31, 0
      %p189 = por %p187, %p188
      %s191 = sadd.s32 %s190, 1
      %p194 = scmp.eq.s32.totalorder %s25, 6
      %p195 = scmp.ne.s32.totalorder %s190, %s192
      %p196 = scmp.eq.s32.totalorder %s25, 0
      %p197 = por %p195, %p196
      %p198 = scmp.ne.s32.totalorder %s190, %s192
      %p199 = scmp.eq.s32.totalorder %s30, 6
      %p200 = por %p198, %p199
      %p201 = scmp.ne.s32.totalorder %s192, %s193
      %p202 = scmp.eq.s32.totalorder %s30, 0
      %p203 = por %p201, %p202
      %p204 = scmp.ne.s32.totalorder %s192, %s193
      %p205 = scmp.eq.s32.totalorder %s31, 6
      %p206 = por %p204, %p205
      %p208 = scmp.ne.s32.totalorder %s193, %s207
      %p209 = scmp.eq.s32.totalorder %s31, 0
      %p210 = por %p208, %p209
      %s212 = sadd.s32 %s211, 1
      %p215 = scmp.eq.s32.totalorder %s25, 6
      %p216 = scmp.ne.s32.totalorder %s211, %s213
      %p217 = scmp.eq.s32.totalorder %s25, 0
      %p218 = por %p216, %p217
      %p219 = scmp.ne.s32.totalorder %s211, %s213
      %p220 = scmp.eq.s32.totalorder %s30, 6
      %p221 = por %p219, %p220
      %p222 = scmp.ne.s32.totalorder %s213, %s214
      %p223 = scmp.eq.s32.totalorder %s30, 0
      %p224 = por %p222, %p223
      %p225 = scmp.ne.s32.totalorder %s213, %s214
      %p226 = scmp.eq.s32.totalorder %s31, 6
      %p227 = por %p225, %p226
      %p229 = scmp.ne.s32.totalorder %s214, %s228
      %p230 = scmp.eq.s32.totalorder %s31, 0
      %p231 = por %p229, %p230
      %s233 = sadd.s32 %s232, 1
      %p236 = scmp.eq.s32.totalorder %s25, 6
      %p237 = scmp.ne.s32.totalorder %s232, %s234
      %p238 = scmp.eq.s32.totalorder %s25, 0
      %p239 = por %p237, %p238
      %p240 = scmp.ne.s32.totalorder %s232, %s234
      %p241 = scmp.eq.s32.totalorder %s30, 6
      %p242 = por %p240, %p241
      %p243 = scmp.ne.s32.totalorder %s234, %s235
      %p244 = scmp.eq.s32.totalorder %s30, 0
      %p245 = por %p243, %p244
      %p246 = scmp.ne.s32.totalorder %s234, %s235
      %p247 = scmp.eq.s32.totalorder %s31, 6
      %p248 = por %p246, %p247
      %p250 = scmp.ne.s32.totalorder %s235, %s249
      %p251 = scmp.eq.s32.totalorder %s31, 0
      %p252 = por %p250, %p251
      %s254 = sadd.s32 %s253, 1
      %p257 = scmp.eq.s32.totalorder %s25, 6
      %p258 = scmp.ne.s32.totalorder %s253, %s255
      %p259 = scmp.eq.s32.totalorder %s25, 0
      %p260 = por %p258, %p259
      %p261 = scmp.ne.s32.totalorder %s253, %s255
      %p262 = scmp.eq.s32.totalorder %s30, 6
      %p263 = por %p261, %p262
      %p264 = scmp.ne.s32.totalorder %s255, %s256
      %p265 = scmp.eq.s32.totalorder %s30, 0
      %p266 = por %p264, %p265
      %p267 = scmp.ne.s32.totalorder %s255, %s256
      %p268 = scmp.eq.s32.totalorder %s31, 6
      %p269 = por %p267, %p268
      %p271 = scmp.ne.s32.totalorder %s256, %s270
      %p272 = scmp.eq.s32.totalorder %s31, 0
      %p273 = por %p271, %p272
      %s275 = sadd.s32 %s274, 1
      %p278 = scmp.eq.s32.totalorder %s25, 6
      %p279 = scmp.ne.s32.totalorder %s274, %s276
      %p280 = scmp.eq.s32.totalorder %s25, 0
      %p281 = por %p279, %p280
      %p282 = scmp.ne.s32.totalorder %s274, %s276
      %p283 = scmp.eq.s32.totalorder %s30, 6
      %p284 = por %p282, %p283
      %p285 = scmp.ne.s32.totalorder %s276, %s277
      %p286 = scmp.eq.s32.totalorder %s30, 0
      %p287 = por %p285, %p286
      %p288 = scmp.ne.s32.totalorder %s276, %s277
      %p289 = scmp.eq.s32.totalorder %s31, 6
      %p290 = por %p288, %p289
      %p292 = scmp.ne.s32.totalorder %s277, %s291
      %p293 = scmp.eq.s32.totalorder %s31, 0
      %p294 = por %p292, %p293
      %s296 = sadd.s32 %s295, 1
      %p299 = scmp.eq.s32.totalorder %s25, 6
      %p300 = scmp.ne.s32.totalorder %s295, %s297
      %p301 = scmp.eq.s32.totalorder %s25, 0
      %p302 = por %p300, %p301
      %p303 = scmp.ne.s32.totalorder %s295, %s297
      %p304 = scmp.eq.s32.totalorder %s30, 6
      %p305 = por %p303, %p304
      %p306 = scmp.ne.s32.totalorder %s297, %s298
      %p307 = scmp.eq.s32.totalorder %s30, 0
      %p308 = por %p306, %p307
      %p309 = scmp.ne.s32.totalorder %s297, %s298
      %p310 = scmp.eq.s32.totalorder %s31, 6
      %p311 = por %p309, %p310
      %p313 = scmp.ne.s32.totalorder %s298, %s312
      %p314 = scmp.eq.s32.totalorder %s31, 0
      %p315 = por %p313, %p314
      %s317 = sadd.s32 %s316, 1
      %p320 = scmp.eq.s32.totalorder %s25, 6
      %p321 = scmp.ne.s32.totalorder %s316, %s318
      %p322 = scmp.eq.s32.totalorder %s25, 0
      %p323 = por %p321, %p322
      %p324 = scmp.ne.s32.totalorder %s316, %s318
      %p325 = scmp.eq.s32.totalorder %s30, 6
      %p326 = por %p324, %p325
      %p327 = scmp.ne.s32.totalorder %s318, %s319
      %p328 = scmp.eq.s32.totalorder %s30, 0
      %p329 = por %p327, %p328
      %p330 = scmp.ne.s32.totalorder %s318, %s319
      %p331 = scmp.eq.s32.totalorder %s31, 6
      %p332 = por %p330, %p331
      %p334 = scmp.ne.s32.totalorder %s319, %s333
      %p335 = scmp.eq.s32.totalorder %s31, 0
      %p336 = por %p334, %p335
      %s338 = sadd.s32 %s337, 1
      %p341 = scmp.eq.s32.totalorder %s25, 6
      %p342 = scmp.ne.s32.totalorder %s337, %s339
      %p343 = scmp.eq.s32.totalorder %s25, 0
      %p344 = por %p342, %p343
      %p345 = scmp.ne.s32.totalorder %s337, %s339
      %p346 = scmp.eq.s32.totalorder %s30, 6
      %p347 = por %p345, %p346
      %p348 = scmp.ne.s32.totalorder %s339, %s340
      %p349 = scmp.eq.s32.totalorder %s30, 0
      %p350 = por %p348, %p349
      %p351 = scmp.ne.s32.totalorder %s339, %s340
      %p352 = scmp.eq.s32.totalorder %s31, 6
      %p353 = por %p351, %p352
      %p355 = scmp.ne.s32.totalorder %s340, %s354
      %p356 = scmp.eq.s32.totalorder %s31, 0
      %p357 = por %p355, %p356
      %s359 = sadd.s32 %s358, 1
      %p362 = scmp.eq.s32.totalorder %s25, 6
      %p363 = scmp.ne.s32.totalorder %s358, %s360
      %p364 = scmp.eq.s32.totalorder %s25, 0
      %p365 = por %p363, %p364
      %p366 = scmp.ne.s32.totalorder %s358, %s360
      %p367 = scmp.eq.s32.totalorder %s30, 6
      %p368 = por %p366, %p367
      %p369 = scmp.ne.s32.totalorder %s360, %s361
      %p370 = scmp.eq.s32.totalorder %s30, 0
      %p371 = por %p369, %p370
      %p372 = scmp.ne.s32.totalorder %s360, %s361
      %p373 = scmp.eq.s32.totalorder %s31, 6
      %p374 = por %p372, %p373
      %p376 = scmp.ne.s32.totalorder %s361, %s375
      %p377 = scmp.eq.s32.totalorder %s31, 0
      %p378 = por %p376, %p377
      %s380 = sadd.s32 %s379, 1
      %p383 = scmp.eq.s32.totalorder %s25, 6
      %p384 = scmp.ne.s32.totalorder %s379, %s381
      %p385 = scmp.eq.s32.totalorder %s25, 0
      %p386 = por %p384, %p385
      %p387 = scmp.ne.s32.totalorder %s379, %s381
      %p388 = scmp.eq.s32.totalorder %s30, 6
      %p389 = por %p387, %p388
      %p390 = scmp.ne.s32.totalorder %s381, %s382
      %p391 = scmp.eq.s32.totalorder %s30, 0
      %p392 = por %p390, %p391
      %p393 = scmp.ne.s32.totalorder %s381, %s382
      %p394 = scmp.eq.s32.totalorder %s31, 6
      %p395 = por %p393, %p394
      %p397 = scmp.ne.s32.totalorder %s382, %s396
      %p398 = scmp.eq.s32.totalorder %s31, 0
      %p399 = por %p397, %p398
      %s401 = sadd.s32 %s400, 1
      %p404 = scmp.eq.s32.totalorder %s25, 6
      %p405 = scmp.ne.s32.totalorder %s400, %s402
      %p406 = scmp.eq.s32.totalorder %s25, 0
      %p407 = por %p405, %p406
      %p408 = scmp.ne.s32.totalorder %s400, %s402
      %p409 = scmp.eq.s32.totalorder %s30, 6
      %p410 = por %p408, %p409
      %p411 = scmp.ne.s32.totalorder %s402, %s403
      %p412 = scmp.eq.s32.totalorder %s30, 0
      %p413 = por %p411, %p412
      %p414 = scmp.ne.s32.totalorder %s402, %s403
      %p415 = scmp.eq.s32.totalorder %s31, 6
      %p416 = por %p414, %p415
      %p418 = scmp.ne.s32.totalorder %s403, %s417
      %p419 = scmp.eq.s32.totalorder %s31, 0
      %p420 = por %p418, %p419
      %s422 = sadd.s32 %s421, 1
      %p425 = scmp.eq.s32.totalorder %s25, 6
      %p426 = scmp.ne.s32.totalorder %s421, %s423
      %p427 = scmp.eq.s32.totalorder %s25, 0
      %p428 = por %p426, %p427
      %p429 = scmp.ne.s32.totalorder %s421, %s423
      %p430 = scmp.eq.s32.totalorder %s30, 6
      %p431 = por %p429, %p430
      %p432 = scmp.ne.s32.totalorder %s423, %s424
      %p433 = scmp.eq.s32.totalorder %s30, 0
      %p434 = por %p432, %p433
      %p435 = scmp.ne.s32.totalorder %s423, %s424
      %p436 = scmp.eq.s32.totalorder %s31, 6
      %p437 = por %p435, %p436
      %p439 = scmp.ne.s32.totalorder %s424, %s438
      %p440 = scmp.eq.s32.totalorder %s31, 0
      %p441 = por %p439, %p440
      %p442 = scmp.le.s32.totalorder 1, %s25
      %p443 = scmp.lt.s32.totalorder %s25, 8
      %p444 = pnand %p442, %p443
      %p445 = pneg %p444
      // Predicated region
      $region9: #{_nmt_forward.15} parent=5 // pred_check
        _
      $region10: #{_nmt_forward.15} parent=5 // pred_check_branch
        %447 = sbr.rel (%p444) target = $region12
      $region11: #{_nmt_forward.15} parent=5 // pred_region
        %s448 = ssub.s32 %s25, 1
        // Predicated region
        $region13: #{_nmt_forward.15} parent=11 // pred_check
          %p449 = pneg %p98
        $region14: #{_nmt_forward.15} parent=11 // pred_check_branch
          %451 = sbr.rel (%p449) target = $region16
        $region15: #{_nmt_forward.15} parent=11 // pred_region
          _
        $region16: #{_nmt_forward.15} parent=11 // pred_fallthru
          _
        // Predicated region
        $region17: #{_nmt_forward.15} parent=11 // pred_check
          %p452 = pneg %p119
        $region18: #{_nmt_forward.15} parent=11 // pred_check_branch
          %454 = sbr.rel (%p452) target = $region20
        $region19: #{_nmt_forward.15} parent=11 // pred_region
          _
        $region20: #{_nmt_forward.15} parent=11 // pred_fallthru
          _
        // Predicated region
        $region21: #{_nmt_forward.15} parent=11 // pred_check
          %p455 = pneg %p140
        $region22: #{_nmt_forward.15} parent=11 // pred_check_branch
          %457 = sbr.rel (%p455) target = $region24
        $region23: #{_nmt_forward.15} parent=11 // pred_region
          _
        $region24: #{_nmt_forward.15} parent=11 // pred_fallthru
          _
        // Predicated region
        $region25: #{_nmt_forward.15} parent=11 // pred_check
          %p458 = pneg %p161
        $region26: #{_nmt_forward.15} parent=11 // pred_check_branch
          %460 = sbr.rel (%p458) target = $region28
        $region27: #{_nmt_forward.15} parent=11 // pred_region
          _
        $region28: #{_nmt_forward.15} parent=11 // pred_fallthru
          _
        // Predicated region
        $region29: #{_nmt_forward.15} parent=11 // pred_check
          %p461 = pneg %p182
        $region30: #{_nmt_forward.15} parent=11 // pred_check_branch
          %463 = sbr.rel (%p461) target = $region32
        $region31: #{_nmt_forward.15} parent=11 // pred_region
          _
        $region32: #{_nmt_forward.15} parent=11 // pred_fallthru
          _
        // Predicated region
        $region33: #{_nmt_forward.15} parent=11 // pred_check
          %p464 = pneg %p203
        $region34: #{_nmt_forward.15} parent=11 // pred_check_branch
          %466 = sbr.rel (%p464) target = $region36
        $region35: #{_nmt_forward.15} parent=11 // pred_region
          _
        $region36: #{_nmt_forward.15} parent=11 // pred_fallthru
          _
        // Predicated region
        $region37: #{_nmt_forward.15} parent=11 // pred_check
          %p467 = pneg %p224
        $region38: #{_nmt_forward.15} parent=11 // pred_check_branch
          %469 = sbr.rel (%p467) target = $region40
        $region39: #{_nmt_forward.15} parent=11 // pred_region
          _
        $region40: #{_nmt_forward.15} parent=11 // pred_fallthru
          _
        // Predicated region
        $region41: #{_nmt_forward.15} parent=11 // pred_check
          %p470 = pneg %p245
        $region42: #{_nmt_forward.15} parent=11 // pred_check_branch
          %472 = sbr.rel (%p470) target = $region44
        $region43: #{_nmt_forward.15} parent=11 // pred_region
          _
        $region44: #{_nmt_forward.15} parent=11 // pred_fallthru
          _
        // Predicated region
        $region45: #{_nmt_forward.15} parent=11 // pred_check
          %p473 = pneg %p266
        $region46: #{_nmt_forward.15} parent=11 // pred_check_branch
          %475 = sbr.rel (%p473) target = $region48
        $region47: #{_nmt_forward.15} parent=11 // pred_region
          _
        $region48: #{_nmt_forward.15} parent=11 // pred_fallthru
          _
        // Predicated region
        $region49: #{_nmt_forward.15} parent=11 // pred_check
          %p476 = pneg %p287
        $region50: #{_nmt_forward.15} parent=11 // pred_check_branch
          %478 = sbr.rel (%p476) target = $region52
        $region51: #{_nmt_forward.15} parent=11 // pred_region
          _
        $region52: #{_nmt_forward.15} parent=11 // pred_fallthru
          _
        // Predicated region
        $region53: #{_nmt_forward.15} parent=11 // pred_check
          %p479 = pneg %p308
        $region54: #{_nmt_forward.15} parent=11 // pred_check_branch
          %481 = sbr.rel (%p479) target = $region56
        $region55: #{_nmt_forward.15} parent=11 // pred_region
          _
        $region56: #{_nmt_forward.15} parent=11 // pred_fallthru
          _
        // Predicated region
        $region57: #{_nmt_forward.15} parent=11 // pred_check
          %p482 = pneg %p329
        $region58: #{_nmt_forward.15} parent=11 // pred_check_branch
          %484 = sbr.rel (%p482) target = $region60
        $region59: #{_nmt_forward.15} parent=11 // pred_region
          _
        $region60: #{_nmt_forward.15} parent=11 // pred_fallthru
          _
        // Predicated region
        $region61: #{_nmt_forward.15} parent=11 // pred_check
          %p485 = pneg %p350
        $region62: #{_nmt_forward.15} parent=11 // pred_check_branch
          %487 = sbr.rel (%p485) target = $region64
        $region63: #{_nmt_forward.15} parent=11 // pred_region
          _
        $region64: #{_nmt_forward.15} parent=11 // pred_fallthru
          _
        // Predicated region
        $region65: #{_nmt_forward.15} parent=11 // pred_check
          %p488 = pneg %p371
        $region66: #{_nmt_forward.15} parent=11 // pred_check_branch
          %490 = sbr.rel (%p488) target = $region68
        $region67: #{_nmt_forward.15} parent=11 // pred_region
          _
        $region68: #{_nmt_forward.15} parent=11 // pred_fallthru
          _
        // Predicated region
        $region69: #{_nmt_forward.15} parent=11 // pred_check
          %p491 = pneg %p392
        $region70: #{_nmt_forward.15} parent=11 // pred_check_branch
          %493 = sbr.rel (%p491) target = $region72
        $region71: #{_nmt_forward.15} parent=11 // pred_region
          _
        $region72: #{_nmt_forward.15} parent=11 // pred_fallthru
          _
        // Predicated region
        $region73: #{_nmt_forward.15} parent=11 // pred_check
          %p494 = pneg %p413
        $region74: #{_nmt_forward.15} parent=11 // pred_check_branch
          %496 = sbr.rel (%p494) target = $region76
        $region75: #{_nmt_forward.15} parent=11 // pred_region
          _
        $region76: #{_nmt_forward.15} parent=11 // pred_fallthru
          _
      $region12: #{_nmt_forward.15} parent=5 // pred_fallthru
        _
      %p497 = scmp.lt.s32.totalorder %s25, 7
      // Predicated region
      $region77: #{_nmt_forward.15} parent=5 // pred_check
        %p498 = pneg %p497
      $region78: #{_nmt_forward.15} parent=5 // pred_check_branch
        %500 = sbr.rel (%p498) target = $region80
      $region79: #{_nmt_forward.15} parent=5 // pred_region
        // Predicated region
        $region81: #{_nmt_forward.15} parent=79 // pred_check
          %p501 = pneg %p45
        $region82: #{_nmt_forward.15} parent=79 // pred_check_branch
          %503 = sbr.rel (%p501) target = $region84
        $region83: #{_nmt_forward.15} parent=79 // pred_region
          %p504 = scmp.lt.s32.totalorder %s25, 6
          %s505 = scalar_select %p504, %s25, 6
          %s506 = smul.addr %s505, 3
          %s507 = smul.addr %s506, 8
          %s508 = scalar_lea.vmem %s0, %s507
        $region84: #{_nmt_forward.15} parent=79 // pred_fallthru
          _
        // Predicated region
        $region85: #{_nmt_forward.15} parent=79 // pred_check
          %p509 = pneg %p71
        $region86: #{_nmt_forward.15} parent=79 // pred_check_branch
          %511 = sbr.rel (%p509) target = $region88
        $region87: #{_nmt_forward.15} parent=79 // pred_region
          %p512 = scmp.lt.s32.totalorder %s25, 6
          %s513 = scalar_select %p512, %s25, 6
          %s514 = smul.addr %s513, 8
          %s515 = scalar_lea.vmem %s1, %s514
        $region88: #{_nmt_forward.15} parent=79 // pred_fallthru
          _
      $region80: #{_nmt_forward.15} parent=5 // pred_fallthru
        _
      %p516 = scmp.le.s32.totalorder 1, %s25
      %p517 = scmp.lt.s32.totalorder %s25, 8
      %p518 = pnand %p516, %p517
      %p519 = pneg %p518
      // Predicated region
      $region89: #{_nmt_forward.15} parent=5 // pred_check
        _
      $region90: #{_nmt_forward.15} parent=5 // pred_check_branch
        %521 = sbr.rel (%p518) target = $region92
      $region91: #{_nmt_forward.15} parent=5 // pred_region
        %s522 = ssub.s32 %s25, 1
        %p523 = scmp.lt.s32.totalorder %s30, 6
        %s524 = scalar_select %p523, %s30, 6
        %s525 = smul.addr %s524, 3
        %s526 = smul.addr %s525, 8
        %s527 = scalar_lea.vmem %s0, %s526
        %p528 = pneg %p51
        %p529 = pneg %p48
        %p530 = scmp.lt.s32.totalorder %s30, 6
        %s531 = scalar_select %p530, %s30, 6
        %s532 = smul.addr %s531, 8
        %s533 = scalar_lea.vmem %s1, %s532
        %p534 = pneg %p77
        %p535 = pneg %p74
        %p536 = pneg %p98
        %p537 = pneg %p95
        %p538 = pneg %p119
        %p539 = pneg %p116
        %p540 = pneg %p140
        %p541 = pneg %p137
        %p542 = pneg %p161
        %p543 = pneg %p158
        %p544 = pneg %p182
        %p545 = pneg %p179
        %p546 = pneg %p203
        %p547 = pneg %p200
        %p548 = pneg %p224
        %p549 = pneg %p221
        %p550 = pneg %p245
        %p551 = pneg %p242
        %p552 = pneg %p266
        %p553 = pneg %p263
        %p554 = pneg %p287
        %p555 = pneg %p284
        %p556 = pneg %p308
        %p557 = pneg %p305
        %p558 = pneg %p329
        %p559 = pneg %p326
        %p560 = pneg %p350
        %p561 = pneg %p347
        %p562 = pneg %p371
        %p563 = pneg %p368
        %p564 = pneg %p392
        %p565 = pneg %p389
        %p566 = pneg %p413
        %p567 = pneg %p410
        %p568 = pneg %p434
        %p569 = pneg %p431
        %p570 = scmp.lt.s32.totalorder %s30, 6
        %s571 = scalar_select %p570, %s30, 6
        %s572 = smul.addr %s571, 3
        %s573 = smul.addr %s572, 8
        %s574 = scalar_lea.vmem %s0, %s573
        %p575 = scmp.lt.s32.totalorder %s30, 6
        %s576 = scalar_select %p575, %s30, 6
        %s577 = smul.addr %s576, 8
        %s578 = scalar_lea.vmem %s1, %s577
        %p579 = scmp.eq.s32.totalorder %s30, 0
        // Predicated region
        $region93: #{_nmt_forward.15} parent=91 // pred_check
          %p580 = pneg %p579
        $region94: #{_nmt_forward.15} parent=91 // pred_check_branch
          %582 = sbr.rel (%p580) target = $region96
        $region95: #{_nmt_forward.15} parent=91 // pred_region
          %v583 = vld [vmem:[%s2] sm:$0xff]
          %584 = vst [vmem:[#allocation2] sm:$0xff] %v583
          %vm585 = vcmask 0
          %586 = vst.msk [vmem:[#allocation3] sm:$0x1] %vm585, 0.0
        $region96: #{_nmt_forward.15} parent=91 // pred_fallthru
          _
        %v587 = vld [vmem:[#allocation2] sm:$0xff]
        %v588 = vld [vmem:[%s574] sm:$0xff]
        %v589 = vld [vmem:[%s574 + $0x8] sm:$0xff]
        %v590 = vld [vmem:[%s574 + $0x10] sm:$0xff]
        %v591 = vld [vmem:[%s6] sm:$0xff]
        %v592 = vld [vmem:[%s6 + $0x8] sm:$0xff]
        %v593 = vld [vmem:[%s6 + $0x10] sm:$0xff]
        %v594 = vld [vmem:[%s6 + $0x18] sm:$0xff]
        %v595 = vld [vmem:[%s6 + $0x20] sm:$0xff]
        %v596 = vld [vmem:[%s6 + $0x28] sm:$0xff]
        %v597 = vld [vmem:[%s6 + $0x30] sm:$0xff]
        %v598 = vld [vmem:[%s6 + $0x38] sm:$0xff]
        %v599 = vld [vmem:[%s6 + $0x40] sm:$0xff]
        %v600 = vld [vmem:[%s6 + $0x48] sm:$0xff]
        %v601 = vld [vmem:[%s6 + $0x50] sm:$0xff]
        %v602 = vld [vmem:[%s6 + $0x58] sm:$0xff]
        %v603 = vld [vmem:[%s6 + $0x60] sm:$0xff]
        %v604 = vld [vmem:[%s6 + $0x68] sm:$0xff]
        %v605 = vld [vmem:[%s6 + $0x70] sm:$0xff]
        %v606 = vld [vmem:[%s6 + $0x78] sm:$0xff]
        %v607 = vld [vmem:[%s6 + $0x80] sm:$0xff]
        %v608 = vld [vmem:[%s6 + $0x88] sm:$0xff]
        %v609 = vld [vmem:[%s6 + $0x90] sm:$0xff]
        %v610 = vld [vmem:[%s6 + $0x98] sm:$0xff]
        %v611 = vld [vmem:[%s6 + $0xa0] sm:$0xff]
        %v612 = vld [vmem:[%s6 + $0xa8] sm:$0xff]
        %v613 = vld [vmem:[%s6 + $0xb0] sm:$0xff]
        %v614 = vld [vmem:[%s6 + $0xb8] sm:$0xff]
        %v615 = vld [vmem:[%s6 + $0xc0] sm:$0xff]
        %v616 = vld [vmem:[%s6 + $0xc8] sm:$0xff]
        %v617 = vld [vmem:[%s6 + $0xd0] sm:$0xff]
        %v618 = vld [vmem:[%s6 + $0xd8] sm:$0xff]
        %v619 = vld [vmem:[%s6 + $0xe0] sm:$0xff]
        %v620 = vld [vmem:[%s6 + $0xe8] sm:$0xff]
        %v621 = vld [vmem:[%s6 + $0xf0] sm:$0xff]
        %v622 = vld [vmem:[%s6 + $0xf8] sm:$0xff]
        %v623 = vld [vmem:[%s6 + $0x100] sm:$0xff]
        %v624 = vld [vmem:[%s6 + $0x108] sm:$0xff]
        %v625 = vld [vmem:[%s6 + $0x110] sm:$0xff]
        %v626 = vld [vmem:[%s6 + $0x118] sm:$0xff]
        %v627 = vld [vmem:[%s6 + $0x120] sm:$0xff]
        %v628 = vld [vmem:[%s6 + $0x128] sm:$0xff]
        %v629 = vld [vmem:[%s6 + $0x130] sm:$0xff]
        %v630 = vld [vmem:[%s6 + $0x138] sm:$0xff]
        %v631 = vld [vmem:[%s6 + $0x140] sm:$0xff]
        %v632 = vld [vmem:[%s6 + $0x148] sm:$0xff]
        %v633 = vld [vmem:[%s6 + $0x150] sm:$0xff]
        %v634 = vld [vmem:[%s6 + $0x158] sm:$0xff]
        %v635 = vld [vmem:[%s6 + $0x160] sm:$0xff]
        %v636 = vld [vmem:[%s6 + $0x168] sm:$0xff]
        %v637 = vld [vmem:[%s6 + $0x170] sm:$0xff]
        %v638 = vld [vmem:[%s6 + $0x178] sm:$0xff]
        %v639 = vld [vmem:[%s7] sm:$0x7]
        %v641 = vlaneseq
        %v642 = vshrl.u32 %v641, 7
        %v643 = vsub.s32 0, %v642
        %v644 = vrot.slane %v639, %v643
        %v645 = vlaneseq
        %v646 = vshrl.u32 %v645, 7
        %v647 = vsub.s32 1, %v646
        %v648 = vrot.slane %v639, %v647
        %v649 = vlaneseq
        %v650 = vshrl.u32 %v649, 7
        %v651 = vsub.s32 2, %v650
        %v652 = vrot.slane %v639, %v651
        %656 = vmatprep.subr.mxu0 %v592
        %657 = vmatpush1.msra.mxu0 %v591
        %658 = vmatprep.subr.mxu0 %v595
        %659 = vmatpush1.msra.mxu0 %v594
        %660 = vmatprep.subr.mxu0 %v598
        %661 = vmatpush1.msra.mxu0 %v597
        %662 = vmatprep.subr.mxu0 %v601
        %663 = vmatpush1.msra.mxu0 %v600
        %664 = vmatprep.subr.mxu0 %v604
        %665 = vmatpush1.msra.mxu0 %v603
        %666 = vmatprep.subr.mxu0 %v607
        %667 = vmatpush1.msra.mxu0 %v606
        %668 = vmatprep.subr.mxu0 %v610
        %669 = vmatpush1.msra.mxu0 %v609
        %670 = vmatprep.subr.mxu0 %v613
        %671 = vmatpush1.msra.mxu0 %v612
        %672 = vmatprep.subr.mxu0 %v616
        %673 = vmatpush1.msra.mxu0 %v615
        %674 = vmatprep.subr.mxu0 %v619
        %675 = vmatpush1.msra.mxu0 %v618
        %676 = vmatprep.subr.mxu0 %v622
        %677 = vmatpush1.msra.mxu0 %v621
        %678 = vmatprep.subr.mxu0 %v625
        %679 = vmatpush1.msra.mxu0 %v624
        %680 = vmatprep.subr.mxu0 %v628
        %681 = vmatpush1.msra.mxu0 %v627
        %682 = vmatprep.subr.mxu0 %v631
        %683 = vmatpush1.msra.mxu0 %v630
        %684 = vmatprep.subr.mxu0 %v634
        %685 = vmatpush1.msra.mxu0 %v633
        %686 = vmatprep.subr.mxu0 %v637
        %687 = vmatpush1.msra.mxu0 %v636
        %688 = vmatprep.subr.mxu0 0.0
        %689 = vmatpush1.msra.mxu0 0.0
        %690 = vmatprep.subr.mxu0 0.0
        %691 = vmatpush1.msra.mxu0 0.0
        %692 = vmatprep.subr.mxu0 0.0
        %693 = vmatpush1.msra.mxu0 0.0
        %694 = vmatprep.subr.mxu0 0.0
        %695 = vmatpush1.msra.mxu0 0.0
        %696 = vmatprep.subr.mxu0 0.0
        %697 = vmatpush1.msra.mxu0 0.0
        %698 = vmatprep.subr.mxu0 0.0
        %699 = vmatpush1.msra.mxu0 0.0
        %700 = vmatprep.subr.mxu0 0.0
        %701 = vmatpush1.msra.mxu0 0.0
        %702 = vmatprep.subr.mxu0 0.0
        %703 = vmatpush1.msra.mxu0 0.0
        %704 = vmatprep.subr.mxu0 0.0
        %705 = vmatpush1.msra.mxu0 0.0
        %706 = vmatprep.subr.mxu0 0.0
        %707 = vmatpush1.msra.mxu0 0.0
        %708 = vmatprep.subr.mxu0 0.0
        %709 = vmatpush1.msra.mxu0 0.0
        %710 = vmatprep.subr.mxu0 0.0
        %711 = vmatpush1.msra.mxu0 0.0
        %712 = vmatprep.subr.mxu0 0.0
        %713 = vmatpush1.msra.mxu0 0.0
        %714 = vmatprep.subr.mxu0 0.0
        %715 = vmatpush1.msra.mxu0 0.0
        %716 = vmatprep.subr.mxu0 0.0
        %717 = vmatpush1.msra.mxu0 0.0
        %718 = vmatprep.subr.mxu0 0.0
        %719 = vmatpush1.msra.mxu0 0.0
        %720 = vmatprep.mubr.f32.mxu0 0.0
        %721 = vmatmul.mubr.f32.gmra.mrb[0].mxu0 %v587
        %v722 = vpop.f32.mrb[0].mxu0
        %v723 = vadd.f32 %v644, %v722
        %v724 = vpop.f32.mrb[0].mxu0
        %v725 = vadd.f32 %v648, %v724
        %726 = vdwg.mxu0
        %727 = vmatprep.subr.mxu0 0.0
        %728 = vmatpush1.msra.mxu0 %v593
        %729 = vmatprep.subr.mxu0 0.0
        %730 = vmatpush1.msra.mxu0 %v596
        %731 = vmatprep.subr.mxu0 0.0
        %732 = vmatpush1.msra.mxu0 %v599
        %733 = vmatprep.subr.mxu0 0.0
        %734 = vmatpush1.msra.mxu0 %v602
        %735 = vmatprep.subr.mxu0 0.0
        %736 = vmatpush1.msra.mxu0 %v605
        %737 = vmatprep.subr.mxu0 0.0
        %738 = vmatpush1.msra.mxu0 %v608
        %739 = vmatprep.subr.mxu0 0.0
        %740 = vmatpush1.msra.mxu0 %v611
        %741 = vmatprep.subr.mxu0 0.0
        %742 = vmatpush1.msra.mxu0 %v614
        %743 = vmatprep.subr.mxu0 0.0
        %744 = vmatpush1.msra.mxu0 %v617
        %745 = vmatprep.subr.mxu0 0.0
        %746 = vmatpush1.msra.mxu0 %v620
        %747 = vmatprep.subr.mxu0 0.0
        %748 = vmatpush1.msra.mxu0 %v623
        %749 = vmatprep.subr.mxu0 0.0
        %750 = vmatpush1.msra.mxu0 %v626
        %751 = vmatprep.subr.mxu0 0.0
        %752 = vmatpush1.msra.mxu0 %v629
        %753 = vmatprep.subr.mxu0 0.0
        %754 = vmatpush1.msra.mxu0 %v632
        %755 = vmatprep.subr.mxu0 0.0
        %756 = vmatpush1.msra.mxu0 %v635
        %757 = vmatprep.subr.mxu0 0.0
        %758 = vmatpush1.msra.mxu0 %v638
        %759 = vmatprep.subr.mxu0 0.0
        %760 = vmatpush1.msra.mxu0 0.0
        %761 = vmatprep.subr.mxu0 0.0
        %762 = vmatpush1.msra.mxu0 0.0
        %763 = vmatprep.subr.mxu0 0.0
        %764 = vmatpush1.msra.mxu0 0.0
        %765 = vmatprep.subr.mxu0 0.0
        %766 = vmatpush1.msra.mxu0 0.0
        %767 = vmatprep.subr.mxu0 0.0
        %768 = vmatpush1.msra.mxu0 0.0
        %769 = vmatprep.subr.mxu0 0.0
        %770 = vmatpush1.msra.mxu0 0.0
        %771 = vmatprep.subr.mxu0 0.0
        %772 = vmatpush1.msra.mxu0 0.0
        %773 = vmatprep.subr.mxu0 0.0
        %774 = vmatpush1.msra.mxu0 0.0
        %775 = vmatprep.subr.mxu0 0.0
        %776 = vmatpush1.msra.mxu0 0.0
        %777 = vmatprep.subr.mxu0 0.0
        %778 = vmatpush1.msra.mxu0 0.0
        %779 = vmatprep.subr.mxu0 0.0
        %780 = vmatpush1.msra.mxu0 0.0
        %781 = vmatprep.subr.mxu0 0.0
        %782 = vmatpush1.msra.mxu0 0.0
        %783 = vmatprep.subr.mxu0 0.0
        %784 = vmatpush1.msra.mxu0 0.0
        %785 = vmatprep.subr.mxu0 0.0
        %786 = vmatpush1.msra.mxu0 0.0
        %787 = vmatprep.subr.mxu0 0.0
        %788 = vmatpush1.msra.mxu0 0.0
        %789 = vmatprep.subr.mxu0 0.0
        %790 = vmatpush1.msra.mxu0 0.0
        %791 = vmatprep.mubr.f32.mxu0 0.0
        %792 = vmatmul.mubr.f32.gmra.mrb[0].mxu0 %v587
        %v793 = vpop.f32.mrb[0].mxu0
        %v794 = vadd.f32 %v652, %v793
        %v795 = vpop.f32.mrb[0].mxu0
        %796 = vdwg.mxu0
        %v797 = vadd.f32 %v588, %v723
        %v798 = vxor.u32 %v797, 2147483648
        %v799 = vmul.f32 %v798, 1.442695
        %v800 = vpow.pop %v799
        %v801 = vadd.f32 %v800, 1.0
        %v802 = vrcp.pop %v801
        %v803 = vmul.f32 1.0, %v802
        %v804 = vadd.f32 %v589, %v725
        %v805 = vxor.u32 %v804, 2147483648
        %v806 = vmul.f32 %v805, 1.442695
        %v807 = vpow.pop %v806
        %v808 = vadd.f32 %v807, 1.0
        %v809 = vrcp.pop %v808
        %v810 = vmul.f32 1.0, %v809
        %v811 = vmul.f32 %v803, %v794
        %v812 = vadd.f32 %v590, %v811
        %v813 = vtanh.pop %v812
        %v814 = vsub.f32 1.0, %v810
        %v815 = vmul.f32 %v814, %v813
        %v816 = vmul.f32 %v810, %v587
        %v817 = vadd.f32 %v815, %v816
        %v818 = vld [vmem:[%s8] sm:$0xff]
        %v819 = vld [vmem:[%s8 + $0x8] sm:$0xff]
        %v820 = vld [vmem:[%s8 + $0x10] sm:$0xff]
        %v821 = vld [vmem:[%s8 + $0x18] sm:$0xff]
        %v822 = vld [vmem:[%s8 + $0x20] sm:$0xff]
        %v823 = vld [vmem:[%s8 + $0x28] sm:$0xff]
        %v824 = vld [vmem:[%s8 + $0x30] sm:$0xff]
        %v825 = vld [vmem:[%s8 + $0x38] sm:$0xff]
        %v826 = vld [vmem:[%s8 + $0x40] sm:$0xff]
        %v827 = vld [vmem:[%s8 + $0x48] sm:$0xff]
        %v828 = vld [vmem:[%s8 + $0x50] sm:$0xff]
        %v829 = vld [vmem:[%s8 + $0x58] sm:$0xff]
        %v830 = vld [vmem:[%s8 + $0x60] sm:$0xff]
        %v831 = vld [vmem:[%s8 + $0x68] sm:$0xff]
        %v832 = vld [vmem:[%s8 + $0x70] sm:$0xff]
        %v833 = vld [vmem:[%s8 + $0x78] sm:$0xff]
        %834 = vmatprep.subr.mxu0 0.0
        %835 = vmatpush1.msra.mxu0 %v818
        %836 = vmatprep.subr.mxu0 0.0
        %837 = vmatpush1.msra.mxu0 %v819
        %838 = vmatprep.subr.mxu0 0.0
        %839 = vmatpush1.msra.mxu0 %v820
        %840 = vmatprep.subr.mxu0 0.0
        %841 = vmatpush1.msra.mxu0 %v821
        %842 = vmatprep.subr.mxu0 0.0
        %843 = vmatpush1.msra.mxu0 %v822
        %844 = vmatprep.subr.mxu0 0.0
        %845 = vmatpush1.msra.mxu0 %v823
        %846 = vmatprep.subr.mxu0 0.0
        %847 = vmatpush1.msra.mxu0 %v824
        %848 = vmatprep.subr.mxu0 0.0
        %849 = vmatpush1.msra.mxu0 %v825
        %850 = vmatprep.subr.mxu0 0.0
        %851 = vmatpush1.msra.mxu0 %v826
        %852 = vmatprep.subr.mxu0 0.0
        %853 = vmatpush1.msra.mxu0 %v827
        %854 = vmatprep.subr.mxu0 0.0
        %855 = vmatpush1.msra.mxu0 %v828
        %856 = vmatprep.subr.mxu0 0.0
        %857 = vmatpush1.msra.mxu0 %v829
        %858 = vmatprep.subr.mxu0 0.0
        %859 = vmatpush1.msra.mxu0 %v830
        %860 = vmatprep.subr.mxu0 0.0
        %861 = vmatpush1.msra.mxu0 %v831
        %862 = vmatprep.subr.mxu0 0.0
        %863 = vmatpush1.msra.mxu0 %v832
        %864 = vmatprep.subr.mxu0 0.0
        %865 = vmatpush1.msra.mxu0 %v833
        %866 = vmatprep.subr.mxu0 0.0
        %867 = vmatpush1.msra.mxu0 0.0
        %868 = vmatprep.subr.mxu0 0.0
        %869 = vmatpush1.msra.mxu0 0.0
        %870 = vmatprep.subr.mxu0 0.0
        %871 = vmatpush1.msra.mxu0 0.0
        %872 = vmatprep.subr.mxu0 0.0
        %873 = vmatpush1.msra.mxu0 0.0
        %874 = vmatprep.subr.mxu0 0.0
        %875 = vmatpush1.msra.mxu0 0.0
        %876 = vmatprep.subr.mxu0 0.0
        %877 = vmatpush1.msra.mxu0 0.0
        %878 = vmatprep.subr.mxu0 0.0
        %879 = vmatpush1.msra.mxu0 0.0
        %880 = vmatprep.subr.mxu0 0.0
        %881 = vmatpush1.msra.mxu0 0.0
        %882 = vmatprep.subr.mxu0 0.0
        %883 = vmatpush1.msra.mxu0 0.0
        %884 = vmatprep.subr.mxu0 0.0
        %885 = vmatpush1.msra.mxu0 0.0
        %886 = vmatprep.subr.mxu0 0.0
        %887 = vmatpush1.msra.mxu0 0.0
        %888 = vmatprep.subr.mxu0 0.0
        %889 = vmatpush1.msra.mxu0 0.0
        %890 = vmatprep.subr.mxu0 0.0
        %891 = vmatpush1.msra.mxu0 0.0
        %892 = vmatprep.subr.mxu0 0.0
        %893 = vmatpush1.msra.mxu0 0.0
        %894 = vmatprep.subr.mxu0 0.0
        %895 = vmatpush1.msra.mxu0 0.0
        %896 = vmatprep.subr.mxu0 0.0
        %897 = vmatpush1.msra.mxu0 0.0
        %898 = vmatprep.mubr.f32.mxu0 0.0
        %899 = vmatmul.mubr.f32.gmra.mrb[0].mxu0 %v817
        %v900 = vpop.f32.mrb[0].mxu0
        %v901 = vadd.f32 0.0, %v900
        %v902 = vpop.f32.mrb[0].mxu0
        %903 = vdwg.mxu0
        %v904 = vld [vmem:[%s9] sm:$0x1]
        %v905 = vld [vmem:[%s4] sm:$0xff]
        %v906 = vadd.f32 %v905, %v901
        %v907 = vtanh.pop %v906
        %v909 = vlaneseq
        %v910 = vshrl.u32 %v909, 7
        %v911 = vsub.s32 0, %v910
        %v912 = vrot.slane %v904, %v911
        %v914 = vmul.f32 %v907, %v912
        %915 = vadd.xlane.f32.xlu0 %v914
        %v916 = vpop.xlane.xlu0 %915
        %v917 = vld [vmem:[%s5] sm:$0xff]
        %vm918 = vcmp.gt.f32.partialorder %v917, 0.0
        %v919 = vsel %vm918, %v916, -1e+08
        %s920 = scalar_lea.vmem %s4, 8
        %v921 = vld [vmem:[%s920] sm:$0xff]
        %v922 = vadd.f32 %v921, %v901
        %v923 = vtanh.pop %v922
        %v924 = vmul.f32 %v923, %v912
        %925 = vadd.xlane.f32.xlu0 %v924
        %v926 = vpop.xlane.xlu0 %925
        %s927 = scalar_lea.vmem %s5, 8
        %v928 = vld [vmem:[%s927] sm:$0xff]
        %vm929 = vcmp.gt.f32.partialorder %v928, 0.0
        %v930 = vsel %vm929, %v926, -1e+08
        %s931 = scalar_lea.vmem %s4, 16
        %v932 = vld [vmem:[%s931] sm:$0xff]
        %v933 = vadd.f32 %v932, %v901
        %v934 = vtanh.pop %v933
        %v935 = vmul.f32 %v934, %v912
        %936 = vadd.xlane.f32.xlu0 %v935
        %v937 = vpop.xlane.xlu0 %936
        %s938 = scalar_lea.vmem %s5, 16
        %v939 = vld [vmem:[%s938] sm:$0xff]
        %vm940 = vcmp.gt.f32.partialorder %v939, 0.0
        %v941 = vsel %vm940, %v937, -1e+08
        %s942 = scalar_lea.vmem %s4, 24
        %v943 = vld [vmem:[%s942] sm:$0xff]
        %v944 = vadd.f32 %v943, %v901
        %v945 = vtanh.pop %v944
        %v946 = vmul.f32 %v945, %v912
        %947 = vadd.xlane.f32.xlu0 %v946
        %v948 = vpop.xlane.xlu0 %947
        %s949 = scalar_lea.vmem %s5, 24
        %v950 = vld [vmem:[%s949] sm:$0xff]
        %vm951 = vcmp.gt.f32.partialorder %v950, 0.0
        %v952 = vsel %vm951, %v948, -1e+08
        %s953 = scalar_lea.vmem %s4, 32
        %v954 = vld [vmem:[%s953] sm:$0xff]
        %v955 = vadd.f32 %v954, %v901
        %v956 = vtanh.pop %v955
        %v957 = vmul.f32 %v956, %v912
        %958 = vadd.xlane.f32.xlu0 %v957
        %v959 = vpop.xlane.xlu0 %958
        %s960 = scalar_lea.vmem %s5, 32
        %v961 = vld [vmem:[%s960] sm:$0xff]
        %vm962 = vcmp.gt.f32.partialorder %v961, 0.0
        %v963 = vsel %vm962, %v959, -1e+08
        %s964 = scalar_lea.vmem %s4, 40
        %v965 = vld [vmem:[%s964] sm:$0xff]
        %v966 = vadd.f32 %v965, %v901
        %v967 = vtanh.pop %v966
        %v968 = vmul.f32 %v967, %v912
        %969 = vadd.xlane.f32.xlu0 %v968
        %v970 = vpop.xlane.xlu0 %969
        %s971 = scalar_lea.vmem %s5, 40
        %v972 = vld [vmem:[%s971] sm:$0xff]
        %vm973 = vcmp.gt.f32.partialorder %v972, 0.0
        %v974 = vsel %vm973, %v970, -1e+08
        %s975 = scalar_lea.vmem %s4, 48
        %v976 = vld [vmem:[%s975] sm:$0xff]
        %v977 = vadd.f32 %v976, %v901
        %v978 = vtanh.pop %v977
        %v979 = vmul.f32 %v978, %v912
        %980 = vadd.xlane.f32.xlu0 %v979
        %v981 = vpop.xlane.xlu0 %980
        %s982 = scalar_lea.vmem %s5, 48
        %v983 = vld [vmem:[%s982] sm:$0xff]
        %vm984 = vcmp.gt.f32.partialorder %v983, 0.0
        %v985 = vsel %vm984, %v981, -1e+08
        %s986 = scalar_lea.vmem %s4, 56
        %v987 = vld [vmem:[%s986] sm:$0xff]
        %v988 = vadd.f32 %v987, %v901
        %v989 = vtanh.pop %v988
        %v990 = vmul.f32 %v989, %v912
        %991 = vadd.xlane.f32.xlu0 %v990
        %v992 = vpop.xlane.xlu0 %991
        %s993 = scalar_lea.vmem %s5, 56
        %v994 = vld [vmem:[%s993] sm:$0xff]
        %vm995 = vcmp.gt.f32.partialorder %v994, 0.0
        %v996 = vsel %vm995, %v992, -1e+08
        %v997 = vmax.f32 %v919, %v930
        %v998 = vmax.f32 %v997, %v941
        %v999 = vmax.f32 %v998, %v952
        %v1000 = vmax.f32 %v999, %v963
        %v1001 = vmax.f32 %v1000, %v974
        %v1002 = vmax.f32 %v1001, %v985
        %v1003 = vmax.f32 %v1002, %v996
        %v1004 = vsub.f32 %v919, %v1003
        %v1005 = vmul.f32 %v1004, 1.442695
        %v1006 = vpow.pop %v1005
        %v1007 = vsub.f32 %v930, %v1003
        %v1008 = vmul.f32 %v1007, 1.442695
        %v1009 = vpow.pop %v1008
        %v1010 = vsub.f32 %v941, %v1003
        %v1011 = vmul.f32 %v1010, 1.442695
        %v1012 = vpow.pop %v1011
        %v1013 = vsub.f32 %v952, %v1003
        %v1014 = vmul.f32 %v1013, 1.442695
        %v1015 = vpow.pop %v1014
        %v1016 = vsub.f32 %v963, %v1003
        %v1017 = vmul.f32 %v1016, 1.442695
        %v1018 = vpow.pop %v1017
        %v1019 = vsub.f32 %v974, %v1003
        %v1020 = vmul.f32 %v1019, 1.442695
        %v1021 = vpow.pop %v1020
        %v1022 = vsub.f32 %v985, %v1003
        %v1023 = vmul.f32 %v1022, 1.442695
        %v1024 = vpow.pop %v1023
        %v1025 = vsub.f32 %v996, %v1003
        %v1026 = vmul.f32 %v1025, 1.442695
        %v1027 = vpow.pop %v1026
        %v1028 = vadd.f32 %v1006, %v1009
        %v1029 = vadd.f32 %v1028, %v1012
        %v1030 = vadd.f32 %v1029, %v1015
        %v1031 = vadd.f32 %v1030, %v1018
        %v1032 = vadd.f32 %v1031, %v1021
        %v1033 = vadd.f32 %v1032, %v1024
        %v1034 = vadd.f32 %v1033, %v1027
        %v1035 = vrcp.pop %v1034
        %v1036 = vmul.f32 1.0, %v1035
        %v1037 = vmul.f32 %v1006, %v1036
        %v1038 = vld [vmem:[%s3] sm:$0xff]
        %v1039 = vld [vmem:[%s3 + $0x8] sm:$0xff]
        %1041 = vset.pattern.permute.xlu0 0
        %1042 = vperm.xlu0 %1041, %v1037
        %v1043 = vpop.permute.xlu0 %1042
        %v1045 = vmul.f32 %v1043, %v1038
        %v1046 = vmul.f32 %v1043, %v1039
        %v1047 = vmul.f32 %v1009, %v1036
        %s1048 = scalar_lea.vmem %s3, 16
        %v1049 = vld [vmem:[%s1048] sm:$0xff]
        %v1050 = vld [vmem:[%s1048 + $0x8] sm:$0xff]
        %1052 = vset.pattern.permute.xlu0 0
        %1053 = vperm.xlu0 %1052, %v1047
        %v1054 = vpop.permute.xlu0 %1053
        %v1056 = vmul.f32 %v1054, %v1049
        %v1057 = vmul.f32 %v1054, %v1050
        %v1058 = vadd.f32 %v1045, %v1056
        %v1059 = vadd.f32 %v1046, %v1057
        %v1060 = vmul.f32 %v1012, %v1036
        %s1061 = scalar_lea.vmem %s3, 32
        %v1062 = vld [vmem:[%s1061] sm:$0xff]
        %v1063 = vld [vmem:[%s1061 + $0x8] sm:$0xff]
        %1065 = vset.pattern.permute.xlu0 0
        %1066 = vperm.xlu0 %1065, %v1060
        %v1067 = vpop.permute.xlu0 %1066
        %v1069 = vmul.f32 %v1067, %v1062
        %v1070 = vmul.f32 %v1067, %v1063
        %v1071 = vadd.f32 %v1058, %v1069
        %v1072 = vadd.f32 %v1059, %v1070
        %v1073 = vmul.f32 %v1015, %v1036
        %s1074 = scalar_lea.vmem %s3, 48
        %v1075 = vld [vmem:[%s1074] sm:$0xff]
        %v1076 = vld [vmem:[%s1074 + $0x8] sm:$0xff]
        %1078 = vset.pattern.permute.xlu0 0
        %1079 = vperm.xlu0 %1078, %v1073
        %v1080 = vpop.permute.xlu0 %1079
        %v1082 = vmul.f32 %v1080, %v1075
        %v1083 = vmul.f32 %v1080, %v1076
        %v1084 = vadd.f32 %v1071, %v1082
        %v1085 = vadd.f32 %v1072, %v1083
        %v1086 = vmul.f32 %v1018, %v1036
        %s1087 = scalar_lea.vmem %s3, 64
        %v1088 = vld [vmem:[%s1087] sm:$0xff]
        %v1089 = vld [vmem:[%s1087 + $0x8] sm:$0xff]
        %1091 = vset.pattern.permute.xlu0 0
        %1092 = vperm.xlu0 %1091, %v1086
        %v1093 = vpop.permute.xlu0 %1092
        %v1095 = vmul.f32 %v1093, %v1088
        %v1096 = vmul.f32 %v1093, %v1089
        %v1097 = vadd.f32 %v1084, %v1095
        %v1098 = vadd.f32 %v1085, %v1096
        %v1099 = vmul.f32 %v1021, %v1036
        %s1100 = scalar_lea.vmem %s3, 80
        %v1101 = vld [vmem:[%s1100] sm:$0xff]
        %v1102 = vld [vmem:[%s1100 + $0x8] sm:$0xff]
        %1104 = vset.pattern.permute.xlu0 0
        %1105 = vperm.xlu0 %1104, %v1099
        %v1106 = vpop.permute.xlu0 %1105
        %v1108 = vmul.f32 %v1106, %v1101
        %v1109 = vmul.f32 %v1106, %v1102
        %v1110 = vadd.f32 %v1097, %v1108
        %v1111 = vadd.f32 %v1098, %v1109
        %v1112 = vmul.f32 %v1024, %v1036
        %s1113 = scalar_lea.vmem %s3, 96
        %v1114 = vld [vmem:[%s1113] sm:$0xff]
        %v1115 = vld [vmem:[%s1113 + $0x8] sm:$0xff]
        %1117 = vset.pattern.permute.xlu0 0
        %1118 = vperm.xlu0 %1117, %v1112
        %v1119 = vpop.permute.xlu0 %1118
        %v1121 = vmul.f32 %v1119, %v1114
        %v1122 = vmul.f32 %v1119, %v1115
        %v1123 = vadd.f32 %v1110, %v1121
        %v1124 = vadd.f32 %v1111, %v1122
        %v1125 = vmul.f32 %v1027, %v1036
        %s1126 = scalar_lea.vmem %s3, 112
        %v1127 = vld [vmem:[%s1126] sm:$0xff]
        %v1128 = vld [vmem:[%s1126 + $0x8] sm:$0xff]
        %1130 = vset.pattern.permute.xlu0 0
        %1131 = vperm.xlu0 %1130, %v1125
        %v1132 = vpop.permute.xlu0 %1131
        %v1134 = vmul.f32 %v1132, %v1127
        %v1135 = vmul.f32 %v1132, %v1128
        %v1136 = vadd.f32 %v1123, %v1134
        %v1137 = vadd.f32 %v1124, %v1135
        %v1138 = vld [vmem:[%s10] sm:$0xff]
        %v1139 = vld [vmem:[%s10 + $0x8] sm:$0xff]
        %v1140 = vld [vmem:[%s10 + $0x10] sm:$0xff]
        %v1141 = vld [vmem:[%s10 + $0x18] sm:$0xff]
        %v1142 = vld [vmem:[%s10 + $0x20] sm:$0xff]
        %v1143 = vld [vmem:[%s10 + $0x28] sm:$0xff]
        %v1144 = vld [vmem:[%s10 + $0x30] sm:$0xff]
        %v1145 = vld [vmem:[%s10 + $0x38] sm:$0xff]
        %v1146 = vld [vmem:[%s10 + $0x40] sm:$0xff]
        %v1147 = vld [vmem:[%s10 + $0x48] sm:$0xff]
        %v1148 = vld [vmem:[%s10 + $0x50] sm:$0xff]
        %v1149 = vld [vmem:[%s10 + $0x58] sm:$0xff]
        %v1150 = vld [vmem:[%s10 + $0x60] sm:$0xff]
        %v1151 = vld [vmem:[%s10 + $0x68] sm:$0xff]
        %v1152 = vld [vmem:[%s10 + $0x70] sm:$0xff]
        %v1153 = vld [vmem:[%s10 + $0x78] sm:$0xff]
        %v1154 = vld [vmem:[%s10 + $0x80] sm:$0xff]
        %v1155 = vld [vmem:[%s10 + $0x88] sm:$0xff]
        %v1156 = vld [vmem:[%s10 + $0x90] sm:$0xff]
        %v1157 = vld [vmem:[%s10 + $0x98] sm:$0xff]
        %v1158 = vld [vmem:[%s10 + $0xa0] sm:$0xff]
        %v1159 = vld [vmem:[%s10 + $0xa8] sm:$0xff]
        %v1160 = vld [vmem:[%s10 + $0xb0] sm:$0xff]
        %v1161 = vld [vmem:[%s10 + $0xb8] sm:$0xff]
        %v1162 = vld [vmem:[%s10 + $0xc0] sm:$0xff]
        %v1163 = vld [vmem:[%s10 + $0xc8] sm:$0xff]
        %v1164 = vld [vmem:[%s10 + $0xd0] sm:$0xff]
        %v1165 = vld [vmem:[%s10 + $0xd8] sm:$0xff]
        %v1166 = vld [vmem:[%s10 + $0xe0] sm:$0xff]
        %v1167 = vld [vmem:[%s10 + $0xe8] sm:$0xff]
        %v1168 = vld [vmem:[%s10 + $0xf0] sm:$0xff]
        %v1169 = vld [vmem:[%s10 + $0xf8] sm:$0xff]
        %v1170 = vld [vmem:[%s10 + $0x100] sm:$0xff]
        %v1171 = vld [vmem:[%s10 + $0x108] sm:$0xff]
        %v1172 = vld [vmem:[%s10 + $0x110] sm:$0xff]
        %v1173 = vld [vmem:[%s10 + $0x118] sm:$0xff]
        %v1174 = vld [vmem:[%s10 + $0x120] sm:$0xff]
        %v1175 = vld [vmem:[%s10 + $0x128] sm:$0xff]
        %v1176 = vld [vmem:[%s10 + $0x130] sm:$0xff]
        %v1177 = vld [vmem:[%s10 + $0x138] sm:$0xff]
        %v1178 = vld [vmem:[%s10 + $0x140] sm:$0xff]
        %v1179 = vld [vmem:[%s10 + $0x148] sm:$0xff]
        %v1180 = vld [vmem:[%s10 + $0x150] sm:$0xff]
        %v1181 = vld [vmem:[%s10 + $0x158] sm:$0xff]
        %v1182 = vld [vmem:[%s10 + $0x160] sm:$0xff]
        %v1183 = vld [vmem:[%s10 + $0x168] sm:$0xff]
        %v1184 = vld [vmem:[%s10 + $0x170] sm:$0xff]
        %v1185 = vld [vmem:[%s10 + $0x178] sm:$0xff]
        %v1186 = vld [vmem:[%s10 + $0x180] sm:$0xff]
        %v1187 = vld [vmem:[%s10 + $0x188] sm:$0xff]
        %v1188 = vld [vmem:[%s10 + $0x190] sm:$0xff]
        %v1189 = vld [vmem:[%s10 + $0x198] sm:$0xff]
        %v1190 = vld [vmem:[%s10 + $0x1a0] sm:$0xff]
        %v1191 = vld [vmem:[%s10 + $0x1a8] sm:$0xff]
        %v1192 = vld [vmem:[%s10 + $0x1b0] sm:$0xff]
        %v1193 = vld [vmem:[%s10 + $0x1b8] sm:$0xff]
        %v1194 = vld [vmem:[%s10 + $0x1c0] sm:$0xff]
        %v1195 = vld [vmem:[%s10 + $0x1c8] sm:$0xff]
        %v1196 = vld [vmem:[%s10 + $0x1d0] sm:$0xff]
        %v1197 = vld [vmem:[%s10 + $0x1d8] sm:$0xff]
        %v1198 = vld [vmem:[%s10 + $0x1e0] sm:$0xff]
        %v1199 = vld [vmem:[%s10 + $0x1e8] sm:$0xff]
        %v1200 = vld [vmem:[%s10 + $0x1f0] sm:$0xff]
        %v1201 = vld [vmem:[%s10 + $0x1f8] sm:$0xff]
        %v1202 = vld [vmem:[%s10 + $0x200] sm:$0xff]
        %v1203 = vld [vmem:[%s10 + $0x208] sm:$0xff]
        %v1204 = vld [vmem:[%s10 + $0x210] sm:$0xff]
        %v1205 = vld [vmem:[%s10 + $0x218] sm:$0xff]
        %v1206 = vld [vmem:[%s10 + $0x220] sm:$0xff]
        %v1207 = vld [vmem:[%s10 + $0x228] sm:$0xff]
        %v1208 = vld [vmem:[%s10 + $0x230] sm:$0xff]
        %v1209 = vld [vmem:[%s10 + $0x238] sm:$0xff]
        %v1210 = vld [vmem:[%s10 + $0x240] sm:$0xff]
        %v1211 = vld [vmem:[%s10 + $0x248] sm:$0xff]
        %v1212 = vld [vmem:[%s10 + $0x250] sm:$0xff]
        %v1213 = vld [vmem:[%s10 + $0x258] sm:$0xff]
        %v1214 = vld [vmem:[%s10 + $0x260] sm:$0xff]
        %v1215 = vld [vmem:[%s10 + $0x268] sm:$0xff]
        %v1216 = vld [vmem:[%s10 + $0x270] sm:$0xff]
        %v1217 = vld [vmem:[%s10 + $0x278] sm:$0xff]
        %v1218 = vld [vmem:[%s10 + $0x280] sm:$0xff]
        %v1219 = vld [vmem:[%s10 + $0x288] sm:$0xff]
        %v1220 = vld [vmem:[%s10 + $0x290] sm:$0xff]
        %v1221 = vld [vmem:[%s10 + $0x298] sm:$0xff]
        %v1222 = vld [vmem:[%s10 + $0x2a0] sm:$0xff]
        %v1223 = vld [vmem:[%s10 + $0x2a8] sm:$0xff]
        %v1224 = vld [vmem:[%s10 + $0x2b0] sm:$0xff]
        %v1225 = vld [vmem:[%s10 + $0x2b8] sm:$0xff]
        %v1226 = vld [vmem:[%s10 + $0x2c0] sm:$0xff]
        %v1227 = vld [vmem:[%s10 + $0x2c8] sm:$0xff]
        %v1228 = vld [vmem:[%s10 + $0x2d0] sm:$0xff]
        %v1229 = vld [vmem:[%s10 + $0x2d8] sm:$0xff]
        %v1230 = vld [vmem:[%s10 + $0x2e0] sm:$0xff]
        %v1231 = vld [vmem:[%s10 + $0x2e8] sm:$0xff]
        %v1232 = vld [vmem:[%s10 + $0x2f0] sm:$0xff]
        %v1233 = vld [vmem:[%s10 + $0x2f8] sm:$0xff]
        %v1234 = vld [vmem:[%s11] sm:$0x7]
        %v1236 = vlaneseq
        %v1237 = vshrl.u32 %v1236, 7
        %v1238 = vsub.s32 0, %v1237
        %v1239 = vrot.slane %v1234, %v1238
        %v1240 = vlaneseq
        %v1241 = vshrl.u32 %v1240, 7
        %v1242 = vsub.s32 1, %v1241
        %v1243 = vrot.slane %v1234, %v1242
        %v1244 = vlaneseq
        %v1245 = vshrl.u32 %v1244, 7
        %v1246 = vsub.s32 2, %v1245
        %v1247 = vrot.slane %v1234, %v1246
        %1251 = vmatprep.subr.mxu0 %v1139
        %1252 = vmatpush1.msra.mxu0 %v1138
        %1253 = vmatprep.subr.mxu0 %v1142
        %1254 = vmatpush1.msra.mxu0 %v1141
        %1255 = vmatprep.subr.mxu0 %v1145
        %1256 = vmatpush1.msra.mxu0 %v1144
        %1257 = vmatprep.subr.mxu0 %v1148
        %1258 = vmatpush1.msra.mxu0 %v1147
        %1259 = vmatprep.subr.mxu0 %v1151
        %1260 = vmatpush1.msra.mxu0 %v1150
        %1261 = vmatprep.subr.mxu0 %v1154
        %1262 = vmatpush1.msra.mxu0 %v1153
        %1263 = vmatprep.subr.mxu0 %v1157
        %1264 = vmatpush1.msra.mxu0 %v1156
        %1265 = vmatprep.subr.mxu0 %v1160
        %1266 = vmatpush1.msra.mxu0 %v1159
        %1267 = vmatprep.subr.mxu0 %v1163
        %1268 = vmatpush1.msra.mxu0 %v1162
        %1269 = vmatprep.subr.mxu0 %v1166
        %1270 = vmatpush1.msra.mxu0 %v1165
        %1271 = vmatprep.subr.mxu0 %v1169
        %1272 = vmatpush1.msra.mxu0 %v1168
        %1273 = vmatprep.subr.mxu0 %v1172
        %1274 = vmatpush1.msra.mxu0 %v1171
        %1275 = vmatprep.subr.mxu0 %v1175
        %1276 = vmatpush1.msra.mxu0 %v1174
        %1277 = vmatprep.subr.mxu0 %v1178
        %1278 = vmatpush1.msra.mxu0 %v1177
        %1279 = vmatprep.subr.mxu0 %v1181
        %1280 = vmatpush1.msra.mxu0 %v1180
        %1281 = vmatprep.subr.mxu0 %v1184
        %1282 = vmatpush1.msra.mxu0 %v1183
        %1283 = vmatprep.subr.mxu0 %v1187
        %1284 = vmatpush1.msra.mxu0 %v1186
        %1285 = vmatprep.subr.mxu0 %v1190
        %1286 = vmatpush1.msra.mxu0 %v1189
        %1287 = vmatprep.subr.mxu0 %v1193
        %1288 = vmatpush1.msra.mxu0 %v1192
        %1289 = vmatprep.subr.mxu0 %v1196
        %1290 = vmatpush1.msra.mxu0 %v1195
        %1291 = vmatprep.subr.mxu0 %v1199
        %1292 = vmatpush1.msra.mxu0 %v1198
        %1293 = vmatprep.subr.mxu0 %v1202
        %1294 = vmatpush1.msra.mxu0 %v1201
        %1295 = vmatprep.subr.mxu0 %v1205
        %1296 = vmatpush1.msra.mxu0 %v1204
        %1297 = vmatprep.subr.mxu0 %v1208
        %1298 = vmatpush1.msra.mxu0 %v1207
        %1299 = vmatprep.subr.mxu0 %v1211
        %1300 = vmatpush1.msra.mxu0 %v1210
        %1301 = vmatprep.subr.mxu0 %v1214
        %1302 = vmatpush1.msra.mxu0 %v1213
        %1303 = vmatprep.subr.mxu0 %v1217
        %1304 = vmatpush1.msra.mxu0 %v1216
        %1305 = vmatprep.subr.mxu0 %v1220
        %1306 = vmatpush1.msra.mxu0 %v1219
        %1307 = vmatprep.subr.mxu0 %v1223
        %1308 = vmatpush1.msra.mxu0 %v1222
        %1309 = vmatprep.subr.mxu0 %v1226
        %1310 = vmatpush1.msra.mxu0 %v1225
        %1311 = vmatprep.subr.mxu0 %v1229
        %1312 = vmatpush1.msra.mxu0 %v1228
        %1313 = vmatprep.subr.mxu0 %v1232
        %1314 = vmatpush1.msra.mxu0 %v1231
        %1315 = vmatprep.mubr.f32.mxu0 %v1137
        %1316 = vmatmul.mubr.f32.gmra.mrb[0].mxu0 %v1136
        %v1317 = vpop.f32.mrb[0].mxu0
        %v1318 = vadd.f32 %v1239, %v1317
        %v1319 = vpop.f32.mrb[0].mxu0
        %v1320 = vadd.f32 %v1243, %v1319
        %1321 = vdwg.mxu0
        %1322 = vmatprep.subr.mxu0 0.0
        %1323 = vmatpush1.msra.mxu0 %v1140
        %1324 = vmatprep.subr.mxu0 0.0
        %1325 = vmatpush1.msra.mxu0 %v1143
        %1326 = vmatprep.subr.mxu0 0.0
        %1327 = vmatpush1.msra.mxu0 %v1146
        %1328 = vmatprep.subr.mxu0 0.0
        %1329 = vmatpush1.msra.mxu0 %v1149
        %1330 = vmatprep.subr.mxu0 0.0
        %1331 = vmatpush1.msra.mxu0 %v1152
        %1332 = vmatprep.subr.mxu0 0.0
        %1333 = vmatpush1.msra.mxu0 %v1155
        %1334 = vmatprep.subr.mxu0 0.0
        %1335 = vmatpush1.msra.mxu0 %v1158
        %1336 = vmatprep.subr.mxu0 0.0
        %1337 = vmatpush1.msra.mxu0 %v1161
        %1338 = vmatprep.subr.mxu0 0.0
        %1339 = vmatpush1.msra.mxu0 %v1164
        %1340 = vmatprep.subr.mxu0 0.0
        %1341 = vmatpush1.msra.mxu0 %v1167
        %1342 = vmatprep.subr.mxu0 0.0
        %1343 = vmatpush1.msra.mxu0 %v1170
        %1344 = vmatprep.subr.mxu0 0.0
        %1345 = vmatpush1.msra.mxu0 %v1173
        %1346 = vmatprep.subr.mxu0 0.0
        %1347 = vmatpush1.msra.mxu0 %v1176
        %1348 = vmatprep.subr.mxu0 0.0
        %1349 = vmatpush1.msra.mxu0 %v1179
        %1350 = vmatprep.subr.mxu0 0.0
        %1351 = vmatpush1.msra.mxu0 %v1182
        %1352 = vmatprep.subr.mxu0 0.0
        %1353 = vmatpush1.msra.mxu0 %v1185
        %1354 = vmatprep.subr.mxu0 0.0
        %1355 = vmatpush1.msra.mxu0 %v1188
        %1356 = vmatprep.subr.mxu0 0.0
        %1357 = vmatpush1.msra.mxu0 %v1191
        %1358 = vmatprep.subr.mxu0 0.0
        %1359 = vmatpush1.msra.mxu0 %v1194
        %1360 = vmatprep.subr.mxu0 0.0
        %1361 = vmatpush1.msra.mxu0 %v1197
        %1362 = vmatprep.subr.mxu0 0.0
        %1363 = vmatpush1.msra.mxu0 %v1200
        %1364 = vmatprep.subr.mxu0 0.0
        %1365 = vmatpush1.msra.mxu0 %v1203
        %1366 = vmatprep.subr.mxu0 0.0
        %1367 = vmatpush1.msra.mxu0 %v1206
        %1368 = vmatprep.subr.mxu0 0.0
        %1369 = vmatpush1.msra.mxu0 %v1209
        %1370 = vmatprep.subr.mxu0 0.0
        %1371 = vmatpush1.msra.mxu0 %v1212
        %1372 = vmatprep.subr.mxu0 0.0
        %1373 = vmatpush1.msra.mxu0 %v1215
        %1374 = vmatprep.subr.mxu0 0.0
        %1375 = vmatpush1.msra.mxu0 %v1218
        %1376 = vmatprep.subr.mxu0 0.0
        %1377 = vmatpush1.msra.mxu0 %v1221
        %1378 = vmatprep.subr.mxu0 0.0
        %1379 = vmatpush1.msra.mxu0 %v1224
        %1380 = vmatprep.subr.mxu0 0.0
        %1381 = vmatpush1.msra.mxu0 %v1227
        %1382 = vmatprep.subr.mxu0 0.0
        %1383 = vmatpush1.msra.mxu0 %v1230
        %1384 = vmatprep.subr.mxu0 0.0
        %1385 = vmatpush1.msra.mxu0 %v1233
        %1386 = vmatprep.mubr.f32.mxu0 %v1137
        %1387 = vmatmul.mubr.f32.gmra.mrb[0].mxu0 %v1136
        %v1388 = vpop.f32.mrb[0].mxu0
        %v1389 = vadd.f32 %v1247, %v1388
        %v1390 = vpop.f32.mrb[0].mxu0
        %1391 = vdwg.mxu0
        %v1392 = vld [vmem:[%s12] sm:$0xff]
        %v1393 = vld [vmem:[%s12 + $0x8] sm:$0xff]
        %v1394 = vld [vmem:[%s12 + $0x10] sm:$0xff]
        %v1395 = vld [vmem:[%s12 + $0x18] sm:$0xff]
        %v1396 = vld [vmem:[%s12 + $0x20] sm:$0xff]
        %v1397 = vld [vmem:[%s12 + $0x28] sm:$0xff]
        %v1398 = vld [vmem:[%s12 + $0x30] sm:$0xff]
        %v1399 = vld [vmem:[%s12 + $0x38] sm:$0xff]
        %v1400 = vld [vmem:[%s12 + $0x40] sm:$0xff]
        %v1401 = vld [vmem:[%s12 + $0x48] sm:$0xff]
        %v1402 = vld [vmem:[%s12 + $0x50] sm:$0xff]
        %v1403 = vld [vmem:[%s12 + $0x58] sm:$0xff]
        %v1404 = vld [vmem:[%s12 + $0x60] sm:$0xff]
        %v1405 = vld [vmem:[%s12 + $0x68] sm:$0xff]
        %v1406 = vld [vmem:[%s12 + $0x70] sm:$0xff]
        %v1407 = vld [vmem:[%s12 + $0x78] sm:$0xff]
        %v1408 = vld [vmem:[%s12 + $0x80] sm:$0xff]
        %v1409 = vld [vmem:[%s12 + $0x88] sm:$0xff]
        %v1410 = vld [vmem:[%s12 + $0x90] sm:$0xff]
        %v1411 = vld [vmem:[%s12 + $0x98] sm:$0xff]
        %v1412 = vld [vmem:[%s12 + $0xa0] sm:$0xff]
        %v1413 = vld [vmem:[%s12 + $0xa8] sm:$0xff]
        %v1414 = vld [vmem:[%s12 + $0xb0] sm:$0xff]
        %v1415 = vld [vmem:[%s12 + $0xb8] sm:$0xff]
        %v1416 = vld [vmem:[%s12 + $0xc0] sm:$0xff]
        %v1417 = vld [vmem:[%s12 + $0xc8] sm:$0xff]
        %v1418 = vld [vmem:[%s12 + $0xd0] sm:$0xff]
        %v1419 = vld [vmem:[%s12 + $0xd8] sm:$0xff]
        %v1420 = vld [vmem:[%s12 + $0xe0] sm:$0xff]
        %v1421 = vld [vmem:[%s12 + $0xe8] sm:$0xff]
        %v1422 = vld [vmem:[%s12 + $0xf0] sm:$0xff]
        %v1423 = vld [vmem:[%s12 + $0xf8] sm:$0xff]
        %v1424 = vld [vmem:[%s12 + $0x100] sm:$0xff]
        %v1425 = vld [vmem:[%s12 + $0x108] sm:$0xff]
        %v1426 = vld [vmem:[%s12 + $0x110] sm:$0xff]
        %v1427 = vld [vmem:[%s12 + $0x118] sm:$0xff]
        %v1428 = vld [vmem:[%s12 + $0x120] sm:$0xff]
        %v1429 = vld [vmem:[%s12 + $0x128] sm:$0xff]
        %v1430 = vld [vmem:[%s12 + $0x130] sm:$0xff]
        %v1431 = vld [vmem:[%s12 + $0x138] sm:$0xff]
        %v1432 = vld [vmem:[%s12 + $0x140] sm:$0xff]
        %v1433 = vld [vmem:[%s12 + $0x148] sm:$0xff]
        %v1434 = vld [vmem:[%s12 + $0x150] sm:$0xff]
        %v1435 = vld [vmem:[%s12 + $0x158] sm:$0xff]
        %v1436 = vld [vmem:[%s12 + $0x160] sm:$0xff]
        %v1437 = vld [vmem:[%s12 + $0x168] sm:$0xff]
        %v1438 = vld [vmem:[%s12 + $0x170] sm:$0xff]
        %v1439 = vld [vmem:[%s12 + $0x178] sm:$0xff]
        %v1440 = vld [vmem:[%s13] sm:$0x7]
        %v1442 = vlaneseq
        %v1443 = vshrl.u32 %v1442, 7
        %v1444 = vsub.s32 0, %v1443
        %v1445 = vrot.slane %v1440, %v1444
        %v1446 = vlaneseq
        %v1447 = vshrl.u32 %v1446, 7
        %v1448 = vsub.s32 1, %v1447
        %v1449 = vrot.slane %v1440, %v1448
        %v1450 = vlaneseq
        %v1451 = vshrl.u32 %v1450, 7
        %v1452 = vsub.s32 2, %v1451
        %v1453 = vrot.slane %v1440, %v1452
        %1457 = vmatprep.subr.mxu0 %v1393
        %1458 = vmatpush1.msra.mxu0 %v1392
        %1459 = vmatprep.subr.mxu0 %v1396
        %1460 = vmatpush1.msra.mxu0 %v1395
        %1461 = vmatprep.subr.mxu0 %v1399
        %1462 = vmatpush1.msra.mxu0 %v1398
        %1463 = vmatprep.subr.mxu0 %v1402
        %1464 = vmatpush1.msra.mxu0 %v1401
        %1465 = vmatprep.subr.mxu0 %v1405
        %1466 = vmatpush1.msra.mxu0 %v1404
        %1467 = vmatprep.subr.mxu0 %v1408
        %1468 = vmatpush1.msra.mxu0 %v1407
        %1469 = vmatprep.subr.mxu0 %v1411
        %1470 = vmatpush1.msra.mxu0 %v1410
        %1471 = vmatprep.subr.mxu0 %v1414
        %1472 = vmatpush1.msra.mxu0 %v1413
        %1473 = vmatprep.subr.mxu0 %v1417
        %1474 = vmatpush1.msra.mxu0 %v1416
        %1475 = vmatprep.subr.mxu0 %v1420
        %1476 = vmatpush1.msra.mxu0 %v1419
        %1477 = vmatprep.subr.mxu0 %v1423
        %1478 = vmatpush1.msra.mxu0 %v1422
        %1479 = vmatprep.subr.mxu0 %v1426
        %1480 = vmatpush1.msra.mxu0 %v1425
        %1481 = vmatprep.subr.mxu0 %v1429
        %1482 = vmatpush1.msra.mxu0 %v1428
        %1483 = vmatprep.subr.mxu0 %v1432
        %1484 = vmatpush1.msra.mxu0 %v1431
        %1485 = vmatprep.subr.mxu0 %v1435
        %1486 = vmatpush1.msra.mxu0 %v1434
        %1487 = vmatprep.subr.mxu0 %v1438
        %1488 = vmatpush1.msra.mxu0 %v1437
        %1489 = vmatprep.subr.mxu0 0.0
        %1490 = vmatpush1.msra.mxu0 0.0
        %1491 = vmatprep.subr.mxu0 0.0
        %1492 = vmatpush1.msra.mxu0 0.0
        %1493 = vmatprep.subr.mxu0 0.0
        %1494 = vmatpush1.msra.mxu0 0.0
        %1495 = vmatprep.subr.mxu0 0.0
        %1496 = vmatpush1.msra.mxu0 0.0
        %1497 = vmatprep.subr.mxu0 0.0
        %1498 = vmatpush1.msra.mxu0 0.0
        %1499 = vmatprep.subr.mxu0 0.0
        %1500 = vmatpush1.msra.mxu0 0.0
        %1501 = vmatprep.subr.mxu0 0.0
        %1502 = vmatpush1.msra.mxu0 0.0
        %1503 = vmatprep.subr.mxu0 0.0
        %1504 = vmatpush1.msra.mxu0 0.0
        %1505 = vmatprep.subr.mxu0 0.0
        %1506 = vmatpush1.msra.mxu0 0.0
        %1507 = vmatprep.subr.mxu0 0.0
        %1508 = vmatpush1.msra.mxu0 0.0
        %1509 = vmatprep.subr.mxu0 0.0
        %1510 = vmatpush1.msra.mxu0 0.0
        %1511 = vmatprep.subr.mxu0 0.0
        %1512 = vmatpush1.msra.mxu0 0.0
        %1513 = vmatprep.subr.mxu0 0.0
        %1514 = vmatpush1.msra.mxu0 0.0
        %1515 = vmatprep.subr.mxu0 0.0
        %1516 = vmatpush1.msra.mxu0 0.0
        %1517 = vmatprep.subr.mxu0 0.0
        %1518 = vmatpush1.msra.mxu0 0.0
        %1519 = vmatprep.subr.mxu0 0.0
        %1520 = vmatpush1.msra.mxu0 0.0
        %1521 = vmatprep.mubr.f32.mxu0 0.0
        %1522 = vmatmul.mubr.f32.gmra.mrb[0].mxu0 %v817
        %v1523 = vpop.f32.mrb[0].mxu0
        %v1524 = vadd.f32 %v1445, %v1523
        %v1525 = vpop.f32.mrb[0].mxu0
        %v1526 = vadd.f32 %v1449, %v1525
        %1527 = vdwg.mxu0
        %1528 = vmatprep.subr.mxu0 0.0
        %1529 = vmatpush1.msra.mxu0 %v1394
        %1530 = vmatprep.subr.mxu0 0.0
        %1531 = vmatpush1.msra.mxu0 %v1397
        %1532 = vmatprep.subr.mxu0 0.0
        %1533 = vmatpush1.msra.mxu0 %v1400
        %1534 = vmatprep.subr.mxu0 0.0
        %1535 = vmatpush1.msra.mxu0 %v1403
        %1536 = vmatprep.subr.mxu0 0.0
        %1537 = vmatpush1.msra.mxu0 %v1406
        %1538 = vmatprep.subr.mxu0 0.0
        %1539 = vmatpush1.msra.mxu0 %v1409
        %1540 = vmatprep.subr.mxu0 0.0
        %1541 = vmatpush1.msra.mxu0 %v1412
        %1542 = vmatprep.subr.mxu0 0.0
        %1543 = vmatpush1.msra.mxu0 %v1415
        %1544 = vmatprep.subr.mxu0 0.0
        %1545 = vmatpush1.msra.mxu0 %v1418
        %1546 = vmatprep.subr.mxu0 0.0
        %1547 = vmatpush1.msra.mxu0 %v1421
        %1548 = vmatprep.subr.mxu0 0.0
        %1549 = vmatpush1.msra.mxu0 %v1424
        %1550 = vmatprep.subr.mxu0 0.0
        %1551 = vmatpush1.msra.mxu0 %v1427
        %1552 = vmatprep.subr.mxu0 0.0
        %1553 = vmatpush1.msra.mxu0 %v1430
        %1554 = vmatprep.subr.mxu0 0.0
        %1555 = vmatpush1.msra.mxu0 %v1433
        %1556 = vmatprep.subr.mxu0 0.0
        %1557 = vmatpush1.msra.mxu0 %v1436
        %1558 = vmatprep.subr.mxu0 0.0
        %1559 = vmatpush1.msra.mxu0 %v1439
        %1560 = vmatprep.subr.mxu0 0.0
        %1561 = vmatpush1.msra.mxu0 0.0
        %1562 = vmatprep.subr.mxu0 0.0
        %1563 = vmatpush1.msra.mxu0 0.0
        %1564 = vmatprep.subr.mxu0 0.0
        %1565 = vmatpush1.msra.mxu0 0.0
        %1566 = vmatprep.subr.mxu0 0.0
        %1567 = vmatpush1.msra.mxu0 0.0
        %1568 = vmatprep.subr.mxu0 0.0
        %1569 = vmatpush1.msra.mxu0 0.0
        %1570 = vmatprep.subr.mxu0 0.0
        %1571 = vmatpush1.msra.mxu0 0.0
        %1572 = vmatprep.subr.mxu0 0.0
        %1573 = vmatpush1.msra.mxu0 0.0
        %1574 = vmatprep.subr.mxu0 0.0
        %1575 = vmatpush1.msra.mxu0 0.0
        %1576 = vmatprep.subr.mxu0 0.0
        %1577 = vmatpush1.msra.mxu0 0.0
        %1578 = vmatprep.subr.mxu0 0.0
        %1579 = vmatpush1.msra.mxu0 0.0
        %1580 = vmatprep.subr.mxu0 0.0
        %1581 = vmatpush1.msra.mxu0 0.0
        %1582 = vmatprep.subr.mxu0 0.0
        %1583 = vmatpush1.msra.mxu0 0.0
        %1584 = vmatprep.subr.mxu0 0.0
        %1585 = vmatpush1.msra.mxu0 0.0
        %1586 = vmatprep.subr.mxu0 0.0
        %1587 = vmatpush1.msra.mxu0 0.0
        %1588 = vmatprep.subr.mxu0 0.0
        %1589 = vmatpush1.msra.mxu0 0.0
        %1590 = vmatprep.subr.mxu0 0.0
        %1591 = vmatpush1.msra.mxu0 0.0
        %1592 = vmatprep.mubr.f32.mxu0 0.0
        %1593 = vmatmul.mubr.f32.gmra.mrb[0].mxu0 %v817
        %v1594 = vpop.f32.mrb[0].mxu0
        %v1595 = vadd.f32 %v1453, %v1594
        %v1596 = vpop.f32.mrb[0].mxu0
        %1597 = vdwg.mxu0
        %v1598 = vadd.f32 %v1318, %v1524
        %v1599 = vxor.u32 %v1598, 2147483648
        %v1600 = vmul.f32 %v1599, 1.442695
        %v1601 = vpow.pop %v1600
        %v1602 = vadd.f32 %v1601, 1.0
        %v1603 = vrcp.pop %v1602
        %v1604 = vmul.f32 1.0, %v1603
        %v1605 = vadd.f32 %v1320, %v1526
        %v1606 = vxor.u32 %v1605, 2147483648
        %v1607 = vmul.f32 %v1606, 1.442695
        %v1608 = vpow.pop %v1607
        %v1609 = vadd.f32 %v1608, 1.0
        %v1610 = vrcp.pop %v1609
        %v1611 = vmul.f32 1.0, %v1610
        %v1612 = vmul.f32 %v1604, %v1595
        %v1613 = vadd.f32 %v1389, %v1612
        %v1614 = vtanh.pop %v1613
        %v1615 = vsub.f32 1.0, %v1611
        %v1616 = vmul.f32 %v1615, %v1614
        %v1617 = vmul.f32 %v1611, %v817
        %v1618 = vadd.f32 %v1616, %v1617
        %v1619 = vld [vmem:[%s14] sm:$0xff]
        %v1620 = vld [vmem:[%s14 + $0x8] sm:$0xff]
        %v1621 = vld [vmem:[%s14 + $0x10] sm:$0xff]
        %v1622 = vld [vmem:[%s14 + $0x18] sm:$0xff]
        %v1623 = vld [vmem:[%s14 + $0x20] sm:$0xff]
        %v1624 = vld [vmem:[%s14 + $0x28] sm:$0xff]
        %v1625 = vld [vmem:[%s14 + $0x30] sm:$0xff]
        %v1626 = vld [vmem:[%s14 + $0x38] sm:$0xff]
        %v1627 = vld [vmem:[%s14 + $0x40] sm:$0xff]
        %v1628 = vld [vmem:[%s14 + $0x48] sm:$0xff]
        %v1629 = vld [vmem:[%s14 + $0x50] sm:$0xff]
        %v1630 = vld [vmem:[%s14 + $0x58] sm:$0xff]
        %v1631 = vld [vmem:[%s14 + $0x60] sm:$0xff]
        %v1632 = vld [vmem:[%s14 + $0x68] sm:$0xff]
        %v1633 = vld [vmem:[%s14 + $0x70] sm:$0xff]
        %v1634 = vld [vmem:[%s14 + $0x78] sm:$0xff]
        %v1635 = vld [vmem:[%s15] sm:$0x1]
        %v1637 = vlaneseq
        %v1638 = vshrl.u32 %v1637, 7
        %v1639 = vsub.s32 0, %v1638
        %v1640 = vrot.slane %v1635, %v1639
        %1642 = vmatprep.subr.mxu0 0.0
        %1643 = vmatpush1.msra.mxu0 %v1619
        %1644 = vmatprep.subr.mxu0 0.0
        %1645 = vmatpush1.msra.mxu0 %v1620
        %1646 = vmatprep.subr.mxu0 0.0
        %1647 = vmatpush1.msra.mxu0 %v1621
        %1648 = vmatprep.subr.mxu0 0.0
        %1649 = vmatpush1.msra.mxu0 %v1622
        %1650 = vmatprep.subr.mxu0 0.0
        %1651 = vmatpush1.msra.mxu0 %v1623
        %1652 = vmatprep.subr.mxu0 0.0
        %1653 = vmatpush1.msra.mxu0 %v1624
        %1654 = vmatprep.subr.mxu0 0.0
        %1655 = vmatpush1.msra.mxu0 %v1625
        %1656 = vmatprep.subr.mxu0 0.0
        %1657 = vmatpush1.msra.mxu0 %v1626
        %1658 = vmatprep.subr.mxu0 0.0
        %1659 = vmatpush1.msra.mxu0 %v1627
        %1660 = vmatprep.subr.mxu0 0.0
        %1661 = vmatpush1.msra.mxu0 %v1628
        %1662 = vmatprep.subr.mxu0 0.0
        %1663 = vmatpush1.msra.mxu0 %v1629
        %1664 = vmatprep.subr.mxu0 0.0
        %1665 = vmatpush1.msra.mxu0 %v1630
        %1666 = vmatprep.subr.mxu0 0.0
        %1667 = vmatpush1.msra.mxu0 %v1631
        %1668 = vmatprep.subr.mxu0 0.0
        %1669 = vmatpush1.msra.mxu0 %v1632
        %1670 = vmatprep.subr.mxu0 0.0
        %1671 = vmatpush1.msra.mxu0 %v1633
        %1672 = vmatprep.subr.mxu0 0.0
        %1673 = vmatpush1.msra.mxu0 %v1634
        %1674 = vmatprep.subr.mxu0 0.0
        %1675 = vmatpush1.msra.mxu0 0.0
        %1676 = vmatprep.subr.mxu0 0.0
        %1677 = vmatpush1.msra.mxu0 0.0
        %1678 = vmatprep.subr.mxu0 0.0
        %1679 = vmatpush1.msra.mxu0 0.0
        %1680 = vmatprep.subr.mxu0 0.0
        %1681 = vmatpush1.msra.mxu0 0.0
        %1682 = vmatprep.subr.mxu0 0.0
        %1683 = vmatpush1.msra.mxu0 0.0
        %1684 = vmatprep.subr.mxu0 0.0
        %1685 = vmatpush1.msra.mxu0 0.0
        %1686 = vmatprep.subr.mxu0 0.0
        %1687 = vmatpush1.msra.mxu0 0.0
        %1688 = vmatprep.subr.mxu0 0.0
        %1689 = vmatpush1.msra.mxu0 0.0
        %1690 = vmatprep.subr.mxu0 0.0
        %1691 = vmatpush1.msra.mxu0 0.0
        %1692 = vmatprep.subr.mxu0 0.0
        %1693 = vmatpush1.msra.mxu0 0.0
        %1694 = vmatprep.subr.mxu0 0.0
        %1695 = vmatpush1.msra.mxu0 0.0
        %1696 = vmatprep.subr.mxu0 0.0
        %1697 = vmatpush1.msra.mxu0 0.0
        %1698 = vmatprep.subr.mxu0 0.0
        %1699 = vmatpush1.msra.mxu0 0.0
        %1700 = vmatprep.subr.mxu0 0.0
        %1701 = vmatpush1.msra.mxu0 0.0
        %1702 = vmatprep.subr.mxu0 0.0
        %1703 = vmatpush1.msra.mxu0 0.0
        %1704 = vmatprep.subr.mxu0 0.0
        %1705 = vmatpush1.msra.mxu0 0.0
        %1706 = vmatprep.mubr.f32.mxu0 0.0
        %1707 = vmatmul.mubr.f32.gmra.mrb[0].mxu0 %v1618
        %v1708 = vpop.f32.mrb[0].mxu0
        %v1709 = vadd.f32 %v1640, %v1708
        %v1710 = vpop.f32.mrb[0].mxu0
        %1711 = vdwg.mxu0
        %v1712 = vtanh.pop %v1709
        %v1713 = vld [vmem:[%s16] sm:$0xff]
        %v1714 = vld [vmem:[%s16 + $0x8] sm:$0xff]
        %v1715 = vld [vmem:[%s16 + $0x10] sm:$0xff]
        %v1716 = vld [vmem:[%s16 + $0x18] sm:$0xff]
        %v1717 = vld [vmem:[%s16 + $0x20] sm:$0xff]
        %v1718 = vld [vmem:[%s16 + $0x28] sm:$0xff]
        %v1719 = vld [vmem:[%s16 + $0x30] sm:$0xff]
        %v1720 = vld [vmem:[%s16 + $0x38] sm:$0xff]
        %v1721 = vld [vmem:[%s16 + $0x40] sm:$0xff]
        %v1722 = vld [vmem:[%s16 + $0x48] sm:$0xff]
        %v1723 = vld [vmem:[%s16 + $0x50] sm:$0xff]
        %v1724 = vld [vmem:[%s16 + $0x58] sm:$0xff]
        %v1725 = vld [vmem:[%s16 + $0x60] sm:$0xff]
        %v1726 = vld [vmem:[%s16 + $0x68] sm:$0xff]
        %v1727 = vld [vmem:[%s16 + $0x70] sm:$0xff]
        %v1728 = vld [vmem:[%s16 + $0x78] sm:$0xff]
        %v1729 = vld [vmem:[%s17] sm:$0x1]
        %v1731 = vlaneseq
        %v1732 = vshrl.u32 %v1731, 7
        %v1733 = vsub.s32 0, %v1732
        %v1734 = vrot.slane %v1729, %v1733
        %1736 = vmatprep.subr.mxu0 0.0
        %1737 = vmatpush1.msra.mxu0 %v1713
        %1738 = vmatprep.subr.mxu0 0.0
        %1739 = vmatpush1.msra.mxu0 %v1714
        %1740 = vmatprep.subr.mxu0 0.0
        %1741 = vmatpush1.msra.mxu0 %v1715
        %1742 = vmatprep.subr.mxu0 0.0
        %1743 = vmatpush1.msra.mxu0 %v1716
        %1744 = vmatprep.subr.mxu0 0.0
        %1745 = vmatpush1.msra.mxu0 %v1717
        %1746 = vmatprep.subr.mxu0 0.0
        %1747 = vmatpush1.msra.mxu0 %v1718
        %1748 = vmatprep.subr.mxu0 0.0
        %1749 = vmatpush1.msra.mxu0 %v1719
        %1750 = vmatprep.subr.mxu0 0.0
        %1751 = vmatpush1.msra.mxu0 %v1720
        %1752 = vmatprep.subr.mxu0 0.0
        %1753 = vmatpush1.msra.mxu0 %v1721
        %1754 = vmatprep.subr.mxu0 0.0
        %1755 = vmatpush1.msra.mxu0 %v1722
        %1756 = vmatprep.subr.mxu0 0.0
        %1757 = vmatpush1.msra.mxu0 %v1723
        %1758 = vmatprep.subr.mxu0 0.0
        %1759 = vmatpush1.msra.mxu0 %v1724
        %1760 = vmatprep.subr.mxu0 0.0
        %1761 = vmatpush1.msra.mxu0 %v1725
        %1762 = vmatprep.subr.mxu0 0.0
        %1763 = vmatpush1.msra.mxu0 %v1726
        %1764 = vmatprep.subr.mxu0 0.0
        %1765 = vmatpush1.msra.mxu0 %v1727
        %1766 = vmatprep.subr.mxu0 0.0
        %1767 = vmatpush1.msra.mxu0 %v1728
        %1768 = vmatprep.subr.mxu0 0.0
        %1769 = vmatpush1.msra.mxu0 0.0
        %1770 = vmatprep.subr.mxu0 0.0
        %1771 = vmatpush1.msra.mxu0 0.0
        %1772 = vmatprep.subr.mxu0 0.0
        %1773 = vmatpush1.msra.mxu0 0.0
        %1774 = vmatprep.subr.mxu0 0.0
        %1775 = vmatpush1.msra.mxu0 0.0
        %1776 = vmatprep.subr.mxu0 0.0
        %1777 = vmatpush1.msra.mxu0 0.0
        %1778 = vmatprep.subr.mxu0 0.0
        %1779 = vmatpush1.msra.mxu0 0.0
        %1780 = vmatprep.subr.mxu0 0.0
        %1781 = vmatpush1.msra.mxu0 0.0
        %1782 = vmatprep.subr.mxu0 0.0
        %1783 = vmatpush1.msra.mxu0 0.0
        %1784 = vmatprep.subr.mxu0 0.0
        %1785 = vmatpush1.msra.mxu0 0.0
        %1786 = vmatprep.subr.mxu0 0.0
        %1787 = vmatpush1.msra.mxu0 0.0
        %1788 = vmatprep.subr.mxu0 0.0
        %1789 = vmatpush1.msra.mxu0 0.0
        %1790 = vmatprep.subr.mxu0 0.0
        %1791 = vmatpush1.msra.mxu0 0.0
        %1792 = vmatprep.subr.mxu0 0.0
        %1793 = vmatpush1.msra.mxu0 0.0
        %1794 = vmatprep.subr.mxu0 0.0
        %1795 = vmatpush1.msra.mxu0 0.0
        %1796 = vmatprep.subr.mxu0 0.0
        %1797 = vmatpush1.msra.mxu0 0.0
        %1798 = vmatprep.subr.mxu0 0.0
        %1799 = vmatpush1.msra.mxu0 0.0
        %1800 = vmatprep.mubr.f32.mxu0 0.0
        %1801 = vmatmul.mubr.f32.gmra.mrb[0].mxu0 %v1712
        %v1802 = vpop.f32.mrb[0].mxu0
        %v1803 = vadd.f32 %v1734, %v1802
        %v1804 = vpop.f32.mrb[0].mxu0
        %1805 = vdwg.mxu0
        %1806 = vmax.xlane.f32.xlu0 %v1803
        %v1807 = vpop.xlane.xlu0 %1806
        %v1808 = vsub.f32 %v1803, %v1807
        %v1809 = vmul.f32 %v1808, 1.442695
        %v1810 = vpow.pop %v1809
        %1811 = vadd.xlane.f32.xlu0 %v1810
        %v1812 = vpop.xlane.xlu0 %1811
        %v1813 = vlog2.pop %v1812
        %v1814 = vmul.f32 %v1813, 0.6931472
        %v1815 = vadd.f32 %v1814, %v1807
        %v1816 = vld [vmem:[%s578] sm:$0xff]
        %v1817 = vlaneseq
        %v1818 = vand.u32 %v1817, 127
        %1819 = vset.pattern.permute.xlu0 0
        %1820 = vperm.xlu0 %1819, %v1816
        %v1821 = vpop.permute.xlu0 %1820
        %vm1822 = vcmp.eq.s32.totalorder %v1818, %v1821
        %v1823 = vsel %vm1822, %v1803, 0.0
        %1824 = vadd.xlane.f32.xlu0 %v1823
        %v1825 = vpop.xlane.xlu0 %1824
        %vm1826 = vcmp.gt.s32.totalorder %v1816, 0
        %v1827 = vsel %vm1826, 1, 0
        %v1828 = vcvt.s32.f32 %v1827
        %v1829 = vld [vmem:[#allocation3] sm:$0x1]
        %v1830 = vsub.f32 %v1815, %v1825
        %v1831 = vmul.f32 %v1828, %v1830
        %vm1832 = vcmask 7168
        %v1833 = vsel %vm1832, %v1831, 0.0
        %1834 = vadd.xlane.f32.xlu0 %v1833
        %v1835 = vpop.xlane.xlu0 %1834
        %v1836 = vrot.slane %v1835, 4
        %v1837 = vadd.f32 %v1835, %v1836
        %v1838 = vrot.slane %v1837, 2
        %v1839 = vadd.f32 %v1837, %v1838
        %v1840 = vrot.slane %v1839, 1
        %v1841 = vadd.f32 %v1839, %v1840
        %s1842 = vtos %v1841
        %v1843 = vstv %s1842
        %v1844 = vadd.f32 %v1829, %v1843
        %vm1845 = vcmask 0
        %1846 = vst.msk [vmem:[#allocation3] sm:$0x1] %vm1845, %v1844
        %1847 = vst [vmem:[#allocation2] sm:$0xff] %v1618
        // Predicated region
        $region97: #{_nmt_forward.15} parent=91 // pred_check
          %p1848 = pneg %p431
        $region98: #{_nmt_forward.15} parent=91 // pred_check_branch
          %1850 = sbr.rel (%p1848) target = $region100
        $region99: #{_nmt_forward.15} parent=91 // pred_region
          %s1852 = ssub.s32 16, 16
          %1853 = vsyncadd [#allocation4], %s1852
          %s1855 = sshll.u32 [#allocation3], 4
          %s1856 = int_to_ptr.vmem [resolvable:$true] %s1855
          %1858 = dma.vmem_to_hbm [thread:$0]  %s1856, 16, %s18, [#allocation4]
        $region100: #{_nmt_forward.15} parent=91 // pred_fallthru
          _
        // Predicated region
        $region101: #{_nmt_forward.15} parent=91 // pred_check
          %p1859 = pneg %p431
        $region102: #{_nmt_forward.15} parent=91 // pred_check_branch
          %1861 = sbr.rel (%p1859) target = $region104
        $region103: #{_nmt_forward.15} parent=91 // pred_region
          %1862 = dma.done [#allocation4], 16
        $region104: #{_nmt_forward.15} parent=91 // pred_fallthru
          _
      $region92: #{_nmt_forward.15} parent=5 // pred_fallthru
        _
      %p1863 = scmp.le.s32.totalorder 2, %s25
      // Predicated region
      $region105: #{_nmt_forward.15} parent=5 // pred_check
        %p1864 = pneg %p1863
      $region106: #{_nmt_forward.15} parent=5 // pred_check_branch
        %1866 = sbr.rel (%p1864) target = $region108
      $region107: #{_nmt_forward.15} parent=5 // pred_region
        %s1867 = ssub.s32 %s25, 2
      $region108: #{_nmt_forward.15} parent=5 // pred_fallthru
        _
    $region6: #{_nmt_forward.15} parent=1 // loop_footer
      %s29 = sadd.s32 1, %s25
    $region7: #{_nmt_forward.15} parent=1 // loop_footer_branch
      %24 = sbr.rel target = $region3
    $region8: #{_nmt_forward.15} parent=1 // loop_exit
      _
    %1868 = vsyncpa [#allocation4], 1
    %s1869 = scalar_lea.sflag [#allocation4], 1
    %1870 = vsyncpa %s1869, 1

</llo_original>
